<compile_context>
chip_gen: v7x
topology: tpu7x:2x2x1
jax: 0.10.0
libtpu: 0.0.40
codegen_flags: <defaults>
</compile_context>

<pallas_src>
import math
from functools import partial

import jax
import jax.numpy as jnp
from jax.experimental import pallas as pl
from jax.experimental.pallas import tpu as pltpu

# ----- small demo configuration -----
BS = 2
SEQ = 8
D_MODEL = 32
N_HEADS = 4
D_K = D_MODEL // N_HEADS      # d_feature
D_FF = 64
MASK_INT = 0                  # forward(mask=0, ...) -> strictly-causal mask, zero_pad=True
KQ_SAME = 1                   # kq_same == 1 -> q projection reuses k_linear
APPLY_POS = True
LN_EPS = 1e-5
R = BS * SEQ                  # batch folded into sublanes


# ---------------------------------------------------------------------------
# in-kernel helpers
# ---------------------------------------------------------------------------
def _softmax_lastdim(x):
    m = jnp.max(x, axis=-1, keepdims=True)
    e = jnp.exp(x - m)
    return e / jnp.sum(e, axis=-1, keepdims=True)


def _layernorm(x, g, b):
    mu = jnp.mean(x, axis=-1, keepdims=True)
    var = jnp.mean((x - mu) ** 2, axis=-1, keepdims=True)
    return (x - mu) * jax.lax.rsqrt(var + LN_EPS) * g + b


# ---------------------------------------------------------------------------
# fused Pallas kernel: single invocation, whole problem in VMEM
# ---------------------------------------------------------------------------
def fused_layer_kernel(x_ref, w_ref, w1_ref, w2_ref, bias_ref, gamma_ref,
                       o_ref, *, mask_int):
    f32 = jnp.float32
    zero_pad = (mask_int == 0)

    x = x_ref[...]                       # (3R, D_MODEL): [query; key; values] flattened
    q_in = x[0:R]                        # original query rows (residual)
    qk_in = x[0:2 * R]                   # [query; key] share the k_linear weight
    v_in = x[2 * R:3 * R]

    wk = w_ref[0:D_MODEL, :]
    wv = w_ref[D_MODEL:2 * D_MODEL, :]
    wo = w_ref[2 * D_MODEL:3 * D_MODEL, :]

    bias = bias_ref[...]                 # (9, D_FF) packed bias / LN slab
    bk = bias[0:1, :D_MODEL];  bv = bias[1:2, :D_MODEL];  bo = bias[2:3, :D_MODEL]
    g1 = bias[3:4, :D_MODEL];  b1 = bias[4:5, :D_MODEL]
    bb1 = bias[5:6, :]                   # (1, D_FF)
    bb2 = bias[6:7, :D_MODEL]
    g2 = bias[7:8, :D_MODEL];  b2 = bias[8:9, :D_MODEL]

    # --- fused q/k projection (one MXU push) + v projection ---
    qk = jnp.dot(qk_in, wk, preferred_element_type=f32) + bk     # (2R, D_MODEL)
    qp = qk[0:R]
    kp = qk[R:2 * R]
    vp = jnp.dot(v_in, wv, preferred_element_type=f32) + bv      # (R, D_MODEL)

    # --- grid-invariant (SEQ,SEQ) constants generated in-kernel from two iotas ---
    ri = jax.lax.broadcasted_iota(jnp.int32, (SEQ, SEQ), 0)      # row index i
    ci = jax.lax.broadcasted_iota(jnp.int32, (SEQ, SEQ), 1)      # col index j
    # nopeek = triu(ones, k=mask_int); src_mask = (nopeek == 0)  <=>  j < i + mask_int
    mask = (ci < ri + mask_int).astype(f32)
    neg_mask = mask == 0.0
    tri = (ri <= ci).astype(f32)                                 # cumsum-as-matmul matrix
    pos = jnp.abs(ci - ri).astype(f32)                           # |x1 - x2| position effect
    row_is_zero = ri == 0

    inv_sqrt_dk = 1.0 / math.sqrt(D_K)

    # --- monotonic attention: static loop over (batch, head); heads are lane slices ---
    ctx_batches = []
    for b in range(BS):
        rs = slice(b * SEQ, (b + 1) * SEQ)
        ctx_heads = []
        for h in range(N_HEADS):
            cs = slice(h * D_K, (h + 1) * D_K)
            qh = qp[rs, cs]                                      # (SEQ, D_K)
            kh = kp[rs, cs]
            vh = vp[rs, cs]

            # scores = q @ k^T / sqrt(d_k)
            s = jax.lax.dot_general(qh, kh, (((1,), (1,)), ((), ())),
                                    preferred_element_type=f32) * inv_sqrt_dk

            # "distance" branch (torch.no_grad block in the reference)
            masked = jnp.where(neg_mask, -1e32, s)
            sm = _softmax_lastdim(masked) * mask
            distcum = jnp.dot(sm, tri, preferred_element_type=f32)   # cumsum via MXU
            disttotal = jnp.sum(sm, axis=-1, keepdims=True)
            dist = jnp.sqrt(jnp.maximum((disttotal - distcum) * pos, 0.0))

            gamma_h = gamma_ref[0, h]    # scalar -softplus(gamma_h) from SMEM
            total_effect = jnp.clip(jnp.exp(dist * gamma_h), 1e-5, 1e5)

            # second masked_fill in the reference is NOT in-place -> unmasked softmax
            p = _softmax_lastdim(s * total_effect)
            if zero_pad:
                p = jnp.where(row_is_zero, 0.0, p)

            ctx_heads.append(jnp.dot(p, vh, preferred_element_type=f32))  # (SEQ, D_K)
        ctx_batches.append(jnp.concatenate(ctx_heads, axis=1))            # (SEQ, D_MODEL)
    ctx = jnp.concatenate(ctx_batches, axis=0)                            # (R, D_MODEL)

    # --- single out-projection, residual, LN1, FFN, residual, LN2 ---
    attn = jnp.dot(ctx, wo, preferred_element_type=f32) + bo
    y = _layernorm(q_in + attn, g1, b1)
    if APPLY_POS:
        hid = jnp.maximum(
            jnp.dot(y, w1_ref[...], preferred_element_type=f32) + bb1, 0.0)
        ff = jnp.dot(hid, w2_ref[...], preferred_element_type=f32) + bb2
        y = _layernorm(y + ff, g2, b2)
    o_ref[...] = y


# ---------------------------------------------------------------------------
# pallas_call wrapper (single fused launch, packed inputs)
# ---------------------------------------------------------------------------
def _vpad(v):
    v = v.reshape(1, -1)
    return jnp.pad(v, ((0, 0), (0, D_FF - v.shape[1])))


@partial(jax.jit, static_argnums=(1,))
def transformer_layer(params, mask_int, query, key, values):
    # pack activations / weights / biases host-side (cheap XLA concats, few DMAs in-kernel)
    x_packed = jnp.concatenate(
        [query.reshape(R, D_MODEL), key.reshape(R, D_MODEL),
         values.reshape(R, D_MODEL)], axis=0)                               # (3R, D_MODEL)
    w_qkvo = jnp.concatenate([params['wk'], params['wv'], params['wo']], axis=0)  # (3D, D)
    bias_slab = jnp.concatenate(
        [_vpad(params['bk']), _vpad(params['bv']), _vpad(params['bo']),
         _vpad(params['ln1_g']), _vpad(params['ln1_b']),
         params['b1'].reshape(1, D_FF),
         _vpad(params['b2']), _vpad(params['ln2_g']), _vpad(params['ln2_b'])],
        axis=0)                                                             # (9, D_FF)
    gamma_neg = (-jax.nn.softplus(params['gammas'])).reshape(1, N_HEADS)

    kernel = partial(fused_layer_kernel, mask_int=mask_int)
    out = pl.pallas_call(
        kernel,
        out_shape=jax.ShapeDtypeStruct((R, D_MODEL), jnp.float32),
        in_specs=[
            pl.BlockSpec(memory_space=pltpu.MemorySpace.VMEM),  # x_packed
            pl.BlockSpec(memory_space=pltpu.MemorySpace.VMEM),  # wk|wv|wo
            pl.BlockSpec(memory_space=pltpu.MemorySpace.VMEM),  # w1
            pl.BlockSpec(memory_space=pltpu.MemorySpace.VMEM),  # w2
            pl.BlockSpec(memory_space=pltpu.MemorySpace.VMEM),  # bias slab
            pl.BlockSpec(memory_space=pltpu.MemorySpace.SMEM),  # gamma scalars
        ],
        out_specs=pl.BlockSpec(memory_space=pltpu.MemorySpace.VMEM),
    )(x_packed, w_qkvo, params['w1'], params['w2'], bias_slab, gamma_neg)
    return out.reshape(BS, SEQ, D_MODEL)


# ---------------------------------------------------------------------------
# pure-JAX reference (same math) for a correctness check
# ---------------------------------------------------------------------------
def reference_forward(params, mask_int, query, key, values):
    tri = jnp.triu(jnp.ones((SEQ, SEQ), dtype=jnp.float32), k=mask_int)
    mask = (tri == 0).astype(jnp.float32)
    zero_pad = (mask_int == 0)

    def proj(x, w, b):
        return x @ w + b
    qp = proj(query, params['wk'], params['bk'])
    kp = proj(key, params['wk'], params['bk'])
    vp = proj(values, params['wv'], params['bv'])
    qh = qp.reshape(BS, SEQ, N_HEADS, D_K).transpose(0, 2, 1, 3)
    kh = kp.reshape(BS, SEQ, N_HEADS, D_K).transpose(0, 2, 1, 3)
    vh = vp.reshape(BS, SEQ, N_HEADS, D_K).transpose(0, 2, 1, 3)

    scores = jnp.einsum('bhqd,bhkd->bhqk', qh, kh) / math.sqrt(D_K)
    masked = jnp.where(mask[None, None] == 0.0, -1e32, scores)
    sm = jax.nn.softmax(masked, axis=-1) * mask[None, None]
    distcum = jnp.cumsum(sm, axis=-1)
    disttotal = jnp.sum(sm, axis=-1, keepdims=True)
    idx = jnp.arange(SEQ, dtype=jnp.float32)
    position_effect = jnp.abs(idx[None, :] - idx[:, None])
    dist_scores = jnp.sqrt(jnp.clip((disttotal - distcum) * position_effect, 0.0, None))
    gamma = (-jax.nn.softplus(params['gammas']))[None]
    total_effect = jnp.clip(jnp.exp(dist_scores * gamma), 1e-5, 1e5)
    scores = jax.nn.softmax(scores * total_effect, axis=-1)
    if zero_pad:
        scores = scores.at[:, :, 0, :].set(0.0)
    ctx = jnp.einsum('bhqk,bhkd->bhqd', scores, vh)
    concat = ctx.transpose(0, 2, 1, 3).reshape(BS, SEQ, D_MODEL)

    def ln(x, g, b):
        mu = jnp.mean(x, axis=-1, keepdims=True)
        var = jnp.mean((x - mu) ** 2, axis=-1, keepdims=True)
        return (x - mu) / jnp.sqrt(var + LN_EPS) * g + b

    q2 = concat @ params['wo'] + params['bo']
    y = ln(query + q2, params['ln1_g'], params['ln1_b'])
    if APPLY_POS:
        h = jnp.maximum(y @ params['w1'] + params['b1'], 0.0)
        ff = h @ params['w2'] + params['b2']
        y = ln(y + ff, params['ln2_g'], params['ln2_b'])
    return y


# ---------------------------------------------------------------------------
# deterministic parameter init (synthetic, not a checkpoint)
# ---------------------------------------------------------------------------
def init_params(key):
    ks = jax.random.split(key, 12)
    s = 0.1
    f32 = jnp.float32
    return dict(
        wk=jax.random.normal(ks[0], (D_MODEL, D_MODEL), f32) * s,
        bk=jax.random.normal(ks[1], (1, D_MODEL), f32) * s,
        wv=jax.random.normal(ks[2], (D_MODEL, D_MODEL), f32) * s,
        bv=jax.random.normal(ks[3], (1, D_MODEL), f32) * s,
        wo=jax.random.normal(ks[4], (D_MODEL, D_MODEL), f32) * s,
        bo=jax.random.normal(ks[5], (1, D_MODEL), f32) * s,
        gammas=jax.random.normal(ks[6], (N_HEADS, 1, 1), f32) * 0.5,
        ln1_g=jnp.ones((1, D_MODEL), f32),
        ln1_b=jnp.zeros((1, D_MODEL), f32),
        w1=jax.random.normal(ks[7], (D_MODEL, D_FF), f32) * s,
        b1=jax.random.normal(ks[8], (1, D_FF), f32) * s,
        w2=jax.random.normal(ks[9], (D_FF, D_MODEL), f32) * s,
        b2=jax.random.normal(ks[10], (1, D_MODEL), f32) * s,
        ln2_g=jnp.ones((1, D_MODEL), f32),
        ln2_b=jnp.zeros((1, D_MODEL), f32),
    )


if __name__ == "__main__":
    root = jax.random.PRNGKey(0)
    pkey, qkey, kkey, vkey = jax.random.split(root, 4)
    params = init_params(pkey)
    query = jax.random.normal(qkey, (BS, SEQ, D_MODEL), jnp.float32)
    key_in = jax.random.normal(kkey, (BS, SEQ, D_MODEL), jnp.float32)
    values = jax.random.normal(vkey, (BS, SEQ, D_MODEL), jnp.float32)

    out = transformer_layer(params, MASK_INT, query, key_in, values)
    out = jax.block_until_ready(out)

    ref = reference_forward(params, MASK_INT, query, key_in, values)
    assert out.shape == (BS, SEQ, D_MODEL)
    assert bool(jnp.all(jnp.isfinite(out)))
    assert bool(jnp.allclose(out, ref, atol=1e-2, rtol=1e-2))
    print("KERNEL_OK")
</pallas_src>

<mosaic_0001>
module attributes {stable_mosaic.version = 11 : i64} {
  func.func @fused_layer_kernel(%arg0: memref<48x32xf32, #tpu.memory_space<vmem>>, %arg1: memref<96x32xf32, #tpu.memory_space<vmem>>, %arg2: memref<32x64xf32, #tpu.memory_space<vmem>>, %arg3: memref<64x32xf32, #tpu.memory_space<vmem>>, %arg4: memref<9x64xf32, #tpu.memory_space<vmem>>, %arg5: memref<1x4xf32, #tpu.memory_space<smem>>, %arg6: memref<16x32xf32, #tpu.memory_space<vmem>>) attributes {dimension_semantics = [], scalar_prefetch = 0 : i64, scratch_operands = 0 : i64, tpu.core_type = #tpu.core_type<tc>} {
    %c0 = arith.constant 0 : index
    %c0_0 = arith.constant 0 : index
    %0 = vector.load %arg0[%c0, %c0_0] : memref<48x32xf32, #tpu.memory_space<vmem>>, vector<48x32xf32>
    %1 = vector.extract_strided_slice %0 {offsets = [0, 0], sizes = [16, 32], strides = [1, 1]} : vector<48x32xf32> to vector<16x32xf32>
    %2 = vector.extract_strided_slice %0 {offsets = [0, 0], sizes = [32, 32], strides = [1, 1]} : vector<48x32xf32> to vector<32x32xf32>
    %3 = vector.extract_strided_slice %0 {offsets = [32, 0], sizes = [16, 32], strides = [1, 1]} : vector<48x32xf32> to vector<16x32xf32>
    %c0_1 = arith.constant 0 : index
    %c0_2 = arith.constant 0 : index
    %4 = vector.load %arg1[%c0_1, %c0_2] : memref<96x32xf32, #tpu.memory_space<vmem>>, vector<32x32xf32>
    %c32 = arith.constant 32 : index
    %c0_3 = arith.constant 0 : index
    %5 = vector.load %arg1[%c32, %c0_3] : memref<96x32xf32, #tpu.memory_space<vmem>>, vector<32x32xf32>
    %c64 = arith.constant 64 : index
    %c0_4 = arith.constant 0 : index
    %6 = vector.load %arg1[%c64, %c0_4] : memref<96x32xf32, #tpu.memory_space<vmem>>, vector<32x32xf32>
    %c0_5 = arith.constant 0 : index
    %c0_6 = arith.constant 0 : index
    %7 = vector.load %arg4[%c0_5, %c0_6] : memref<9x64xf32, #tpu.memory_space<vmem>>, vector<9x64xf32>
    %8 = vector.extract_strided_slice %7 {offsets = [0, 0], sizes = [1, 32], strides = [1, 1]} : vector<9x64xf32> to vector<1x32xf32>
    %9 = vector.extract_strided_slice %7 {offsets = [1, 0], sizes = [1, 32], strides = [1, 1]} : vector<9x64xf32> to vector<1x32xf32>
    %10 = vector.extract_strided_slice %7 {offsets = [2, 0], sizes = [1, 32], strides = [1, 1]} : vector<9x64xf32> to vector<1x32xf32>
    %11 = vector.extract_strided_slice %7 {offsets = [3, 0], sizes = [1, 32], strides = [1, 1]} : vector<9x64xf32> to vector<1x32xf32>
    %12 = vector.extract_strided_slice %7 {offsets = [4, 0], sizes = [1, 32], strides = [1, 1]} : vector<9x64xf32> to vector<1x32xf32>
    %13 = vector.extract_strided_slice %7 {offsets = [5, 0], sizes = [1, 64], strides = [1, 1]} : vector<9x64xf32> to vector<1x64xf32>
    %14 = vector.extract_strided_slice %7 {offsets = [6, 0], sizes = [1, 32], strides = [1, 1]} : vector<9x64xf32> to vector<1x32xf32>
    %15 = vector.extract_strided_slice %7 {offsets = [7, 0], sizes = [1, 32], strides = [1, 1]} : vector<9x64xf32> to vector<1x32xf32>
    %16 = vector.extract_strided_slice %7 {offsets = [8, 0], sizes = [1, 32], strides = [1, 1]} : vector<9x64xf32> to vector<1x32xf32>
    %cst = arith.constant dense<0.000000e+00> : vector<32x32xf32>
    %17 = tpu.matmul %2, %4, %cst {dimension_numbers = #tpu.dot_dimension_numbers<[1], [0], [0], [1], [0, 0, 1, 1], [], []>} : vector<32x32xf32>, vector<32x32xf32>, vector<32x32xf32> -> vector<32x32xf32>
    %18 = vector.broadcast %8 : vector<1x32xf32> to vector<32x32xf32>
    %19 = arith.addf %17, %18 : vector<32x32xf32>
    %20 = vector.extract_strided_slice %19 {offsets = [0, 0], sizes = [16, 32], strides = [1, 1]} : vector<32x32xf32> to vector<16x32xf32>
    %21 = vector.extract_strided_slice %19 {offsets = [16, 0], sizes = [16, 32], strides = [1, 1]} : vector<32x32xf32> to vector<16x32xf32>
    %cst_7 = arith.constant dense<0.000000e+00> : vector<16x32xf32>
    %22 = tpu.matmul %3, %5, %cst_7 {dimension_numbers = #tpu.dot_dimension_numbers<[1], [0], [0], [1], [0, 0, 1, 1], [], []>} : vector<16x32xf32>, vector<32x32xf32>, vector<16x32xf32> -> vector<16x32xf32>
    %23 = vector.broadcast %9 : vector<1x32xf32> to vector<16x32xf32>
    %24 = arith.addf %22, %23 : vector<16x32xf32>
    %25 = tpu.iota {dimensions = array<i32: 0>} : vector<8x8xi32>
    %26 = tpu.iota {dimensions = array<i32: 1>} : vector<8x8xi32>
    %c0_i32 = arith.constant 0 : i32
    %27 = vector.broadcast %c0_i32 : i32 to vector<8x8xi32>
    %28 = arith.addi %25, %27 : vector<8x8xi32>
    %29 = arith.cmpi slt, %26, %28 : vector<8x8xi32>
    %30 = arith.extui %29 : vector<8x8xi1> to vector<8x8xi32>
    %31 = arith.sitofp %30 : vector<8x8xi32> to vector<8x8xf32>
    %cst_8 = arith.constant 0.000000e+00 : f32
    %32 = vector.broadcast %cst_8 : f32 to vector<8x8xf32>
    %33 = arith.cmpf oeq, %31, %32 : vector<8x8xf32>
    %34 = arith.cmpi sle, %25, %26 : vector<8x8xi32>
    %35 = arith.extui %34 : vector<8x8xi1> to vector<8x8xi32>
    %36 = arith.sitofp %35 : vector<8x8xi32> to vector<8x8xf32>
    %37 = arith.subi %26, %25 : vector<8x8xi32>
    %38 = math.absi %37 : vector<8x8xi32>
    %39 = arith.sitofp %38 : vector<8x8xi32> to vector<8x8xf32>
    %c0_i32_9 = arith.constant 0 : i32
    %40 = vector.broadcast %c0_i32_9 : i32 to vector<8x8xi32>
    %41 = arith.cmpi eq, %25, %40 : vector<8x8xi32>
    %42 = vector.extract_strided_slice %20 {offsets = [0, 0], sizes = [8, 8], strides = [1, 1]} : vector<16x32xf32> to vector<8x8xf32>
    %43 = vector.extract_strided_slice %21 {offsets = [0, 0], sizes = [8, 8], strides = [1, 1]} : vector<16x32xf32> to vector<8x8xf32>
    %44 = vector.extract_strided_slice %24 {offsets = [0, 0], sizes = [8, 8], strides = [1, 1]} : vector<16x32xf32> to vector<8x8xf32>
    %cst_10 = arith.constant dense<0.000000e+00> : vector<8x8xf32>
    %45 = tpu.matmul %42, %43, %cst_10 {dimension_numbers = #tpu.dot_dimension_numbers<[1], [1], [0], [0], [0, 0, 1, 0], [], []>} : vector<8x8xf32>, vector<8x8xf32>, vector<8x8xf32> -> vector<8x8xf32>
    %cst_11 = arith.constant 0.353553385 : f32
    %46 = vector.broadcast %cst_11 : f32 to vector<8x8xf32>
    %47 = arith.mulf %45, %46 : vector<8x8xf32>
    %cst_12 = arith.constant -1.000000e+32 : f32
    %48 = vector.broadcast %cst_12 : f32 to vector<8x8xf32>
    %49 = arith.select %33, %48, %47 : vector<8x8xi1>, vector<8x8xf32>
    %cst_13 = arith.constant dense<0xFF800000> : vector<8xf32>
    %50 = vector.multi_reduction <maximumf>, %49, %cst_13 [1] : vector<8x8xf32> to vector<8xf32>
    %51 = vector.shape_cast %50 : vector<8xf32> to vector<8x1xf32>
    %52 = vector.broadcast %51 : vector<8x1xf32> to vector<8x8xf32>
    %53 = arith.subf %49, %52 : vector<8x8xf32>
    %54 = math.exp %53 : vector<8x8xf32>
    %cst_14 = arith.constant dense<0.000000e+00> : vector<8xf32>
    %55 = vector.multi_reduction <add>, %54, %cst_14 [1] : vector<8x8xf32> to vector<8xf32>
    %56 = vector.shape_cast %55 : vector<8xf32> to vector<8x1xf32>
    %57 = vector.broadcast %56 : vector<8x1xf32> to vector<8x8xf32>
    %58 = arith.divf %54, %57 : vector<8x8xf32>
    %59 = arith.mulf %58, %31 : vector<8x8xf32>
    %cst_15 = arith.constant dense<0.000000e+00> : vector<8x8xf32>
    %60 = tpu.matmul %59, %36, %cst_15 {dimension_numbers = #tpu.dot_dimension_numbers<[1], [0], [0], [1], [0, 0, 1, 1], [], []>} : vector<8x8xf32>, vector<8x8xf32>, vector<8x8xf32> -> vector<8x8xf32>
    %cst_16 = arith.constant dense<0.000000e+00> : vector<8xf32>
    %61 = vector.multi_reduction <add>, %59, %cst_16 [1] : vector<8x8xf32> to vector<8xf32>
    %62 = vector.shape_cast %61 : vector<8xf32> to vector<8x1xf32>
    %63 = vector.broadcast %62 : vector<8x1xf32> to vector<8x8xf32>
    %64 = arith.subf %63, %60 : vector<8x8xf32>
    %65 = arith.mulf %64, %39 : vector<8x8xf32>
    %cst_17 = arith.constant 0.000000e+00 : f32
    %66 = vector.broadcast %cst_17 : f32 to vector<8x8xf32>
    %67 = arith.maximumf %65, %66 : vector<8x8xf32>
    %68 = math.sqrt %67 : vector<8x8xf32>
    %c0_18 = arith.constant 0 : index
    %c0_19 = arith.constant 0 : index
    %69 = memref.load %arg5[%c0_18, %c0_19] : memref<1x4xf32, #tpu.memory_space<smem>>
    %70 = vector.broadcast %69 : f32 to vector<8x8xf32>
    %71 = arith.mulf %68, %70 : vector<8x8xf32>
    %72 = math.exp %71 : vector<8x8xf32>
    %cst_20 = arith.constant 9.99999974E-6 : f32
    %cst_21 = arith.constant 1.000000e+05 : f32
    %73 = vector.broadcast %cst_20 : f32 to vector<8x8xf32>
    %74 = arith.maximumf %73, %72 : vector<8x8xf32>
    %75 = vector.broadcast %cst_21 : f32 to vector<8x8xf32>
    %76 = arith.minimumf %75, %74 : vector<8x8xf32>
    %77 = arith.mulf %47, %76 : vector<8x8xf32>
    %cst_22 = arith.constant dense<0xFF800000> : vector<8xf32>
    %78 = vector.multi_reduction <maximumf>, %77, %cst_22 [1] : vector<8x8xf32> to vector<8xf32>
    %79 = vector.shape_cast %78 : vector<8xf32> to vector<8x1xf32>
    %80 = vector.broadcast %79 : vector<8x1xf32> to vector<8x8xf32>
    %81 = arith.subf %77, %80 : vector<8x8xf32>
    %82 = math.exp %81 : vector<8x8xf32>
    %cst_23 = arith.constant dense<0.000000e+00> : vector<8xf32>
    %83 = vector.multi_reduction <add>, %82, %cst_23 [1] : vector<8x8xf32> to vector<8xf32>
    %84 = vector.shape_cast %83 : vector<8xf32> to vector<8x1xf32>
    %85 = vector.broadcast %84 : vector<8x1xf32> to vector<8x8xf32>
    %86 = arith.divf %82, %85 : vector<8x8xf32>
    %cst_24 = arith.constant 0.000000e+00 : f32
    %87 = vector.broadcast %cst_24 : f32 to vector<8x8xf32>
    %88 = arith.select %41, %87, %86 : vector<8x8xi1>, vector<8x8xf32>
    %cst_25 = arith.constant dense<0.000000e+00> : vector<8x8xf32>
    %89 = tpu.matmul %88, %44, %cst_25 {dimension_numbers = #tpu.dot_dimension_numbers<[1], [0], [0], [1], [0, 0, 1, 1], [], []>} : vector<8x8xf32>, vector<8x8xf32>, vector<8x8xf32> -> vector<8x8xf32>
    %90 = vector.extract_strided_slice %20 {offsets = [0, 8], sizes = [8, 8], strides = [1, 1]} : vector<16x32xf32> to vector<8x8xf32>
    %91 = vector.extract_strided_slice %21 {offsets = [0, 8], sizes = [8, 8], strides = [1, 1]} : vector<16x32xf32> to vector<8x8xf32>
    %92 = vector.extract_strided_slice %24 {offsets = [0, 8], sizes = [8, 8], strides = [1, 1]} : vector<16x32xf32> to vector<8x8xf32>
    %cst_26 = arith.constant dense<0.000000e+00> : vector<8x8xf32>
    %93 = tpu.matmul %90, %91, %cst_26 {dimension_numbers = #tpu.dot_dimension_numbers<[1], [1], [0], [0], [0, 0, 1, 0], [], []>} : vector<8x8xf32>, vector<8x8xf32>, vector<8x8xf32> -> vector<8x8xf32>
    %cst_27 = arith.constant 0.353553385 : f32
    %94 = vector.broadcast %cst_27 : f32 to vector<8x8xf32>
    %95 = arith.mulf %93, %94 : vector<8x8xf32>
    %cst_28 = arith.constant -1.000000e+32 : f32
    %96 = vector.broadcast %cst_28 : f32 to vector<8x8xf32>
    %97 = arith.select %33, %96, %95 : vector<8x8xi1>, vector<8x8xf32>
    %cst_29 = arith.constant dense<0xFF800000> : vector<8xf32>
    %98 = vector.multi_reduction <maximumf>, %97, %cst_29 [1] : vector<8x8xf32> to vector<8xf32>
    %99 = vector.shape_cast %98 : vector<8xf32> to vector<8x1xf32>
    %100 = vector.broadcast %99 : vector<8x1xf32> to vector<8x8xf32>
    %101 = arith.subf %97, %100 : vector<8x8xf32>
    %102 = math.exp %101 : vector<8x8xf32>
    %cst_30 = arith.constant dense<0.000000e+00> : vector<8xf32>
    %103 = vector.multi_reduction <add>, %102, %cst_30 [1] : vector<8x8xf32> to vector<8xf32>
    %104 = vector.shape_cast %103 : vector<8xf32> to vector<8x1xf32>
    %105 = vector.broadcast %104 : vector<8x1xf32> to vector<8x8xf32>
    %106 = arith.divf %102, %105 : vector<8x8xf32>
    %107 = arith.mulf %106, %31 : vector<8x8xf32>
    %cst_31 = arith.constant dense<0.000000e+00> : vector<8x8xf32>
    %108 = tpu.matmul %107, %36, %cst_31 {dimension_numbers = #tpu.dot_dimension_numbers<[1], [0], [0], [1], [0, 0, 1, 1], [], []>} : vector<8x8xf32>, vector<8x8xf32>, vector<8x8xf32> -> vector<8x8xf32>
    %cst_32 = arith.constant dense<0.000000e+00> : vector<8xf32>
    %109 = vector.multi_reduction <add>, %107, %cst_32 [1] : vector<8x8xf32> to vector<8xf32>
    %110 = vector.shape_cast %109 : vector<8xf32> to vector<8x1xf32>
    %111 = vector.broadcast %110 : vector<8x1xf32> to vector<8x8xf32>
    %112 = arith.subf %111, %108 : vector<8x8xf32>
    %113 = arith.mulf %112, %39 : vector<8x8xf32>
    %cst_33 = arith.constant 0.000000e+00 : f32
    %114 = vector.broadcast %cst_33 : f32 to vector<8x8xf32>
    %115 = arith.maximumf %113, %114 : vector<8x8xf32>
    %116 = math.sqrt %115 : vector<8x8xf32>
    %c0_34 = arith.constant 0 : index
    %c1 = arith.constant 1 : index
    %117 = memref.load %arg5[%c0_34, %c1] : memref<1x4xf32, #tpu.memory_space<smem>>
    %118 = vector.broadcast %117 : f32 to vector<8x8xf32>
    %119 = arith.mulf %116, %118 : vector<8x8xf32>
    %120 = math.exp %119 : vector<8x8xf32>
    %cst_35 = arith.constant 9.99999974E-6 : f32
    %cst_36 = arith.constant 1.000000e+05 : f32
    %121 = vector.broadcast %cst_35 : f32 to vector<8x8xf32>
    %122 = arith.maximumf %121, %120 : vector<8x8xf32>
    %123 = vector.broadcast %cst_36 : f32 to vector<8x8xf32>
    %124 = arith.minimumf %123, %122 : vector<8x8xf32>
    %125 = arith.mulf %95, %124 : vector<8x8xf32>
    %cst_37 = arith.constant dense<0xFF800000> : vector<8xf32>
    %126 = vector.multi_reduction <maximumf>, %125, %cst_37 [1] : vector<8x8xf32> to vector<8xf32>
    %127 = vector.shape_cast %126 : vector<8xf32> to vector<8x1xf32>
    %128 = vector.broadcast %127 : vector<8x1xf32> to vector<8x8xf32>
    %129 = arith.subf %125, %128 : vector<8x8xf32>
    %130 = math.exp %129 : vector<8x8xf32>
    %cst_38 = arith.constant dense<0.000000e+00> : vector<8xf32>
    %131 = vector.multi_reduction <add>, %130, %cst_38 [1] : vector<8x8xf32> to vector<8xf32>
    %132 = vector.shape_cast %131 : vector<8xf32> to vector<8x1xf32>
    %133 = vector.broadcast %132 : vector<8x1xf32> to vector<8x8xf32>
    %134 = arith.divf %130, %133 : vector<8x8xf32>
    %cst_39 = arith.constant 0.000000e+00 : f32
    %135 = vector.broadcast %cst_39 : f32 to vector<8x8xf32>
    %136 = arith.select %41, %135, %134 : vector<8x8xi1>, vector<8x8xf32>
    %cst_40 = arith.constant dense<0.000000e+00> : vector<8x8xf32>
    %137 = tpu.matmul %136, %92, %cst_40 {dimension_numbers = #tpu.dot_dimension_numbers<[1], [0], [0], [1], [0, 0, 1, 1], [], []>} : vector<8x8xf32>, vector<8x8xf32>, vector<8x8xf32> -> vector<8x8xf32>
    %138 = vector.extract_strided_slice %20 {offsets = [0, 16], sizes = [8, 8], strides = [1, 1]} : vector<16x32xf32> to vector<8x8xf32>
    %139 = vector.extract_strided_slice %21 {offsets = [0, 16], sizes = [8, 8], strides = [1, 1]} : vector<16x32xf32> to vector<8x8xf32>
    %140 = vector.extract_strided_slice %24 {offsets = [0, 16], sizes = [8, 8], strides = [1, 1]} : vector<16x32xf32> to vector<8x8xf32>
    %cst_41 = arith.constant dense<0.000000e+00> : vector<8x8xf32>
    %141 = tpu.matmul %138, %139, %cst_41 {dimension_numbers = #tpu.dot_dimension_numbers<[1], [1], [0], [0], [0, 0, 1, 0], [], []>} : vector<8x8xf32>, vector<8x8xf32>, vector<8x8xf32> -> vector<8x8xf32>
    %cst_42 = arith.constant 0.353553385 : f32
    %142 = vector.broadcast %cst_42 : f32 to vector<8x8xf32>
    %143 = arith.mulf %141, %142 : vector<8x8xf32>
    %cst_43 = arith.constant -1.000000e+32 : f32
    %144 = vector.broadcast %cst_43 : f32 to vector<8x8xf32>
    %145 = arith.select %33, %144, %143 : vector<8x8xi1>, vector<8x8xf32>
    %cst_44 = arith.constant dense<0xFF800000> : vector<8xf32>
    %146 = vector.multi_reduction <maximumf>, %145, %cst_44 [1] : vector<8x8xf32> to vector<8xf32>
    %147 = vector.shape_cast %146 : vector<8xf32> to vector<8x1xf32>
    %148 = vector.broadcast %147 : vector<8x1xf32> to vector<8x8xf32>
    %149 = arith.subf %145, %148 : vector<8x8xf32>
    %150 = math.exp %149 : vector<8x8xf32>
    %cst_45 = arith.constant dense<0.000000e+00> : vector<8xf32>
    %151 = vector.multi_reduction <add>, %150, %cst_45 [1] : vector<8x8xf32> to vector<8xf32>
    %152 = vector.shape_cast %151 : vector<8xf32> to vector<8x1xf32>
    %153 = vector.broadcast %152 : vector<8x1xf32> to vector<8x8xf32>
    %154 = arith.divf %150, %153 : vector<8x8xf32>
    %155 = arith.mulf %154, %31 : vector<8x8xf32>
    %cst_46 = arith.constant dense<0.000000e+00> : vector<8x8xf32>
    %156 = tpu.matmul %155, %36, %cst_46 {dimension_numbers = #tpu.dot_dimension_numbers<[1], [0], [0], [1], [0, 0, 1, 1], [], []>} : vector<8x8xf32>, vector<8x8xf32>, vector<8x8xf32> -> vector<8x8xf32>
    %cst_47 = arith.constant dense<0.000000e+00> : vector<8xf32>
    %157 = vector.multi_reduction <add>, %155, %cst_47 [1] : vector<8x8xf32> to vector<8xf32>
    %158 = vector.shape_cast %157 : vector<8xf32> to vector<8x1xf32>
    %159 = vector.broadcast %158 : vector<8x1xf32> to vector<8x8xf32>
    %160 = arith.subf %159, %156 : vector<8x8xf32>
    %161 = arith.mulf %160, %39 : vector<8x8xf32>
    %cst_48 = arith.constant 0.000000e+00 : f32
    %162 = vector.broadcast %cst_48 : f32 to vector<8x8xf32>
    %163 = arith.maximumf %161, %162 : vector<8x8xf32>
    %164 = math.sqrt %163 : vector<8x8xf32>
    %c0_49 = arith.constant 0 : index
    %c2 = arith.constant 2 : index
    %165 = memref.load %arg5[%c0_49, %c2] : memref<1x4xf32, #tpu.memory_space<smem>>
    %166 = vector.broadcast %165 : f32 to vector<8x8xf32>
    %167 = arith.mulf %164, %166 : vector<8x8xf32>
    %168 = math.exp %167 : vector<8x8xf32>
    %cst_50 = arith.constant 9.99999974E-6 : f32
    %cst_51 = arith.constant 1.000000e+05 : f32
    %169 = vector.broadcast %cst_50 : f32 to vector<8x8xf32>
    %170 = arith.maximumf %169, %168 : vector<8x8xf32>
    %171 = vector.broadcast %cst_51 : f32 to vector<8x8xf32>
    %172 = arith.minimumf %171, %170 : vector<8x8xf32>
    %173 = arith.mulf %143, %172 : vector<8x8xf32>
    %cst_52 = arith.constant dense<0xFF800000> : vector<8xf32>
    %174 = vector.multi_reduction <maximumf>, %173, %cst_52 [1] : vector<8x8xf32> to vector<8xf32>
    %175 = vector.shape_cast %174 : vector<8xf32> to vector<8x1xf32>
    %176 = vector.broadcast %175 : vector<8x1xf32> to vector<8x8xf32>
    %177 = arith.subf %173, %176 : vector<8x8xf32>
    %178 = math.exp %177 : vector<8x8xf32>
    %cst_53 = arith.constant dense<0.000000e+00> : vector<8xf32>
    %179 = vector.multi_reduction <add>, %178, %cst_53 [1] : vector<8x8xf32> to vector<8xf32>
    %180 = vector.shape_cast %179 : vector<8xf32> to vector<8x1xf32>
    %181 = vector.broadcast %180 : vector<8x1xf32> to vector<8x8xf32>
    %182 = arith.divf %178, %181 : vector<8x8xf32>
    %cst_54 = arith.constant 0.000000e+00 : f32
    %183 = vector.broadcast %cst_54 : f32 to vector<8x8xf32>
    %184 = arith.select %41, %183, %182 : vector<8x8xi1>, vector<8x8xf32>
    %cst_55 = arith.constant dense<0.000000e+00> : vector<8x8xf32>
    %185 = tpu.matmul %184, %140, %cst_55 {dimension_numbers = #tpu.dot_dimension_numbers<[1], [0], [0], [1], [0, 0, 1, 1], [], []>} : vector<8x8xf32>, vector<8x8xf32>, vector<8x8xf32> -> vector<8x8xf32>
    %186 = vector.extract_strided_slice %20 {offsets = [0, 24], sizes = [8, 8], strides = [1, 1]} : vector<16x32xf32> to vector<8x8xf32>
    %187 = vector.extract_strided_slice %21 {offsets = [0, 24], sizes = [8, 8], strides = [1, 1]} : vector<16x32xf32> to vector<8x8xf32>
    %188 = vector.extract_strided_slice %24 {offsets = [0, 24], sizes = [8, 8], strides = [1, 1]} : vector<16x32xf32> to vector<8x8xf32>
    %cst_56 = arith.constant dense<0.000000e+00> : vector<8x8xf32>
    %189 = tpu.matmul %186, %187, %cst_56 {dimension_numbers = #tpu.dot_dimension_numbers<[1], [1], [0], [0], [0, 0, 1, 0], [], []>} : vector<8x8xf32>, vector<8x8xf32>, vector<8x8xf32> -> vector<8x8xf32>
    %cst_57 = arith.constant 0.353553385 : f32
    %190 = vector.broadcast %cst_57 : f32 to vector<8x8xf32>
    %191 = arith.mulf %189, %190 : vector<8x8xf32>
    %cst_58 = arith.constant -1.000000e+32 : f32
    %192 = vector.broadcast %cst_58 : f32 to vector<8x8xf32>
    %193 = arith.select %33, %192, %191 : vector<8x8xi1>, vector<8x8xf32>
    %cst_59 = arith.constant dense<0xFF800000> : vector<8xf32>
    %194 = vector.multi_reduction <maximumf>, %193, %cst_59 [1] : vector<8x8xf32> to vector<8xf32>
    %195 = vector.shape_cast %194 : vector<8xf32> to vector<8x1xf32>
    %196 = vector.broadcast %195 : vector<8x1xf32> to vector<8x8xf32>
    %197 = arith.subf %193, %196 : vector<8x8xf32>
    %198 = math.exp %197 : vector<8x8xf32>
    %cst_60 = arith.constant dense<0.000000e+00> : vector<8xf32>
    %199 = vector.multi_reduction <add>, %198, %cst_60 [1] : vector<8x8xf32> to vector<8xf32>
    %200 = vector.shape_cast %199 : vector<8xf32> to vector<8x1xf32>
    %201 = vector.broadcast %200 : vector<8x1xf32> to vector<8x8xf32>
    %202 = arith.divf %198, %201 : vector<8x8xf32>
    %203 = arith.mulf %202, %31 : vector<8x8xf32>
    %cst_61 = arith.constant dense<0.000000e+00> : vector<8x8xf32>
    %204 = tpu.matmul %203, %36, %cst_61 {dimension_numbers = #tpu.dot_dimension_numbers<[1], [0], [0], [1], [0, 0, 1, 1], [], []>} : vector<8x8xf32>, vector<8x8xf32>, vector<8x8xf32> -> vector<8x8xf32>
    %cst_62 = arith.constant dense<0.000000e+00> : vector<8xf32>
    %205 = vector.multi_reduction <add>, %203, %cst_62 [1] : vector<8x8xf32> to vector<8xf32>
    %206 = vector.shape_cast %205 : vector<8xf32> to vector<8x1xf32>
    %207 = vector.broadcast %206 : vector<8x1xf32> to vector<8x8xf32>
    %208 = arith.subf %207, %204 : vector<8x8xf32>
    %209 = arith.mulf %208, %39 : vector<8x8xf32>
    %cst_63 = arith.constant 0.000000e+00 : f32
    %210 = vector.broadcast %cst_63 : f32 to vector<8x8xf32>
    %211 = arith.maximumf %209, %210 : vector<8x8xf32>
    %212 = math.sqrt %211 : vector<8x8xf32>
    %c0_64 = arith.constant 0 : index
    %c3 = arith.constant 3 : index
    %213 = memref.load %arg5[%c0_64, %c3] : memref<1x4xf32, #tpu.memory_space<smem>>
    %214 = vector.broadcast %213 : f32 to vector<8x8xf32>
    %215 = arith.mulf %212, %214 : vector<8x8xf32>
    %216 = math.exp %215 : vector<8x8xf32>
    %cst_65 = arith.constant 9.99999974E-6 : f32
    %cst_66 = arith.constant 1.000000e+05 : f32
    %217 = vector.broadcast %cst_65 : f32 to vector<8x8xf32>
    %218 = arith.maximumf %217, %216 : vector<8x8xf32>
    %219 = vector.broadcast %cst_66 : f32 to vector<8x8xf32>
    %220 = arith.minimumf %219, %218 : vector<8x8xf32>
    %221 = arith.mulf %191, %220 : vector<8x8xf32>
    %cst_67 = arith.constant dense<0xFF800000> : vector<8xf32>
    %222 = vector.multi_reduction <maximumf>, %221, %cst_67 [1] : vector<8x8xf32> to vector<8xf32>
    %223 = vector.shape_cast %222 : vector<8xf32> to vector<8x1xf32>
    %224 = vector.broadcast %223 : vector<8x1xf32> to vector<8x8xf32>
    %225 = arith.subf %221, %224 : vector<8x8xf32>
    %226 = math.exp %225 : vector<8x8xf32>
    %cst_68 = arith.constant dense<0.000000e+00> : vector<8xf32>
    %227 = vector.multi_reduction <add>, %226, %cst_68 [1] : vector<8x8xf32> to vector<8xf32>
    %228 = vector.shape_cast %227 : vector<8xf32> to vector<8x1xf32>
    %229 = vector.broadcast %228 : vector<8x1xf32> to vector<8x8xf32>
    %230 = arith.divf %226, %229 : vector<8x8xf32>
    %cst_69 = arith.constant 0.000000e+00 : f32
    %231 = vector.broadcast %cst_69 : f32 to vector<8x8xf32>
    %232 = arith.select %41, %231, %230 : vector<8x8xi1>, vector<8x8xf32>
    %cst_70 = arith.constant dense<0.000000e+00> : vector<8x8xf32>
    %233 = tpu.matmul %232, %188, %cst_70 {dimension_numbers = #tpu.dot_dimension_numbers<[1], [0], [0], [1], [0, 0, 1, 1], [], []>} : vector<8x8xf32>, vector<8x8xf32>, vector<8x8xf32> -> vector<8x8xf32>
    %234 = tpu.concatenate %89, %137, %185, %233 in 1 : vector<8x8xf32>, vector<8x8xf32>, vector<8x8xf32>, vector<8x8xf32> -> vector<8x32xf32>
    %235 = vector.extract_strided_slice %20 {offsets = [8, 0], sizes = [8, 8], strides = [1, 1]} : vector<16x32xf32> to vector<8x8xf32>
    %236 = vector.extract_strided_slice %21 {offsets = [8, 0], sizes = [8, 8], strides = [1, 1]} : vector<16x32xf32> to vector<8x8xf32>
    %237 = vector.extract_strided_slice %24 {offsets = [8, 0], sizes = [8, 8], strides = [1, 1]} : vector<16x32xf32> to vector<8x8xf32>
    %cst_71 = arith.constant dense<0.000000e+00> : vector<8x8xf32>
    %238 = tpu.matmul %235, %236, %cst_71 {dimension_numbers = #tpu.dot_dimension_numbers<[1], [1], [0], [0], [0, 0, 1, 0], [], []>} : vector<8x8xf32>, vector<8x8xf32>, vector<8x8xf32> -> vector<8x8xf32>
    %cst_72 = arith.constant 0.353553385 : f32
    %239 = vector.broadcast %cst_72 : f32 to vector<8x8xf32>
    %240 = arith.mulf %238, %239 : vector<8x8xf32>
    %cst_73 = arith.constant -1.000000e+32 : f32
    %241 = vector.broadcast %cst_73 : f32 to vector<8x8xf32>
    %242 = arith.select %33, %241, %240 : vector<8x8xi1>, vector<8x8xf32>
    %cst_74 = arith.constant dense<0xFF800000> : vector<8xf32>
    %243 = vector.multi_reduction <maximumf>, %242, %cst_74 [1] : vector<8x8xf32> to vector<8xf32>
    %244 = vector.shape_cast %243 : vector<8xf32> to vector<8x1xf32>
    %245 = vector.broadcast %244 : vector<8x1xf32> to vector<8x8xf32>
    %246 = arith.subf %242, %245 : vector<8x8xf32>
    %247 = math.exp %246 : vector<8x8xf32>
    %cst_75 = arith.constant dense<0.000000e+00> : vector<8xf32>
    %248 = vector.multi_reduction <add>, %247, %cst_75 [1] : vector<8x8xf32> to vector<8xf32>
    %249 = vector.shape_cast %248 : vector<8xf32> to vector<8x1xf32>
    %250 = vector.broadcast %249 : vector<8x1xf32> to vector<8x8xf32>
    %251 = arith.divf %247, %250 : vector<8x8xf32>
    %252 = arith.mulf %251, %31 : vector<8x8xf32>
    %cst_76 = arith.constant dense<0.000000e+00> : vector<8x8xf32>
    %253 = tpu.matmul %252, %36, %cst_76 {dimension_numbers = #tpu.dot_dimension_numbers<[1], [0], [0], [1], [0, 0, 1, 1], [], []>} : vector<8x8xf32>, vector<8x8xf32>, vector<8x8xf32> -> vector<8x8xf32>
    %cst_77 = arith.constant dense<0.000000e+00> : vector<8xf32>
    %254 = vector.multi_reduction <add>, %252, %cst_77 [1] : vector<8x8xf32> to vector<8xf32>
    %255 = vector.shape_cast %254 : vector<8xf32> to vector<8x1xf32>
    %256 = vector.broadcast %255 : vector<8x1xf32> to vector<8x8xf32>
    %257 = arith.subf %256, %253 : vector<8x8xf32>
    %258 = arith.mulf %257, %39 : vector<8x8xf32>
    %cst_78 = arith.constant 0.000000e+00 : f32
    %259 = vector.broadcast %cst_78 : f32 to vector<8x8xf32>
    %260 = arith.maximumf %258, %259 : vector<8x8xf32>
    %261 = math.sqrt %260 : vector<8x8xf32>
    %c0_79 = arith.constant 0 : index
    %c0_80 = arith.constant 0 : index
    %262 = memref.load %arg5[%c0_79, %c0_80] : memref<1x4xf32, #tpu.memory_space<smem>>
    %263 = vector.broadcast %262 : f32 to vector<8x8xf32>
    %264 = arith.mulf %261, %263 : vector<8x8xf32>
    %265 = math.exp %264 : vector<8x8xf32>
    %cst_81 = arith.constant 9.99999974E-6 : f32
    %cst_82 = arith.constant 1.000000e+05 : f32
    %266 = vector.broadcast %cst_81 : f32 to vector<8x8xf32>
    %267 = arith.maximumf %266, %265 : vector<8x8xf32>
    %268 = vector.broadcast %cst_82 : f32 to vector<8x8xf32>
    %269 = arith.minimumf %268, %267 : vector<8x8xf32>
    %270 = arith.mulf %240, %269 : vector<8x8xf32>
    %cst_83 = arith.constant dense<0xFF800000> : vector<8xf32>
    %271 = vector.multi_reduction <maximumf>, %270, %cst_83 [1] : vector<8x8xf32> to vector<8xf32>
    %272 = vector.shape_cast %271 : vector<8xf32> to vector<8x1xf32>
    %273 = vector.broadcast %272 : vector<8x1xf32> to vector<8x8xf32>
    %274 = arith.subf %270, %273 : vector<8x8xf32>
    %275 = math.exp %274 : vector<8x8xf32>
    %cst_84 = arith.constant dense<0.000000e+00> : vector<8xf32>
    %276 = vector.multi_reduction <add>, %275, %cst_84 [1] : vector<8x8xf32> to vector<8xf32>
    %277 = vector.shape_cast %276 : vector<8xf32> to vector<8x1xf32>
    %278 = vector.broadcast %277 : vector<8x1xf32> to vector<8x8xf32>
    %279 = arith.divf %275, %278 : vector<8x8xf32>
    %cst_85 = arith.constant 0.000000e+00 : f32
    %280 = vector.broadcast %cst_85 : f32 to vector<8x8xf32>
    %281 = arith.select %41, %280, %279 : vector<8x8xi1>, vector<8x8xf32>
    %cst_86 = arith.constant dense<0.000000e+00> : vector<8x8xf32>
    %282 = tpu.matmul %281, %237, %cst_86 {dimension_numbers = #tpu.dot_dimension_numbers<[1], [0], [0], [1], [0, 0, 1, 1], [], []>} : vector<8x8xf32>, vector<8x8xf32>, vector<8x8xf32> -> vector<8x8xf32>
    %283 = vector.extract_strided_slice %20 {offsets = [8, 8], sizes = [8, 8], strides = [1, 1]} : vector<16x32xf32> to vector<8x8xf32>
    %284 = vector.extract_strided_slice %21 {offsets = [8, 8], sizes = [8, 8], strides = [1, 1]} : vector<16x32xf32> to vector<8x8xf32>
    %285 = vector.extract_strided_slice %24 {offsets = [8, 8], sizes = [8, 8], strides = [1, 1]} : vector<16x32xf32> to vector<8x8xf32>
    %cst_87 = arith.constant dense<0.000000e+00> : vector<8x8xf32>
    %286 = tpu.matmul %283, %284, %cst_87 {dimension_numbers = #tpu.dot_dimension_numbers<[1], [1], [0], [0], [0, 0, 1, 0], [], []>} : vector<8x8xf32>, vector<8x8xf32>, vector<8x8xf32> -> vector<8x8xf32>
    %cst_88 = arith.constant 0.353553385 : f32
    %287 = vector.broadcast %cst_88 : f32 to vector<8x8xf32>
    %288 = arith.mulf %286, %287 : vector<8x8xf32>
    %cst_89 = arith.constant -1.000000e+32 : f32
    %289 = vector.broadcast %cst_89 : f32 to vector<8x8xf32>
    %290 = arith.select %33, %289, %288 : vector<8x8xi1>, vector<8x8xf32>
    %cst_90 = arith.constant dense<0xFF800000> : vector<8xf32>
    %291 = vector.multi_reduction <maximumf>, %290, %cst_90 [1] : vector<8x8xf32> to vector<8xf32>
    %292 = vector.shape_cast %291 : vector<8xf32> to vector<8x1xf32>
    %293 = vector.broadcast %292 : vector<8x1xf32> to vector<8x8xf32>
    %294 = arith.subf %290, %293 : vector<8x8xf32>
    %295 = math.exp %294 : vector<8x8xf32>
    %cst_91 = arith.constant dense<0.000000e+00> : vector<8xf32>
    %296 = vector.multi_reduction <add>, %295, %cst_91 [1] : vector<8x8xf32> to vector<8xf32>
    %297 = vector.shape_cast %296 : vector<8xf32> to vector<8x1xf32>
    %298 = vector.broadcast %297 : vector<8x1xf32> to vector<8x8xf32>
    %299 = arith.divf %295, %298 : vector<8x8xf32>
    %300 = arith.mulf %299, %31 : vector<8x8xf32>
    %cst_92 = arith.constant dense<0.000000e+00> : vector<8x8xf32>
    %301 = tpu.matmul %300, %36, %cst_92 {dimension_numbers = #tpu.dot_dimension_numbers<[1], [0], [0], [1], [0, 0, 1, 1], [], []>} : vector<8x8xf32>, vector<8x8xf32>, vector<8x8xf32> -> vector<8x8xf32>
    %cst_93 = arith.constant dense<0.000000e+00> : vector<8xf32>
    %302 = vector.multi_reduction <add>, %300, %cst_93 [1] : vector<8x8xf32> to vector<8xf32>
    %303 = vector.shape_cast %302 : vector<8xf32> to vector<8x1xf32>
    %304 = vector.broadcast %303 : vector<8x1xf32> to vector<8x8xf32>
    %305 = arith.subf %304, %301 : vector<8x8xf32>
    %306 = arith.mulf %305, %39 : vector<8x8xf32>
    %cst_94 = arith.constant 0.000000e+00 : f32
    %307 = vector.broadcast %cst_94 : f32 to vector<8x8xf32>
    %308 = arith.maximumf %306, %307 : vector<8x8xf32>
    %309 = math.sqrt %308 : vector<8x8xf32>
    %c0_95 = arith.constant 0 : index
    %c1_96 = arith.constant 1 : index
    %310 = memref.load %arg5[%c0_95, %c1_96] : memref<1x4xf32, #tpu.memory_space<smem>>
    %311 = vector.broadcast %310 : f32 to vector<8x8xf32>
    %312 = arith.mulf %309, %311 : vector<8x8xf32>
    %313 = math.exp %312 : vector<8x8xf32>
    %cst_97 = arith.constant 9.99999974E-6 : f32
    %cst_98 = arith.constant 1.000000e+05 : f32
    %314 = vector.broadcast %cst_97 : f32 to vector<8x8xf32>
    %315 = arith.maximumf %314, %313 : vector<8x8xf32>
    %316 = vector.broadcast %cst_98 : f32 to vector<8x8xf32>
    %317 = arith.minimumf %316, %315 : vector<8x8xf32>
    %318 = arith.mulf %288, %317 : vector<8x8xf32>
    %cst_99 = arith.constant dense<0xFF800000> : vector<8xf32>
    %319 = vector.multi_reduction <maximumf>, %318, %cst_99 [1] : vector<8x8xf32> to vector<8xf32>
    %320 = vector.shape_cast %319 : vector<8xf32> to vector<8x1xf32>
    %321 = vector.broadcast %320 : vector<8x1xf32> to vector<8x8xf32>
    %322 = arith.subf %318, %321 : vector<8x8xf32>
    %323 = math.exp %322 : vector<8x8xf32>
    %cst_100 = arith.constant dense<0.000000e+00> : vector<8xf32>
    %324 = vector.multi_reduction <add>, %323, %cst_100 [1] : vector<8x8xf32> to vector<8xf32>
    %325 = vector.shape_cast %324 : vector<8xf32> to vector<8x1xf32>
    %326 = vector.broadcast %325 : vector<8x1xf32> to vector<8x8xf32>
    %327 = arith.divf %323, %326 : vector<8x8xf32>
    %cst_101 = arith.constant 0.000000e+00 : f32
    %328 = vector.broadcast %cst_101 : f32 to vector<8x8xf32>
    %329 = arith.select %41, %328, %327 : vector<8x8xi1>, vector<8x8xf32>
    %cst_102 = arith.constant dense<0.000000e+00> : vector<8x8xf32>
    %330 = tpu.matmul %329, %285, %cst_102 {dimension_numbers = #tpu.dot_dimension_numbers<[1], [0], [0], [1], [0, 0, 1, 1], [], []>} : vector<8x8xf32>, vector<8x8xf32>, vector<8x8xf32> -> vector<8x8xf32>
    %331 = vector.extract_strided_slice %20 {offsets = [8, 16], sizes = [8, 8], strides = [1, 1]} : vector<16x32xf32> to vector<8x8xf32>
    %332 = vector.extract_strided_slice %21 {offsets = [8, 16], sizes = [8, 8], strides = [1, 1]} : vector<16x32xf32> to vector<8x8xf32>
    %333 = vector.extract_strided_slice %24 {offsets = [8, 16], sizes = [8, 8], strides = [1, 1]} : vector<16x32xf32> to vector<8x8xf32>
    %cst_103 = arith.constant dense<0.000000e+00> : vector<8x8xf32>
    %334 = tpu.matmul %331, %332, %cst_103 {dimension_numbers = #tpu.dot_dimension_numbers<[1], [1], [0], [0], [0, 0, 1, 0], [], []>} : vector<8x8xf32>, vector<8x8xf32>, vector<8x8xf32> -> vector<8x8xf32>
    %cst_104 = arith.constant 0.353553385 : f32
    %335 = vector.broadcast %cst_104 : f32 to vector<8x8xf32>
    %336 = arith.mulf %334, %335 : vector<8x8xf32>
    %cst_105 = arith.constant -1.000000e+32 : f32
    %337 = vector.broadcast %cst_105 : f32 to vector<8x8xf32>
    %338 = arith.select %33, %337, %336 : vector<8x8xi1>, vector<8x8xf32>
    %cst_106 = arith.constant dense<0xFF800000> : vector<8xf32>
    %339 = vector.multi_reduction <maximumf>, %338, %cst_106 [1] : vector<8x8xf32> to vector<8xf32>
    %340 = vector.shape_cast %339 : vector<8xf32> to vector<8x1xf32>
    %341 = vector.broadcast %340 : vector<8x1xf32> to vector<8x8xf32>
    %342 = arith.subf %338, %341 : vector<8x8xf32>
    %343 = math.exp %342 : vector<8x8xf32>
    %cst_107 = arith.constant dense<0.000000e+00> : vector<8xf32>
    %344 = vector.multi_reduction <add>, %343, %cst_107 [1] : vector<8x8xf32> to vector<8xf32>
    %345 = vector.shape_cast %344 : vector<8xf32> to vector<8x1xf32>
    %346 = vector.broadcast %345 : vector<8x1xf32> to vector<8x8xf32>
    %347 = arith.divf %343, %346 : vector<8x8xf32>
    %348 = arith.mulf %347, %31 : vector<8x8xf32>
    %cst_108 = arith.constant dense<0.000000e+00> : vector<8x8xf32>
    %349 = tpu.matmul %348, %36, %cst_108 {dimension_numbers = #tpu.dot_dimension_numbers<[1], [0], [0], [1], [0, 0, 1, 1], [], []>} : vector<8x8xf32>, vector<8x8xf32>, vector<8x8xf32> -> vector<8x8xf32>
    %cst_109 = arith.constant dense<0.000000e+00> : vector<8xf32>
    %350 = vector.multi_reduction <add>, %348, %cst_109 [1] : vector<8x8xf32> to vector<8xf32>
    %351 = vector.shape_cast %350 : vector<8xf32> to vector<8x1xf32>
    %352 = vector.broadcast %351 : vector<8x1xf32> to vector<8x8xf32>
    %353 = arith.subf %352, %349 : vector<8x8xf32>
    %354 = arith.mulf %353, %39 : vector<8x8xf32>
    %cst_110 = arith.constant 0.000000e+00 : f32
    %355 = vector.broadcast %cst_110 : f32 to vector<8x8xf32>
    %356 = arith.maximumf %354, %355 : vector<8x8xf32>
    %357 = math.sqrt %356 : vector<8x8xf32>
    %c0_111 = arith.constant 0 : index
    %c2_112 = arith.constant 2 : index
    %358 = memref.load %arg5[%c0_111, %c2_112] : memref<1x4xf32, #tpu.memory_space<smem>>
    %359 = vector.broadcast %358 : f32 to vector<8x8xf32>
    %360 = arith.mulf %357, %359 : vector<8x8xf32>
    %361 = math.exp %360 : vector<8x8xf32>
    %cst_113 = arith.constant 9.99999974E-6 : f32
    %cst_114 = arith.constant 1.000000e+05 : f32
    %362 = vector.broadcast %cst_113 : f32 to vector<8x8xf32>
    %363 = arith.maximumf %362, %361 : vector<8x8xf32>
    %364 = vector.broadcast %cst_114 : f32 to vector<8x8xf32>
    %365 = arith.minimumf %364, %363 : vector<8x8xf32>
    %366 = arith.mulf %336, %365 : vector<8x8xf32>
    %cst_115 = arith.constant dense<0xFF800000> : vector<8xf32>
    %367 = vector.multi_reduction <maximumf>, %366, %cst_115 [1] : vector<8x8xf32> to vector<8xf32>
    %368 = vector.shape_cast %367 : vector<8xf32> to vector<8x1xf32>
    %369 = vector.broadcast %368 : vector<8x1xf32> to vector<8x8xf32>
    %370 = arith.subf %366, %369 : vector<8x8xf32>
    %371 = math.exp %370 : vector<8x8xf32>
    %cst_116 = arith.constant dense<0.000000e+00> : vector<8xf32>
    %372 = vector.multi_reduction <add>, %371, %cst_116 [1] : vector<8x8xf32> to vector<8xf32>
    %373 = vector.shape_cast %372 : vector<8xf32> to vector<8x1xf32>
    %374 = vector.broadcast %373 : vector<8x1xf32> to vector<8x8xf32>
    %375 = arith.divf %371, %374 : vector<8x8xf32>
    %cst_117 = arith.constant 0.000000e+00 : f32
    %376 = vector.broadcast %cst_117 : f32 to vector<8x8xf32>
    %377 = arith.select %41, %376, %375 : vector<8x8xi1>, vector<8x8xf32>
    %cst_118 = arith.constant dense<0.000000e+00> : vector<8x8xf32>
    %378 = tpu.matmul %377, %333, %cst_118 {dimension_numbers = #tpu.dot_dimension_numbers<[1], [0], [0], [1], [0, 0, 1, 1], [], []>} : vector<8x8xf32>, vector<8x8xf32>, vector<8x8xf32> -> vector<8x8xf32>
    %379 = vector.extract_strided_slice %20 {offsets = [8, 24], sizes = [8, 8], strides = [1, 1]} : vector<16x32xf32> to vector<8x8xf32>
    %380 = vector.extract_strided_slice %21 {offsets = [8, 24], sizes = [8, 8], strides = [1, 1]} : vector<16x32xf32> to vector<8x8xf32>
    %381 = vector.extract_strided_slice %24 {offsets = [8, 24], sizes = [8, 8], strides = [1, 1]} : vector<16x32xf32> to vector<8x8xf32>
    %cst_119 = arith.constant dense<0.000000e+00> : vector<8x8xf32>
    %382 = tpu.matmul %379, %380, %cst_119 {dimension_numbers = #tpu.dot_dimension_numbers<[1], [1], [0], [0], [0, 0, 1, 0], [], []>} : vector<8x8xf32>, vector<8x8xf32>, vector<8x8xf32> -> vector<8x8xf32>
    %cst_120 = arith.constant 0.353553385 : f32
    %383 = vector.broadcast %cst_120 : f32 to vector<8x8xf32>
    %384 = arith.mulf %382, %383 : vector<8x8xf32>
    %cst_121 = arith.constant -1.000000e+32 : f32
    %385 = vector.broadcast %cst_121 : f32 to vector<8x8xf32>
    %386 = arith.select %33, %385, %384 : vector<8x8xi1>, vector<8x8xf32>
    %cst_122 = arith.constant dense<0xFF800000> : vector<8xf32>
    %387 = vector.multi_reduction <maximumf>, %386, %cst_122 [1] : vector<8x8xf32> to vector<8xf32>
    %388 = vector.shape_cast %387 : vector<8xf32> to vector<8x1xf32>
    %389 = vector.broadcast %388 : vector<8x1xf32> to vector<8x8xf32>
    %390 = arith.subf %386, %389 : vector<8x8xf32>
    %391 = math.exp %390 : vector<8x8xf32>
    %cst_123 = arith.constant dense<0.000000e+00> : vector<8xf32>
    %392 = vector.multi_reduction <add>, %391, %cst_123 [1] : vector<8x8xf32> to vector<8xf32>
    %393 = vector.shape_cast %392 : vector<8xf32> to vector<8x1xf32>
    %394 = vector.broadcast %393 : vector<8x1xf32> to vector<8x8xf32>
    %395 = arith.divf %391, %394 : vector<8x8xf32>
    %396 = arith.mulf %395, %31 : vector<8x8xf32>
    %cst_124 = arith.constant dense<0.000000e+00> : vector<8x8xf32>
    %397 = tpu.matmul %396, %36, %cst_124 {dimension_numbers = #tpu.dot_dimension_numbers<[1], [0], [0], [1], [0, 0, 1, 1], [], []>} : vector<8x8xf32>, vector<8x8xf32>, vector<8x8xf32> -> vector<8x8xf32>
    %cst_125 = arith.constant dense<0.000000e+00> : vector<8xf32>
    %398 = vector.multi_reduction <add>, %396, %cst_125 [1] : vector<8x8xf32> to vector<8xf32>
    %399 = vector.shape_cast %398 : vector<8xf32> to vector<8x1xf32>
    %400 = vector.broadcast %399 : vector<8x1xf32> to vector<8x8xf32>
    %401 = arith.subf %400, %397 : vector<8x8xf32>
    %402 = arith.mulf %401, %39 : vector<8x8xf32>
    %cst_126 = arith.constant 0.000000e+00 : f32
    %403 = vector.broadcast %cst_126 : f32 to vector<8x8xf32>
    %404 = arith.maximumf %402, %403 : vector<8x8xf32>
    %405 = math.sqrt %404 : vector<8x8xf32>
    %c0_127 = arith.constant 0 : index
    %c3_128 = arith.constant 3 : index
    %406 = memref.load %arg5[%c0_127, %c3_128] : memref<1x4xf32, #tpu.memory_space<smem>>
    %407 = vector.broadcast %406 : f32 to vector<8x8xf32>
    %408 = arith.mulf %405, %407 : vector<8x8xf32>
    %409 = math.exp %408 : vector<8x8xf32>
    %cst_129 = arith.constant 9.99999974E-6 : f32
    %cst_130 = arith.constant 1.000000e+05 : f32
    %410 = vector.broadcast %cst_129 : f32 to vector<8x8xf32>
    %411 = arith.maximumf %410, %409 : vector<8x8xf32>
    %412 = vector.broadcast %cst_130 : f32 to vector<8x8xf32>
    %413 = arith.minimumf %412, %411 : vector<8x8xf32>
    %414 = arith.mulf %384, %413 : vector<8x8xf32>
    %cst_131 = arith.constant dense<0xFF800000> : vector<8xf32>
    %415 = vector.multi_reduction <maximumf>, %414, %cst_131 [1] : vector<8x8xf32> to vector<8xf32>
    %416 = vector.shape_cast %415 : vector<8xf32> to vector<8x1xf32>
    %417 = vector.broadcast %416 : vector<8x1xf32> to vector<8x8xf32>
    %418 = arith.subf %414, %417 : vector<8x8xf32>
    %419 = math.exp %418 : vector<8x8xf32>
    %cst_132 = arith.constant dense<0.000000e+00> : vector<8xf32>
    %420 = vector.multi_reduction <add>, %419, %cst_132 [1] : vector<8x8xf32> to vector<8xf32>
    %421 = vector.shape_cast %420 : vector<8xf32> to vector<8x1xf32>
    %422 = vector.broadcast %421 : vector<8x1xf32> to vector<8x8xf32>
    %423 = arith.divf %419, %422 : vector<8x8xf32>
    %cst_133 = arith.constant 0.000000e+00 : f32
    %424 = vector.broadcast %cst_133 : f32 to vector<8x8xf32>
    %425 = arith.select %41, %424, %423 : vector<8x8xi1>, vector<8x8xf32>
    %cst_134 = arith.constant dense<0.000000e+00> : vector<8x8xf32>
    %426 = tpu.matmul %425, %381, %cst_134 {dimension_numbers = #tpu.dot_dimension_numbers<[1], [0], [0], [1], [0, 0, 1, 1], [], []>} : vector<8x8xf32>, vector<8x8xf32>, vector<8x8xf32> -> vector<8x8xf32>
    %427 = tpu.concatenate %282, %330, %378, %426 in 1 : vector<8x8xf32>, vector<8x8xf32>, vector<8x8xf32>, vector<8x8xf32> -> vector<8x32xf32>
    %428 = tpu.concatenate %234, %427 in 0 : vector<8x32xf32>, vector<8x32xf32> -> vector<16x32xf32>
    %cst_135 = arith.constant dense<0.000000e+00> : vector<16x32xf32>
    %429 = tpu.matmul %428, %6, %cst_135 {dimension_numbers = #tpu.dot_dimension_numbers<[1], [0], [0], [1], [0, 0, 1, 1], [], []>} : vector<16x32xf32>, vector<32x32xf32>, vector<16x32xf32> -> vector<16x32xf32>
    %430 = vector.broadcast %10 : vector<1x32xf32> to vector<16x32xf32>
    %431 = arith.addf %429, %430 : vector<16x32xf32>
    %432 = arith.addf %1, %431 : vector<16x32xf32>
    %cst_136 = arith.constant dense<0.000000e+00> : vector<16xf32>
    %433 = vector.multi_reduction <add>, %432, %cst_136 [1] : vector<16x32xf32> to vector<16xf32>
    %434 = vector.shape_cast %433 : vector<16xf32> to vector<16x1xf32>
    %cst_137 = arith.constant 3.200000e+01 : f32
    %435 = vector.broadcast %cst_137 : f32 to vector<16x1xf32>
    %436 = arith.divf %434, %435 : vector<16x1xf32>
    %437 = vector.broadcast %436 : vector<16x1xf32> to vector<16x32xf32>
    %438 = arith.subf %432, %437 : vector<16x32xf32>
    %439 = arith.mulf %438, %438 : vector<16x32xf32>
    %cst_138 = arith.constant dense<0.000000e+00> : vector<16xf32>
    %440 = vector.multi_reduction <add>, %439, %cst_138 [1] : vector<16x32xf32> to vector<16xf32>
    %441 = vector.shape_cast %440 : vector<16xf32> to vector<16x1xf32>
    %cst_139 = arith.constant 3.200000e+01 : f32
    %442 = vector.broadcast %cst_139 : f32 to vector<16x1xf32>
    %443 = arith.divf %441, %442 : vector<16x1xf32>
    %444 = vector.broadcast %436 : vector<16x1xf32> to vector<16x32xf32>
    %445 = arith.subf %432, %444 : vector<16x32xf32>
    %cst_140 = arith.constant 9.99999974E-6 : f32
    %446 = vector.broadcast %cst_140 : f32 to vector<16x1xf32>
    %447 = arith.addf %443, %446 : vector<16x1xf32>
    %448 = math.rsqrt %447 : vector<16x1xf32>
    %449 = vector.broadcast %448 : vector<16x1xf32> to vector<16x32xf32>
    %450 = arith.mulf %445, %449 : vector<16x32xf32>
    %451 = vector.broadcast %11 : vector<1x32xf32> to vector<16x32xf32>
    %452 = arith.mulf %450, %451 : vector<16x32xf32>
    %453 = vector.broadcast %12 : vector<1x32xf32> to vector<16x32xf32>
    %454 = arith.addf %452, %453 : vector<16x32xf32>
    %c0_141 = arith.constant 0 : index
    %c0_142 = arith.constant 0 : index
    %455 = vector.load %arg2[%c0_141, %c0_142] : memref<32x64xf32, #tpu.memory_space<vmem>>, vector<32x64xf32>
    %cst_143 = arith.constant dense<0.000000e+00> : vector<16x64xf32>
    %456 = tpu.matmul %454, %455, %cst_143 {dimension_numbers = #tpu.dot_dimension_numbers<[1], [0], [0], [1], [0, 0, 1, 1], [], []>} : vector<16x32xf32>, vector<32x64xf32>, vector<16x64xf32> -> vector<16x64xf32>
    %457 = vector.broadcast %13 : vector<1x64xf32> to vector<16x64xf32>
    %458 = arith.addf %456, %457 : vector<16x64xf32>
    %cst_144 = arith.constant 0.000000e+00 : f32
    %459 = vector.broadcast %cst_144 : f32 to vector<16x64xf32>
    %460 = arith.maximumf %458, %459 : vector<16x64xf32>
    %c0_145 = arith.constant 0 : index
    %c0_146 = arith.constant 0 : index
    %461 = vector.load %arg3[%c0_145, %c0_146] : memref<64x32xf32, #tpu.memory_space<vmem>>, vector<64x32xf32>
    %cst_147 = arith.constant dense<0.000000e+00> : vector<16x32xf32>
    %462 = tpu.matmul %460, %461, %cst_147 {dimension_numbers = #tpu.dot_dimension_numbers<[1], [0], [0], [1], [0, 0, 1, 1], [], []>} : vector<16x64xf32>, vector<64x32xf32>, vector<16x32xf32> -> vector<16x32xf32>
    %463 = vector.broadcast %14 : vector<1x32xf32> to vector<16x32xf32>
    %464 = arith.addf %462, %463 : vector<16x32xf32>
    %465 = arith.addf %454, %464 : vector<16x32xf32>
    %cst_148 = arith.constant dense<0.000000e+00> : vector<16xf32>
    %466 = vector.multi_reduction <add>, %465, %cst_148 [1] : vector<16x32xf32> to vector<16xf32>
    %467 = vector.shape_cast %466 : vector<16xf32> to vector<16x1xf32>
    %cst_149 = arith.constant 3.200000e+01 : f32
    %468 = vector.broadcast %cst_149 : f32 to vector<16x1xf32>
    %469 = arith.divf %467, %468 : vector<16x1xf32>
    %470 = vector.broadcast %469 : vector<16x1xf32> to vector<16x32xf32>
    %471 = arith.subf %465, %470 : vector<16x32xf32>
    %472 = arith.mulf %471, %471 : vector<16x32xf32>
    %cst_150 = arith.constant dense<0.000000e+00> : vector<16xf32>
    %473 = vector.multi_reduction <add>, %472, %cst_150 [1] : vector<16x32xf32> to vector<16xf32>
    %474 = vector.shape_cast %473 : vector<16xf32> to vector<16x1xf32>
    %cst_151 = arith.constant 3.200000e+01 : f32
    %475 = vector.broadcast %cst_151 : f32 to vector<16x1xf32>
    %476 = arith.divf %474, %475 : vector<16x1xf32>
    %477 = vector.broadcast %469 : vector<16x1xf32> to vector<16x32xf32>
    %478 = arith.subf %465, %477 : vector<16x32xf32>
    %cst_152 = arith.constant 9.99999974E-6 : f32
    %479 = vector.broadcast %cst_152 : f32 to vector<16x1xf32>
    %480 = arith.addf %476, %479 : vector<16x1xf32>
    %481 = math.rsqrt %480 : vector<16x1xf32>
    %482 = vector.broadcast %481 : vector<16x1xf32> to vector<16x32xf32>
    %483 = arith.mulf %478, %482 : vector<16x32xf32>
    %484 = vector.broadcast %15 : vector<1x32xf32> to vector<16x32xf32>
    %485 = arith.mulf %483, %484 : vector<16x32xf32>
    %486 = vector.broadcast %16 : vector<1x32xf32> to vector<16x32xf32>
    %487 = arith.addf %485, %486 : vector<16x32xf32>
    %c0_153 = arith.constant 0 : index
    %c0_154 = arith.constant 0 : index
    %488 = vector.load %arg6[%c0_153, %c0_154] : memref<16x32xf32, #tpu.memory_space<vmem>>, vector<16x32xf32>
    tpu.vector_store %arg6[%c0_153, %c0_154], %487 {strides = array<i32>} : memref<16x32xf32, #tpu.memory_space<vmem>>, vector<16x32xf32>,
    return
  }
}

</mosaic_0001>

<llo_original>
// kernel: transformer_layer.1
$region0: #{transformer_layer.1}
  #allocation0 [shape = 'u32[]', space=smem, size = 0x4, offset = 0x4, fixed_abs, tag = 'smem constant byte address 0x4 - core index']
  #allocation1 [shape = 'u32[144,128]{1,0:T(1,128)}', space=vmem, size = 0x12000, scoped, tag = 'internal scratch']
  %s0 = inlined_call_operand.vmem [shape: f32[48,32], index: 0, kind: input, shape index: {}]
  %s1 = inlined_call_operand.vmem [shape: f32[96,32], index: 1, kind: input, shape index: {}]
  %s2 = inlined_call_operand.vmem [shape: f32[32,64], index: 2, kind: input, shape index: {}]
  %s3 = inlined_call_operand.vmem [shape: f32[64,32], index: 3, kind: input, shape index: {}]
  %s4 = inlined_call_operand.vmem [shape: f32[9,64], index: 4, kind: input, shape index: {}]
  %s5 = inlined_call_operand.vmem [shape: f32[1,4], index: 5, kind: input, shape index: {}]
  %s6 = inlined_call_operand.hbm [shape: f32[16,32], index: 6, kind: output, shape index: {}]
  %s7 = sld [smem:[#allocation0]]
  $region38: #{transformer_layer.1} parent=0
    _
  %s9 = ssub.s32 1, %s7
  %s10 = scalar_select 0, %s9, %s7
  $region1: #{transformer_layer.1} parent=0
    #allocation2 [shape = 'u8[512]{0}', space=smem, size = 0x200, scoped, tag = 'input window, operand 5, single buffered']
    #allocation3 [shape = 's32[1]{0}', space=sflag, size = 0x4, scoped, tag = 'scoped memory for transformer_layer.1']
    #allocation4 [shape = 's32[1]{0}', space=sflag, size = 0x4, scoped, tag = 'scoped memory for transformer_layer.1']
    #allocation5 [shape = 'u8[8192]{0}', space=vmem, size = 0x2000, scoped, tag = 'output window, operand 0, single buffered']
    %11 = vsyncpa [#allocation4], 0
    %12 = vsyncpa [#allocation3], 0
    // Predicated region
    $region2: #{transformer_layer.1} parent=1 // pred_check
      _
    $region3: #{transformer_layer.1} parent=1 // pred_check_branch
      %14 = sbr.rel (0) target = $region5
    $region4: #{transformer_layer.1} parent=1 // pred_region
      _
    $region5: #{transformer_layer.1} parent=1 // pred_fallthru
      _
    // Predicated region
    $region6: #{transformer_layer.1} parent=1 // pred_check
      _
    $region7: #{transformer_layer.1} parent=1 // pred_check_branch
      %16 = sbr.rel (0) target = $region9
    $region8: #{transformer_layer.1} parent=1 // pred_region
      _
    $region9: #{transformer_layer.1} parent=1 // pred_fallthru
      _
    // Predicated region
    $region10: #{transformer_layer.1} parent=1 // pred_check
      _
    $region11: #{transformer_layer.1} parent=1 // pred_check_branch
      %18 = sbr.rel (0) target = $region13
    $region12: #{transformer_layer.1} parent=1 // pred_region
      _
    $region13: #{transformer_layer.1} parent=1 // pred_fallthru
      _
    // Predicated region
    $region14: #{transformer_layer.1} parent=1 // pred_check
      _
    $region15: #{transformer_layer.1} parent=1 // pred_check_branch
      %20 = sbr.rel (0) target = $region17
    $region16: #{transformer_layer.1} parent=1 // pred_region
      _
    $region17: #{transformer_layer.1} parent=1 // pred_fallthru
      _
    // Predicated region
    $region18: #{transformer_layer.1} parent=1 // pred_check
      _
    $region19: #{transformer_layer.1} parent=1 // pred_check_branch
      %22 = sbr.rel (0) target = $region21
    $region20: #{transformer_layer.1} parent=1 // pred_region
      _
    $region21: #{transformer_layer.1} parent=1 // pred_fallthru
      _
    // Predicated region
    $region22: #{transformer_layer.1} parent=1 // pred_check
      _
    $region23: #{transformer_layer.1} parent=1 // pred_check_branch
      %24 = sbr.rel (0) target = $region25
    $region24: #{transformer_layer.1} parent=1 // pred_region
      %s26 = ssub.s32 16, 16
      %27 = vsyncadd [#allocation4], %s26
      %s29 = sshll.u32 %s5, 4
      %s30 = int_to_ptr.vmem [resolvable:$true] %s29
      %32 = dma.vmem_to_smem %s30, 16, [#allocation2], [#allocation4]
    $region25: #{transformer_layer.1} parent=1 // pred_fallthru
      _
    // Predicated region
    $region26: #{transformer_layer.1} parent=1 // pred_check
      _
    $region27: #{transformer_layer.1} parent=1 // pred_check_branch
      %34 = sbr.rel (0) target = $region29
    $region28: #{transformer_layer.1} parent=1 // pred_region
      %35 = dma.done [#allocation4], 16
    $region29: #{transformer_layer.1} parent=1 // pred_fallthru
      _
    %36 = sfence
    %v37 = vld [vmem:[%s0] sm:$0xff]
    %v38 = vld [vmem:[%s0 + $0x8] sm:$0xff]
    %v39 = vld [vmem:[%s0 + $0x10] sm:$0xff]
    %v40 = vld [vmem:[%s0 + $0x18] sm:$0xff]
    %v41 = vld [vmem:[%s0 + $0x20] sm:$0xff]
    %v42 = vld [vmem:[%s0 + $0x28] sm:$0xff]
    %v43 = vld [vmem:[%s1] sm:$0xff]
    %v44 = vld [vmem:[%s1 + $0x8] sm:$0xff]
    %v45 = vld [vmem:[%s1 + $0x10] sm:$0xff]
    %v46 = vld [vmem:[%s1 + $0x18] sm:$0xff]
    %v47 = vld [vmem:[%s1 + $0x20] sm:$0xff]
    %v48 = vld [vmem:[%s1 + $0x28] sm:$0xff]
    %v49 = vld [vmem:[%s1 + $0x30] sm:$0xff]
    %v50 = vld [vmem:[%s1 + $0x38] sm:$0xff]
    %v51 = vld [vmem:[%s1 + $0x40] sm:$0xff]
    %v52 = vld [vmem:[%s1 + $0x48] sm:$0xff]
    %v53 = vld [vmem:[%s1 + $0x50] sm:$0xff]
    %v54 = vld [vmem:[%s1 + $0x58] sm:$0xff]
    %v55 = vld [vmem:[%s4] sm:$0xff]
    %v56 = vld [vmem:[%s4 + $0x8] sm:$0x1]
    %v57 = vlaneseq
    %v58 = vshrl.u32 %v57, 7
    %v59 = vsub.s32 0, %v58
    %v60 = vrot.slane %v55, %v59
    %vm61 = vcmask 261120
    %v63 = vsel %vm61, %v37, 0
    %v66 = vsel %vm61, %v38, 0
    %v69 = vsel %vm61, %v39, 0
    %v72 = vsel %vm61, %v40, 0
    %74 = vmatprep.subr.mxu0 0.0
    %75 = vmatpush1.msra.mxu0 %v43
    %76 = vmatprep.subr.mxu0 0.0
    %77 = vmatpush1.msra.mxu0 %v44
    %78 = vmatprep.subr.mxu0 0.0
    %79 = vmatpush1.msra.mxu0 %v45
    %80 = vmatprep.subr.mxu0 0.0
    %81 = vmatpush1.msra.mxu0 %v46
    %82 = vmatprep.subr.mxu0 0.0
    %83 = vmatpush1.msra.mxu0 0.0
    %84 = vmatprep.subr.mxu0 0.0
    %85 = vmatpush1.msra.mxu0 0.0
    %86 = vmatprep.subr.mxu0 0.0
    %87 = vmatpush1.msra.mxu0 0.0
    %88 = vmatprep.subr.mxu0 0.0
    %89 = vmatpush1.msra.mxu0 0.0
    %90 = vmatprep.subr.mxu0 0.0
    %91 = vmatpush1.msra.mxu0 0.0
    %92 = vmatprep.subr.mxu0 0.0
    %93 = vmatpush1.msra.mxu0 0.0
    %94 = vmatprep.subr.mxu0 0.0
    %95 = vmatpush1.msra.mxu0 0.0
    %96 = vmatprep.subr.mxu0 0.0
    %97 = vmatpush1.msra.mxu0 0.0
    %98 = vmatprep.subr.mxu0 0.0
    %99 = vmatpush1.msra.mxu0 0.0
    %100 = vmatprep.subr.mxu0 0.0
    %101 = vmatpush1.msra.mxu0 0.0
    %102 = vmatprep.subr.mxu0 0.0
    %103 = vmatpush1.msra.mxu0 0.0
    %104 = vmatprep.subr.mxu0 0.0
    %105 = vmatpush1.msra.mxu0 0.0
    %106 = vmatprep.subr.mxu0 0.0
    %107 = vmatpush1.msra.mxu0 0.0
    %108 = vmatprep.subr.mxu0 0.0
    %109 = vmatpush1.msra.mxu0 0.0
    %110 = vmatprep.subr.mxu0 0.0
    %111 = vmatpush1.msra.mxu0 0.0
    %112 = vmatprep.subr.mxu0 0.0
    %113 = vmatpush1.msra.mxu0 0.0
    %114 = vmatprep.subr.mxu0 0.0
    %115 = vmatpush1.msra.mxu0 0.0
    %116 = vmatprep.subr.mxu0 0.0
    %117 = vmatpush1.msra.mxu0 0.0
    %118 = vmatprep.subr.mxu0 0.0
    %119 = vmatpush1.msra.mxu0 0.0
    %120 = vmatprep.subr.mxu0 0.0
    %121 = vmatpush1.msra.mxu0 0.0
    %122 = vmatprep.subr.mxu0 0.0
    %123 = vmatpush1.msra.mxu0 0.0
    %124 = vmatprep.subr.mxu0 0.0
    %125 = vmatpush1.msra.mxu0 0.0
    %126 = vmatprep.subr.mxu0 0.0
    %127 = vmatpush1.msra.mxu0 0.0
    %128 = vmatprep.subr.mxu0 0.0
    %129 = vmatpush1.msra.mxu0 0.0
    %130 = vmatprep.subr.mxu0 0.0
    %131 = vmatpush1.msra.mxu0 0.0
    %132 = vmatprep.subr.mxu0 0.0
    %133 = vmatpush1.msra.mxu0 0.0
    %134 = vmatprep.subr.mxu0 0.0
    %135 = vmatpush1.msra.mxu0 0.0
    %136 = vmatprep.subr.mxu0 0.0
    %137 = vmatpush1.msra.mxu0 0.0
    %138 = vmatprep.mubr.f32.mxu0 0.0
    %139 = vmatmul.mubr.f32.gmra.mrb[0].mxu0 %v63
    %v140 = vpop.f32.mrb[0].mxu0
    %v141 = vadd.f32 %v60, %v140
    %v142 = vpop.f32.mrb[0].mxu0
    %143 = vmatprep.mubr.f32.mxu0 0.0
    %144 = vmatmul.mubr.f32.gmra.mrb[0].mxu0 %v66
    %v145 = vpop.f32.mrb[0].mxu0
    %v146 = vadd.f32 %v60, %v145
    %v147 = vpop.f32.mrb[0].mxu0
    %148 = vmatprep.mubr.f32.mxu0 0.0
    %149 = vmatmul.mubr.f32.gmra.mrb[0].mxu0 %v69
    %v150 = vpop.f32.mrb[0].mxu0
    %v151 = vadd.f32 %v60, %v150
    %v152 = vpop.f32.mrb[0].mxu0
    %153 = vmatprep.mubr.f32.mxu0 0.0
    %154 = vmatmul.mubr.f32.gmra.mrb[0].mxu0 %v72
    %v155 = vpop.f32.mrb[0].mxu0
    %v156 = vadd.f32 %v60, %v155
    %v157 = vpop.f32.mrb[0].mxu0
    %158 = vdwg.mxu0
    %v159 = vlaneseq
    %v160 = vshrl.u32 %v159, 7
    %v161 = vsub.s32 1, %v160
    %v162 = vrot.slane %v55, %v161
    %v164 = vsel %vm61, %v41, 0
    %v167 = vsel %vm61, %v42, 0
    %169 = vmatprep.subr.mxu0 0.0
    %170 = vmatpush1.msra.mxu0 %v47
    %171 = vmatprep.subr.mxu0 0.0
    %172 = vmatpush1.msra.mxu0 %v48
    %173 = vmatprep.subr.mxu0 0.0
    %174 = vmatpush1.msra.mxu0 %v49
    %175 = vmatprep.subr.mxu0 0.0
    %176 = vmatpush1.msra.mxu0 %v50
    %177 = vmatprep.subr.mxu0 0.0
    %178 = vmatpush1.msra.mxu0 0.0
    %179 = vmatprep.subr.mxu0 0.0
    %180 = vmatpush1.msra.mxu0 0.0
    %181 = vmatprep.subr.mxu0 0.0
    %182 = vmatpush1.msra.mxu0 0.0
    %183 = vmatprep.subr.mxu0 0.0
    %184 = vmatpush1.msra.mxu0 0.0
    %185 = vmatprep.subr.mxu0 0.0
    %186 = vmatpush1.msra.mxu0 0.0
    %187 = vmatprep.subr.mxu0 0.0
    %188 = vmatpush1.msra.mxu0 0.0
    %189 = vmatprep.subr.mxu0 0.0
    %190 = vmatpush1.msra.mxu0 0.0
    %191 = vmatprep.subr.mxu0 0.0
    %192 = vmatpush1.msra.mxu0 0.0
    %193 = vmatprep.subr.mxu0 0.0
    %194 = vmatpush1.msra.mxu0 0.0
    %195 = vmatprep.subr.mxu0 0.0
    %196 = vmatpush1.msra.mxu0 0.0
    %197 = vmatprep.subr.mxu0 0.0
    %198 = vmatpush1.msra.mxu0 0.0
    %199 = vmatprep.subr.mxu0 0.0
    %200 = vmatpush1.msra.mxu0 0.0
    %201 = vmatprep.subr.mxu0 0.0
    %202 = vmatpush1.msra.mxu0 0.0
    %203 = vmatprep.subr.mxu0 0.0
    %204 = vmatpush1.msra.mxu0 0.0
    %205 = vmatprep.subr.mxu0 0.0
    %206 = vmatpush1.msra.mxu0 0.0
    %207 = vmatprep.subr.mxu0 0.0
    %208 = vmatpush1.msra.mxu0 0.0
    %209 = vmatprep.subr.mxu0 0.0
    %210 = vmatpush1.msra.mxu0 0.0
    %211 = vmatprep.subr.mxu0 0.0
    %212 = vmatpush1.msra.mxu0 0.0
    %213 = vmatprep.subr.mxu0 0.0
    %214 = vmatpush1.msra.mxu0 0.0
    %215 = vmatprep.subr.mxu0 0.0
    %216 = vmatpush1.msra.mxu0 0.0
    %217 = vmatprep.subr.mxu0 0.0
    %218 = vmatpush1.msra.mxu0 0.0
    %219 = vmatprep.subr.mxu0 0.0
    %220 = vmatpush1.msra.mxu0 0.0
    %221 = vmatprep.subr.mxu0 0.0
    %222 = vmatpush1.msra.mxu0 0.0
    %223 = vmatprep.subr.mxu0 0.0
    %224 = vmatpush1.msra.mxu0 0.0
    %225 = vmatprep.subr.mxu0 0.0
    %226 = vmatpush1.msra.mxu0 0.0
    %227 = vmatprep.subr.mxu0 0.0
    %228 = vmatpush1.msra.mxu0 0.0
    %229 = vmatprep.subr.mxu0 0.0
    %230 = vmatpush1.msra.mxu0 0.0
    %231 = vmatprep.subr.mxu0 0.0
    %232 = vmatpush1.msra.mxu0 0.0
    %233 = vmatprep.mubr.f32.mxu0 0.0
    %234 = vmatmul.mubr.f32.gmra.mrb[0].mxu0 %v164
    %v235 = vpop.f32.mrb[0].mxu0
    %v236 = vadd.f32 %v162, %v235
    %v237 = vpop.f32.mrb[0].mxu0
    %238 = vmatprep.mubr.f32.mxu0 0.0
    %239 = vmatmul.mubr.f32.gmra.mrb[0].mxu0 %v167
    %v240 = vpop.f32.mrb[0].mxu0
    %v241 = vadd.f32 %v162, %v240
    %v242 = vpop.f32.mrb[0].mxu0
    %243 = vdwg.mxu0
    %v244 = vlaneseq
    %v245 = vshrl.u32 %v244, 7
    %v246 = vlaneseq
    %v247 = vand.u32 %v246, 127
    %vm248 = vcmp.lt.s32.totalorder %v247, %v245
    %v249 = vsel %vm248, 1, 0
    %v250 = vcvt.s32.f32 %v249
    %vm251 = vcmp.eq.f32.partialorder %v250, 0.0
    %vm252 = vcmp.le.s32.totalorder %v245, %v247
    %v253 = vsel %vm252, 1, 0
    %v254 = vcvt.s32.f32 %v253
    %v255 = vsub.s32 %v247, %v245
    %vm256 = vcmp.lt.s32.totalorder %v255, 0
    %v257 = vsub.s32 0, %v255
    %v258 = vsel %vm256, %v257, %v255
    %v259 = vcvt.s32.f32 %v258
    %vm260 = vcmp.eq.s32.totalorder %v245, 0
    %vm261 = vcmask 64512
    %v263 = vsel %vm261, %v141, 0
    %v266 = vsel %vm261, %v151, 0
    %268 = vmatprep.subr.mxu0 0.0
    %269 = vmatpush1.xpose.msra.mxu0 %v266
    %270 = vmatprep.subr.mxu0 0.0
    %271 = vmatpush1.xpose.msra.mxu0 0.0
    %272 = vmatprep.subr.mxu0 0.0
    %273 = vmatpush1.xpose.msra.mxu0 0.0
    %274 = vmatprep.subr.mxu0 0.0
    %275 = vmatpush1.xpose.msra.mxu0 0.0
    %276 = vmatprep.subr.mxu0 0.0
    %277 = vmatpush1.xpose.msra.mxu0 0.0
    %278 = vmatprep.subr.mxu0 0.0
    %279 = vmatpush1.xpose.msra.mxu0 0.0
    %280 = vmatprep.subr.mxu0 0.0
    %281 = vmatpush1.xpose.msra.mxu0 0.0
    %282 = vmatprep.subr.mxu0 0.0
    %283 = vmatpush1.xpose.msra.mxu0 0.0
    %284 = vmatprep.subr.mxu0 0.0
    %285 = vmatpush1.xpose.msra.mxu0 0.0
    %286 = vmatprep.subr.mxu0 0.0
    %287 = vmatpush1.xpose.msra.mxu0 0.0
    %288 = vmatprep.subr.mxu0 0.0
    %289 = vmatpush1.xpose.msra.mxu0 0.0
    %290 = vmatprep.subr.mxu0 0.0
    %291 = vmatpush1.xpose.msra.mxu0 0.0
    %292 = vmatprep.subr.mxu0 0.0
    %293 = vmatpush1.xpose.msra.mxu0 0.0
    %294 = vmatprep.subr.mxu0 0.0
    %295 = vmatpush1.xpose.msra.mxu0 0.0
    %296 = vmatprep.subr.mxu0 0.0
    %297 = vmatpush1.xpose.msra.mxu0 0.0
    %298 = vmatprep.subr.mxu0 0.0
    %299 = vmatpush1.xpose.msra.mxu0 0.0
    %300 = vmatprep.subr.mxu0 0.0
    %301 = vmatpush1.xpose.msra.mxu0 0.0
    %302 = vmatprep.subr.mxu0 0.0
    %303 = vmatpush1.xpose.msra.mxu0 0.0
    %304 = vmatprep.subr.mxu0 0.0
    %305 = vmatpush1.xpose.msra.mxu0 0.0
    %306 = vmatprep.subr.mxu0 0.0
    %307 = vmatpush1.xpose.msra.mxu0 0.0
    %308 = vmatprep.subr.mxu0 0.0
    %309 = vmatpush1.xpose.msra.mxu0 0.0
    %310 = vmatprep.subr.mxu0 0.0
    %311 = vmatpush1.xpose.msra.mxu0 0.0
    %312 = vmatprep.subr.mxu0 0.0
    %313 = vmatpush1.xpose.msra.mxu0 0.0
    %314 = vmatprep.subr.mxu0 0.0
    %315 = vmatpush1.xpose.msra.mxu0 0.0
    %316 = vmatprep.subr.mxu0 0.0
    %317 = vmatpush1.xpose.msra.mxu0 0.0
    %318 = vmatprep.subr.mxu0 0.0
    %319 = vmatpush1.xpose.msra.mxu0 0.0
    %320 = vmatprep.subr.mxu0 0.0
    %321 = vmatpush1.xpose.msra.mxu0 0.0
    %322 = vmatprep.subr.mxu0 0.0
    %323 = vmatpush1.xpose.msra.mxu0 0.0
    %324 = vmatprep.subr.mxu0 0.0
    %325 = vmatpush1.xpose.msra.mxu0 0.0
    %326 = vmatprep.subr.mxu0 0.0
    %327 = vmatpush1.xpose.msra.mxu0 0.0
    %328 = vmatprep.subr.mxu0 0.0
    %329 = vmatpush1.xpose.msra.mxu0 0.0
    %330 = vmatprep.subr.mxu0 0.0
    %331 = vmatpush1.xpose.msra.mxu0 0.0
    %332 = vmatprep.mubr.f32.mxu0 0.0
    %333 = vmatmul.mubr.f32.gmra.mrb[0].mxu0 %v263
    %v334 = vpop.f32.mrb[0].mxu0
    %v335 = vadd.f32 0.0, %v334
    %v336 = vpop.f32.mrb[0].mxu0
    %337 = vdwg.mxu0
    %v338 = vmul.f32 %v335, 0.35355338
    %v339 = vsel %vm251, -1e+32, %v338
    %v340 = vsel %vm261, %v339, -inf
    %341 = vmax.xlane.f32.xlu0 %v340
    %v342 = vpop.xlane.xlu0 %341
    %v343 = vsub.f32 %v339, %v342
    %v344 = vmul.f32 %v343, 1.442695
    %v345 = vpow.pop %v344
    %v346 = vsel %vm261, %v345, 0.0
    %347 = vadd.xlane.f32.xlu0 %v346
    %v348 = vpop.xlane.xlu0 %347
    %v349 = vrcp.pop %v348
    %v350 = vmul.f32 %v345, %v349
    %v351 = vmul.f32 %v350, %v250
    %v353 = vsel %vm261, %v351, 0
    %355 = vmatprep.subr.mxu0 0.0
    %356 = vmatpush1.msra.mxu0 %v254
    %357 = vmatprep.subr.mxu0 0.0
    %358 = vmatpush1.msra.mxu0 0.0
    %359 = vmatprep.subr.mxu0 0.0
    %360 = vmatpush1.msra.mxu0 0.0
    %361 = vmatprep.subr.mxu0 0.0
    %362 = vmatpush1.msra.mxu0 0.0
    %363 = vmatprep.subr.mxu0 0.0
    %364 = vmatpush1.msra.mxu0 0.0
    %365 = vmatprep.subr.mxu0 0.0
    %366 = vmatpush1.msra.mxu0 0.0
    %367 = vmatprep.subr.mxu0 0.0
    %368 = vmatpush1.msra.mxu0 0.0
    %369 = vmatprep.subr.mxu0 0.0
    %370 = vmatpush1.msra.mxu0 0.0
    %371 = vmatprep.subr.mxu0 0.0
    %372 = vmatpush1.msra.mxu0 0.0
    %373 = vmatprep.subr.mxu0 0.0
    %374 = vmatpush1.msra.mxu0 0.0
    %375 = vmatprep.subr.mxu0 0.0
    %376 = vmatpush1.msra.mxu0 0.0
    %377 = vmatprep.subr.mxu0 0.0
    %378 = vmatpush1.msra.mxu0 0.0
    %379 = vmatprep.subr.mxu0 0.0
    %380 = vmatpush1.msra.mxu0 0.0
    %381 = vmatprep.subr.mxu0 0.0
    %382 = vmatpush1.msra.mxu0 0.0
    %383 = vmatprep.subr.mxu0 0.0
    %384 = vmatpush1.msra.mxu0 0.0
    %385 = vmatprep.subr.mxu0 0.0
    %386 = vmatpush1.msra.mxu0 0.0
    %387 = vmatprep.subr.mxu0 0.0
    %388 = vmatpush1.msra.mxu0 0.0
    %389 = vmatprep.subr.mxu0 0.0
    %390 = vmatpush1.msra.mxu0 0.0
    %391 = vmatprep.subr.mxu0 0.0
    %392 = vmatpush1.msra.mxu0 0.0
    %393 = vmatprep.subr.mxu0 0.0
    %394 = vmatpush1.msra.mxu0 0.0
    %395 = vmatprep.subr.mxu0 0.0
    %396 = vmatpush1.msra.mxu0 0.0
    %397 = vmatprep.subr.mxu0 0.0
    %398 = vmatpush1.msra.mxu0 0.0
    %399 = vmatprep.subr.mxu0 0.0
    %400 = vmatpush1.msra.mxu0 0.0
    %401 = vmatprep.subr.mxu0 0.0
    %402 = vmatpush1.msra.mxu0 0.0
    %403 = vmatprep.subr.mxu0 0.0
    %404 = vmatpush1.msra.mxu0 0.0
    %405 = vmatprep.subr.mxu0 0.0
    %406 = vmatpush1.msra.mxu0 0.0
    %407 = vmatprep.subr.mxu0 0.0
    %408 = vmatpush1.msra.mxu0 0.0
    %409 = vmatprep.subr.mxu0 0.0
    %410 = vmatpush1.msra.mxu0 0.0
    %411 = vmatprep.subr.mxu0 0.0
    %412 = vmatpush1.msra.mxu0 0.0
    %413 = vmatprep.subr.mxu0 0.0
    %414 = vmatpush1.msra.mxu0 0.0
    %415 = vmatprep.subr.mxu0 0.0
    %416 = vmatpush1.msra.mxu0 0.0
    %417 = vmatprep.subr.mxu0 0.0
    %418 = vmatpush1.msra.mxu0 0.0
    %419 = vmatprep.mubr.f32.mxu0 0.0
    %420 = vmatmul.mubr.f32.gmra.mrb[0].mxu0 %v353
    %v421 = vpop.f32.mrb[0].mxu0
    %v422 = vadd.f32 0.0, %v421
    %v423 = vpop.f32.mrb[0].mxu0
    %424 = vdwg.mxu0
    %v425 = vsel %vm261, %v351, 0.0
    %426 = vadd.xlane.f32.xlu0 %v425
    %v427 = vpop.xlane.xlu0 %426
    %v428 = vsub.f32 %v427, %v422
    %v429 = vmul.f32 %v428, %v259
    %v430 = vmax.f32 %v429, 0.0
    %v431 = vrsqrt.pop %v430
    %v432 = vmul.f32 %v430, %v431
    %vm433 = vcmp.eq.f32.partialorder %v430, inf
    %v434 = vsel %vm433, %v430, %v432
    %vm435 = vcmp.eq.f32.partialorder %v430, 0.0
    %v436 = vand.u32 %v430, 2147483648
    %v437 = vsel %vm435, %v436, %v434
    %s438 = sld [smem:[#allocation2]]
    %v439 = vstv %s438
    %v440 = vmul.f32 %v437, %v439
    %v441 = vmul.f32 %v440, 1.442695
    %v442 = vpow.pop %v441
    %v443 = vmax.f32 %v442, 1e-05
    %v444 = vmin.f32 %v443, 100000.0
    %v445 = vmul.f32 %v338, %v444
    %v446 = vsel %vm261, %v445, -inf
    %447 = vmax.xlane.f32.xlu0 %v446
    %v448 = vpop.xlane.xlu0 %447
    %v449 = vsub.f32 %v445, %v448
    %v450 = vmul.f32 %v449, 1.442695
    %v451 = vpow.pop %v450
    %v452 = vsel %vm261, %v451, 0.0
    %453 = vadd.xlane.f32.xlu0 %v452
    %v454 = vpop.xlane.xlu0 %453
    %v455 = vrcp.pop %v454
    %v456 = vmul.f32 %v451, %v455
    %v457 = vsel %vm260, 0.0, %v456
    %v459 = vsel %vm261, %v457, 0
    %461 = vmatprep.subr.mxu0 0.0
    %462 = vmatpush1.msra.mxu0 %v236
    %463 = vmatprep.subr.mxu0 0.0
    %464 = vmatpush1.msra.mxu0 0.0
    %465 = vmatprep.subr.mxu0 0.0
    %466 = vmatpush1.msra.mxu0 0.0
    %467 = vmatprep.subr.mxu0 0.0
    %468 = vmatpush1.msra.mxu0 0.0
    %469 = vmatprep.subr.mxu0 0.0
    %470 = vmatpush1.msra.mxu0 0.0
    %471 = vmatprep.subr.mxu0 0.0
    %472 = vmatpush1.msra.mxu0 0.0
    %473 = vmatprep.subr.mxu0 0.0
    %474 = vmatpush1.msra.mxu0 0.0
    %475 = vmatprep.subr.mxu0 0.0
    %476 = vmatpush1.msra.mxu0 0.0
    %477 = vmatprep.subr.mxu0 0.0
    %478 = vmatpush1.msra.mxu0 0.0
    %479 = vmatprep.subr.mxu0 0.0
    %480 = vmatpush1.msra.mxu0 0.0
    %481 = vmatprep.subr.mxu0 0.0
    %482 = vmatpush1.msra.mxu0 0.0
    %483 = vmatprep.subr.mxu0 0.0
    %484 = vmatpush1.msra.mxu0 0.0
    %485 = vmatprep.subr.mxu0 0.0
    %486 = vmatpush1.msra.mxu0 0.0
    %487 = vmatprep.subr.mxu0 0.0
    %488 = vmatpush1.msra.mxu0 0.0
    %489 = vmatprep.subr.mxu0 0.0
    %490 = vmatpush1.msra.mxu0 0.0
    %491 = vmatprep.subr.mxu0 0.0
    %492 = vmatpush1.msra.mxu0 0.0
    %493 = vmatprep.subr.mxu0 0.0
    %494 = vmatpush1.msra.mxu0 0.0
    %495 = vmatprep.subr.mxu0 0.0
    %496 = vmatpush1.msra.mxu0 0.0
    %497 = vmatprep.subr.mxu0 0.0
    %498 = vmatpush1.msra.mxu0 0.0
    %499 = vmatprep.subr.mxu0 0.0
    %500 = vmatpush1.msra.mxu0 0.0
    %501 = vmatprep.subr.mxu0 0.0
    %502 = vmatpush1.msra.mxu0 0.0
    %503 = vmatprep.subr.mxu0 0.0
    %504 = vmatpush1.msra.mxu0 0.0
    %505 = vmatprep.subr.mxu0 0.0
    %506 = vmatpush1.msra.mxu0 0.0
    %507 = vmatprep.subr.mxu0 0.0
    %508 = vmatpush1.msra.mxu0 0.0
    %509 = vmatprep.subr.mxu0 0.0
    %510 = vmatpush1.msra.mxu0 0.0
    %511 = vmatprep.subr.mxu0 0.0
    %512 = vmatpush1.msra.mxu0 0.0
    %513 = vmatprep.subr.mxu0 0.0
    %514 = vmatpush1.msra.mxu0 0.0
    %515 = vmatprep.subr.mxu0 0.0
    %516 = vmatpush1.msra.mxu0 0.0
    %517 = vmatprep.subr.mxu0 0.0
    %518 = vmatpush1.msra.mxu0 0.0
    %519 = vmatprep.subr.mxu0 0.0
    %520 = vmatpush1.msra.mxu0 0.0
    %521 = vmatprep.subr.mxu0 0.0
    %522 = vmatpush1.msra.mxu0 0.0
    %523 = vmatprep.subr.mxu0 0.0
    %524 = vmatpush1.msra.mxu0 0.0
    %525 = vmatprep.mubr.f32.mxu0 0.0
    %526 = vmatmul.mubr.f32.gmra.mrb[0].mxu0 %v459
    %v527 = vpop.f32.mrb[0].mxu0
    %v528 = vadd.f32 0.0, %v527
    %v529 = vpop.f32.mrb[0].mxu0
    %530 = vdwg.mxu0
    %531 = vrot.lane.b32.xlu0 %v141, 120
    %v532 = vpop.permute.xlu0 %531
    %533 = vrot.lane.b32.xlu0 %v151, 120
    %v534 = vpop.permute.xlu0 %533
    %v535 = vsel %vm261, %v532, 0
    %v537 = vsel %vm261, %v534, 0
    %539 = vmatprep.subr.mxu0 0.0
    %540 = vmatpush1.xpose.msra.mxu0 %v537
    %541 = vmatprep.subr.mxu0 0.0
    %542 = vmatpush1.xpose.msra.mxu0 0.0
    %543 = vmatprep.subr.mxu0 0.0
    %544 = vmatpush1.xpose.msra.mxu0 0.0
    %545 = vmatprep.subr.mxu0 0.0
    %546 = vmatpush1.xpose.msra.mxu0 0.0
    %547 = vmatprep.subr.mxu0 0.0
    %548 = vmatpush1.xpose.msra.mxu0 0.0
    %549 = vmatprep.subr.mxu0 0.0
    %550 = vmatpush1.xpose.msra.mxu0 0.0
    %551 = vmatprep.subr.mxu0 0.0
    %552 = vmatpush1.xpose.msra.mxu0 0.0
    %553 = vmatprep.subr.mxu0 0.0
    %554 = vmatpush1.xpose.msra.mxu0 0.0
    %555 = vmatprep.subr.mxu0 0.0
    %556 = vmatpush1.xpose.msra.mxu0 0.0
    %557 = vmatprep.subr.mxu0 0.0
    %558 = vmatpush1.xpose.msra.mxu0 0.0
    %559 = vmatprep.subr.mxu0 0.0
    %560 = vmatpush1.xpose.msra.mxu0 0.0
    %561 = vmatprep.subr.mxu0 0.0
    %562 = vmatpush1.xpose.msra.mxu0 0.0
    %563 = vmatprep.subr.mxu0 0.0
    %564 = vmatpush1.xpose.msra.mxu0 0.0
    %565 = vmatprep.subr.mxu0 0.0
    %566 = vmatpush1.xpose.msra.mxu0 0.0
    %567 = vmatprep.subr.mxu0 0.0
    %568 = vmatpush1.xpose.msra.mxu0 0.0
    %569 = vmatprep.subr.mxu0 0.0
    %570 = vmatpush1.xpose.msra.mxu0 0.0
    %571 = vmatprep.subr.mxu0 0.0
    %572 = vmatpush1.xpose.msra.mxu0 0.0
    %573 = vmatprep.subr.mxu0 0.0
    %574 = vmatpush1.xpose.msra.mxu0 0.0
    %575 = vmatprep.subr.mxu0 0.0
    %576 = vmatpush1.xpose.msra.mxu0 0.0
    %577 = vmatprep.subr.mxu0 0.0
    %578 = vmatpush1.xpose.msra.mxu0 0.0
    %579 = vmatprep.subr.mxu0 0.0
    %580 = vmatpush1.xpose.msra.mxu0 0.0
    %581 = vmatprep.subr.mxu0 0.0
    %582 = vmatpush1.xpose.msra.mxu0 0.0
    %583 = vmatprep.subr.mxu0 0.0
    %584 = vmatpush1.xpose.msra.mxu0 0.0
    %585 = vmatprep.subr.mxu0 0.0
    %586 = vmatpush1.xpose.msra.mxu0 0.0
    %587 = vmatprep.subr.mxu0 0.0
    %588 = vmatpush1.xpose.msra.mxu0 0.0
    %589 = vmatprep.subr.mxu0 0.0
    %590 = vmatpush1.xpose.msra.mxu0 0.0
    %591 = vmatprep.subr.mxu0 0.0
    %592 = vmatpush1.xpose.msra.mxu0 0.0
    %593 = vmatprep.subr.mxu0 0.0
    %594 = vmatpush1.xpose.msra.mxu0 0.0
    %595 = vmatprep.subr.mxu0 0.0
    %596 = vmatpush1.xpose.msra.mxu0 0.0
    %597 = vmatprep.subr.mxu0 0.0
    %598 = vmatpush1.xpose.msra.mxu0 0.0
    %599 = vmatprep.subr.mxu0 0.0
    %600 = vmatpush1.xpose.msra.mxu0 0.0
    %601 = vmatprep.subr.mxu0 0.0
    %602 = vmatpush1.xpose.msra.mxu0 0.0
    %603 = vmatprep.mubr.f32.mxu0 0.0
    %604 = vmatmul.mubr.f32.gmra.mrb[0].mxu0 %v535
    %v605 = vpop.f32.mrb[0].mxu0
    %v606 = vadd.f32 0.0, %v605
    %v607 = vpop.f32.mrb[0].mxu0
    %608 = vdwg.mxu0
    %v609 = vmul.f32 %v606, 0.35355338
    %v610 = vsel %vm251, -1e+32, %v609
    %v611 = vsel %vm261, %v610, -inf
    %612 = vmax.xlane.f32.xlu0 %v611
    %v613 = vpop.xlane.xlu0 %612
    %v614 = vsub.f32 %v610, %v613
    %v615 = vmul.f32 %v614, 1.442695
    %v616 = vpow.pop %v615
    %v617 = vsel %vm261, %v616, 0.0
    %618 = vadd.xlane.f32.xlu0 %v617
    %v619 = vpop.xlane.xlu0 %618
    %v620 = vrcp.pop %v619
    %v621 = vmul.f32 %v616, %v620
    %v622 = vmul.f32 %v621, %v250
    %v624 = vsel %vm261, %v622, 0
    %626 = vmatprep.subr.mxu0 0.0
    %627 = vmatpush1.msra.mxu0 %v254
    %628 = vmatprep.subr.mxu0 0.0
    %629 = vmatpush1.msra.mxu0 0.0
    %630 = vmatprep.subr.mxu0 0.0
    %631 = vmatpush1.msra.mxu0 0.0
    %632 = vmatprep.subr.mxu0 0.0
    %633 = vmatpush1.msra.mxu0 0.0
    %634 = vmatprep.subr.mxu0 0.0
    %635 = vmatpush1.msra.mxu0 0.0
    %636 = vmatprep.subr.mxu0 0.0
    %637 = vmatpush1.msra.mxu0 0.0
    %638 = vmatprep.subr.mxu0 0.0
    %639 = vmatpush1.msra.mxu0 0.0
    %640 = vmatprep.subr.mxu0 0.0
    %641 = vmatpush1.msra.mxu0 0.0
    %642 = vmatprep.subr.mxu0 0.0
    %643 = vmatpush1.msra.mxu0 0.0
    %644 = vmatprep.subr.mxu0 0.0
    %645 = vmatpush1.msra.mxu0 0.0
    %646 = vmatprep.subr.mxu0 0.0
    %647 = vmatpush1.msra.mxu0 0.0
    %648 = vmatprep.subr.mxu0 0.0
    %649 = vmatpush1.msra.mxu0 0.0
    %650 = vmatprep.subr.mxu0 0.0
    %651 = vmatpush1.msra.mxu0 0.0
    %652 = vmatprep.subr.mxu0 0.0
    %653 = vmatpush1.msra.mxu0 0.0
    %654 = vmatprep.subr.mxu0 0.0
    %655 = vmatpush1.msra.mxu0 0.0
    %656 = vmatprep.subr.mxu0 0.0
    %657 = vmatpush1.msra.mxu0 0.0
    %658 = vmatprep.subr.mxu0 0.0
    %659 = vmatpush1.msra.mxu0 0.0
    %660 = vmatprep.subr.mxu0 0.0
    %661 = vmatpush1.msra.mxu0 0.0
    %662 = vmatprep.subr.mxu0 0.0
    %663 = vmatpush1.msra.mxu0 0.0
    %664 = vmatprep.subr.mxu0 0.0
    %665 = vmatpush1.msra.mxu0 0.0
    %666 = vmatprep.subr.mxu0 0.0
    %667 = vmatpush1.msra.mxu0 0.0
    %668 = vmatprep.subr.mxu0 0.0
    %669 = vmatpush1.msra.mxu0 0.0
    %670 = vmatprep.subr.mxu0 0.0
    %671 = vmatpush1.msra.mxu0 0.0
    %672 = vmatprep.subr.mxu0 0.0
    %673 = vmatpush1.msra.mxu0 0.0
    %674 = vmatprep.subr.mxu0 0.0
    %675 = vmatpush1.msra.mxu0 0.0
    %676 = vmatprep.subr.mxu0 0.0
    %677 = vmatpush1.msra.mxu0 0.0
    %678 = vmatprep.subr.mxu0 0.0
    %679 = vmatpush1.msra.mxu0 0.0
    %680 = vmatprep.subr.mxu0 0.0
    %681 = vmatpush1.msra.mxu0 0.0
    %682 = vmatprep.subr.mxu0 0.0
    %683 = vmatpush1.msra.mxu0 0.0
    %684 = vmatprep.subr.mxu0 0.0
    %685 = vmatpush1.msra.mxu0 0.0
    %686 = vmatprep.subr.mxu0 0.0
    %687 = vmatpush1.msra.mxu0 0.0
    %688 = vmatprep.subr.mxu0 0.0
    %689 = vmatpush1.msra.mxu0 0.0
    %690 = vmatprep.mubr.f32.mxu0 0.0
    %691 = vmatmul.mubr.f32.gmra.mrb[0].mxu0 %v624
    %v692 = vpop.f32.mrb[0].mxu0
    %v693 = vadd.f32 0.0, %v692
    %v694 = vpop.f32.mrb[0].mxu0
    %695 = vdwg.mxu0
    %v696 = vsel %vm261, %v622, 0.0
    %697 = vadd.xlane.f32.xlu0 %v696
    %v698 = vpop.xlane.xlu0 %697
    %v699 = vsub.f32 %v698, %v693
    %v700 = vmul.f32 %v699, %v259
    %v701 = vmax.f32 %v700, 0.0
    %v702 = vrsqrt.pop %v701
    %v703 = vmul.f32 %v701, %v702
    %vm704 = vcmp.eq.f32.partialorder %v701, inf
    %v705 = vsel %vm704, %v701, %v703
    %vm706 = vcmp.eq.f32.partialorder %v701, 0.0
    %v707 = vand.u32 %v701, 2147483648
    %v708 = vsel %vm706, %v707, %v705
    %s709 = sld [smem:[#allocation2 + $0x1]]
    %v710 = vstv %s709
    %v711 = vmul.f32 %v708, %v710
    %v712 = vmul.f32 %v711, 1.442695
    %v713 = vpow.pop %v712
    %v714 = vmax.f32 %v713, 1e-05
    %v715 = vmin.f32 %v714, 100000.0
    %v716 = vmul.f32 %v609, %v715
    %v717 = vsel %vm261, %v716, -inf
    %718 = vmax.xlane.f32.xlu0 %v717
    %v719 = vpop.xlane.xlu0 %718
    %v720 = vsub.f32 %v716, %v719
    %v721 = vmul.f32 %v720, 1.442695
    %v722 = vpow.pop %v721
    %v723 = vsel %vm261, %v722, 0.0
    %724 = vadd.xlane.f32.xlu0 %v723
    %v725 = vpop.xlane.xlu0 %724
    %v726 = vrcp.pop %v725
    %v727 = vmul.f32 %v722, %v726
    %v728 = vsel %vm260, 0.0, %v727
    %730 = vrot.lane.b32.xlu0 %v236, 120
    %v731 = vpop.permute.xlu0 %730
    %v734 = vsel %vm261, %v728, 0
    %736 = vmatprep.subr.mxu0 0.0
    %737 = vmatpush1.msra.mxu0 %v731
    %738 = vmatprep.subr.mxu0 0.0
    %739 = vmatpush1.msra.mxu0 0.0
    %740 = vmatprep.subr.mxu0 0.0
    %741 = vmatpush1.msra.mxu0 0.0
    %742 = vmatprep.subr.mxu0 0.0
    %743 = vmatpush1.msra.mxu0 0.0
    %744 = vmatprep.subr.mxu0 0.0
    %745 = vmatpush1.msra.mxu0 0.0
    %746 = vmatprep.subr.mxu0 0.0
    %747 = vmatpush1.msra.mxu0 0.0
    %748 = vmatprep.subr.mxu0 0.0
    %749 = vmatpush1.msra.mxu0 0.0
    %750 = vmatprep.subr.mxu0 0.0
    %751 = vmatpush1.msra.mxu0 0.0
    %752 = vmatprep.subr.mxu0 0.0
    %753 = vmatpush1.msra.mxu0 0.0
    %754 = vmatprep.subr.mxu0 0.0
    %755 = vmatpush1.msra.mxu0 0.0
    %756 = vmatprep.subr.mxu0 0.0
    %757 = vmatpush1.msra.mxu0 0.0
    %758 = vmatprep.subr.mxu0 0.0
    %759 = vmatpush1.msra.mxu0 0.0
    %760 = vmatprep.subr.mxu0 0.0
    %761 = vmatpush1.msra.mxu0 0.0
    %762 = vmatprep.subr.mxu0 0.0
    %763 = vmatpush1.msra.mxu0 0.0
    %764 = vmatprep.subr.mxu0 0.0
    %765 = vmatpush1.msra.mxu0 0.0
    %766 = vmatprep.subr.mxu0 0.0
    %767 = vmatpush1.msra.mxu0 0.0
    %768 = vmatprep.subr.mxu0 0.0
    %769 = vmatpush1.msra.mxu0 0.0
    %770 = vmatprep.subr.mxu0 0.0
    %771 = vmatpush1.msra.mxu0 0.0
    %772 = vmatprep.subr.mxu0 0.0
    %773 = vmatpush1.msra.mxu0 0.0
    %774 = vmatprep.subr.mxu0 0.0
    %775 = vmatpush1.msra.mxu0 0.0
    %776 = vmatprep.subr.mxu0 0.0
    %777 = vmatpush1.msra.mxu0 0.0
    %778 = vmatprep.subr.mxu0 0.0
    %779 = vmatpush1.msra.mxu0 0.0
    %780 = vmatprep.subr.mxu0 0.0
    %781 = vmatpush1.msra.mxu0 0.0
    %782 = vmatprep.subr.mxu0 0.0
    %783 = vmatpush1.msra.mxu0 0.0
    %784 = vmatprep.subr.mxu0 0.0
    %785 = vmatpush1.msra.mxu0 0.0
    %786 = vmatprep.subr.mxu0 0.0
    %787 = vmatpush1.msra.mxu0 0.0
    %788 = vmatprep.subr.mxu0 0.0
    %789 = vmatpush1.msra.mxu0 0.0
    %790 = vmatprep.subr.mxu0 0.0
    %791 = vmatpush1.msra.mxu0 0.0
    %792 = vmatprep.subr.mxu0 0.0
    %793 = vmatpush1.msra.mxu0 0.0
    %794 = vmatprep.subr.mxu0 0.0
    %795 = vmatpush1.msra.mxu0 0.0
    %796 = vmatprep.subr.mxu0 0.0
    %797 = vmatpush1.msra.mxu0 0.0
    %798 = vmatprep.subr.mxu0 0.0
    %799 = vmatpush1.msra.mxu0 0.0
    %800 = vmatprep.mubr.f32.mxu0 0.0
    %801 = vmatmul.mubr.f32.gmra.mrb[0].mxu0 %v734
    %v802 = vpop.f32.mrb[0].mxu0
    %v803 = vadd.f32 0.0, %v802
    %v804 = vpop.f32.mrb[0].mxu0
    %805 = vdwg.mxu0
    %806 = vrot.lane.b32.xlu0 %v141, 112
    %v807 = vpop.permute.xlu0 %806
    %808 = vrot.lane.b32.xlu0 %v151, 112
    %v809 = vpop.permute.xlu0 %808
    %v810 = vsel %vm261, %v807, 0
    %v812 = vsel %vm261, %v809, 0
    %814 = vmatprep.subr.mxu0 0.0
    %815 = vmatpush1.xpose.msra.mxu0 %v812
    %816 = vmatprep.subr.mxu0 0.0
    %817 = vmatpush1.xpose.msra.mxu0 0.0
    %818 = vmatprep.subr.mxu0 0.0
    %819 = vmatpush1.xpose.msra.mxu0 0.0
    %820 = vmatprep.subr.mxu0 0.0
    %821 = vmatpush1.xpose.msra.mxu0 0.0
    %822 = vmatprep.subr.mxu0 0.0
    %823 = vmatpush1.xpose.msra.mxu0 0.0
    %824 = vmatprep.subr.mxu0 0.0
    %825 = vmatpush1.xpose.msra.mxu0 0.0
    %826 = vmatprep.subr.mxu0 0.0
    %827 = vmatpush1.xpose.msra.mxu0 0.0
    %828 = vmatprep.subr.mxu0 0.0
    %829 = vmatpush1.xpose.msra.mxu0 0.0
    %830 = vmatprep.subr.mxu0 0.0
    %831 = vmatpush1.xpose.msra.mxu0 0.0
    %832 = vmatprep.subr.mxu0 0.0
    %833 = vmatpush1.xpose.msra.mxu0 0.0
    %834 = vmatprep.subr.mxu0 0.0
    %835 = vmatpush1.xpose.msra.mxu0 0.0
    %836 = vmatprep.subr.mxu0 0.0
    %837 = vmatpush1.xpose.msra.mxu0 0.0
    %838 = vmatprep.subr.mxu0 0.0
    %839 = vmatpush1.xpose.msra.mxu0 0.0
    %840 = vmatprep.subr.mxu0 0.0
    %841 = vmatpush1.xpose.msra.mxu0 0.0
    %842 = vmatprep.subr.mxu0 0.0
    %843 = vmatpush1.xpose.msra.mxu0 0.0
    %844 = vmatprep.subr.mxu0 0.0
    %845 = vmatpush1.xpose.msra.mxu0 0.0
    %846 = vmatprep.subr.mxu0 0.0
    %847 = vmatpush1.xpose.msra.mxu0 0.0
    %848 = vmatprep.subr.mxu0 0.0
    %849 = vmatpush1.xpose.msra.mxu0 0.0
    %850 = vmatprep.subr.mxu0 0.0
    %851 = vmatpush1.xpose.msra.mxu0 0.0
    %852 = vmatprep.subr.mxu0 0.0
    %853 = vmatpush1.xpose.msra.mxu0 0.0
    %854 = vmatprep.subr.mxu0 0.0
    %855 = vmatpush1.xpose.msra.mxu0 0.0
    %856 = vmatprep.subr.mxu0 0.0
    %857 = vmatpush1.xpose.msra.mxu0 0.0
    %858 = vmatprep.subr.mxu0 0.0
    %859 = vmatpush1.xpose.msra.mxu0 0.0
    %860 = vmatprep.subr.mxu0 0.0
    %861 = vmatpush1.xpose.msra.mxu0 0.0
    %862 = vmatprep.subr.mxu0 0.0
    %863 = vmatpush1.xpose.msra.mxu0 0.0
    %864 = vmatprep.subr.mxu0 0.0
    %865 = vmatpush1.xpose.msra.mxu0 0.0
    %866 = vmatprep.subr.mxu0 0.0
    %867 = vmatpush1.xpose.msra.mxu0 0.0
    %868 = vmatprep.subr.mxu0 0.0
    %869 = vmatpush1.xpose.msra.mxu0 0.0
    %870 = vmatprep.subr.mxu0 0.0
    %871 = vmatpush1.xpose.msra.mxu0 0.0
    %872 = vmatprep.subr.mxu0 0.0
    %873 = vmatpush1.xpose.msra.mxu0 0.0
    %874 = vmatprep.subr.mxu0 0.0
    %875 = vmatpush1.xpose.msra.mxu0 0.0
    %876 = vmatprep.subr.mxu0 0.0
    %877 = vmatpush1.xpose.msra.mxu0 0.0
    %878 = vmatprep.mubr.f32.mxu0 0.0
    %879 = vmatmul.mubr.f32.gmra.mrb[0].mxu0 %v810
    %v880 = vpop.f32.mrb[0].mxu0
    %v881 = vadd.f32 0.0, %v880
    %v882 = vpop.f32.mrb[0].mxu0
    %883 = vdwg.mxu0
    %v884 = vmul.f32 %v881, 0.35355338
    %v885 = vsel %vm251, -1e+32, %v884
    %v886 = vsel %vm261, %v885, -inf
    %887 = vmax.xlane.f32.xlu0 %v886
    %v888 = vpop.xlane.xlu0 %887
    %v889 = vsub.f32 %v885, %v888
    %v890 = vmul.f32 %v889, 1.442695
    %v891 = vpow.pop %v890
    %v892 = vsel %vm261, %v891, 0.0
    %893 = vadd.xlane.f32.xlu0 %v892
    %v894 = vpop.xlane.xlu0 %893
    %v895 = vrcp.pop %v894
    %v896 = vmul.f32 %v891, %v895
    %v897 = vmul.f32 %v896, %v250
    %v899 = vsel %vm261, %v897, 0
    %901 = vmatprep.subr.mxu0 0.0
    %902 = vmatpush1.msra.mxu0 %v254
    %903 = vmatprep.subr.mxu0 0.0
    %904 = vmatpush1.msra.mxu0 0.0
    %905 = vmatprep.subr.mxu0 0.0
    %906 = vmatpush1.msra.mxu0 0.0
    %907 = vmatprep.subr.mxu0 0.0
    %908 = vmatpush1.msra.mxu0 0.0
    %909 = vmatprep.subr.mxu0 0.0
    %910 = vmatpush1.msra.mxu0 0.0
    %911 = vmatprep.subr.mxu0 0.0
    %912 = vmatpush1.msra.mxu0 0.0
    %913 = vmatprep.subr.mxu0 0.0
    %914 = vmatpush1.msra.mxu0 0.0
    %915 = vmatprep.subr.mxu0 0.0
    %916 = vmatpush1.msra.mxu0 0.0
    %917 = vmatprep.subr.mxu0 0.0
    %918 = vmatpush1.msra.mxu0 0.0
    %919 = vmatprep.subr.mxu0 0.0
    %920 = vmatpush1.msra.mxu0 0.0
    %921 = vmatprep.subr.mxu0 0.0
    %922 = vmatpush1.msra.mxu0 0.0
    %923 = vmatprep.subr.mxu0 0.0
    %924 = vmatpush1.msra.mxu0 0.0
    %925 = vmatprep.subr.mxu0 0.0
    %926 = vmatpush1.msra.mxu0 0.0
    %927 = vmatprep.subr.mxu0 0.0
    %928 = vmatpush1.msra.mxu0 0.0
    %929 = vmatprep.subr.mxu0 0.0
    %930 = vmatpush1.msra.mxu0 0.0
    %931 = vmatprep.subr.mxu0 0.0
    %932 = vmatpush1.msra.mxu0 0.0
    %933 = vmatprep.subr.mxu0 0.0
    %934 = vmatpush1.msra.mxu0 0.0
    %935 = vmatprep.subr.mxu0 0.0
    %936 = vmatpush1.msra.mxu0 0.0
    %937 = vmatprep.subr.mxu0 0.0
    %938 = vmatpush1.msra.mxu0 0.0
    %939 = vmatprep.subr.mxu0 0.0
    %940 = vmatpush1.msra.mxu0 0.0
    %941 = vmatprep.subr.mxu0 0.0
    %942 = vmatpush1.msra.mxu0 0.0
    %943 = vmatprep.subr.mxu0 0.0
    %944 = vmatpush1.msra.mxu0 0.0
    %945 = vmatprep.subr.mxu0 0.0
    %946 = vmatpush1.msra.mxu0 0.0
    %947 = vmatprep.subr.mxu0 0.0
    %948 = vmatpush1.msra.mxu0 0.0
    %949 = vmatprep.subr.mxu0 0.0
    %950 = vmatpush1.msra.mxu0 0.0
    %951 = vmatprep.subr.mxu0 0.0
    %952 = vmatpush1.msra.mxu0 0.0
    %953 = vmatprep.subr.mxu0 0.0
    %954 = vmatpush1.msra.mxu0 0.0
    %955 = vmatprep.subr.mxu0 0.0
    %956 = vmatpush1.msra.mxu0 0.0
    %957 = vmatprep.subr.mxu0 0.0
    %958 = vmatpush1.msra.mxu0 0.0
    %959 = vmatprep.subr.mxu0 0.0
    %960 = vmatpush1.msra.mxu0 0.0
    %961 = vmatprep.subr.mxu0 0.0
    %962 = vmatpush1.msra.mxu0 0.0
    %963 = vmatprep.subr.mxu0 0.0
    %964 = vmatpush1.msra.mxu0 0.0
    %965 = vmatprep.mubr.f32.mxu0 0.0
    %966 = vmatmul.mubr.f32.gmra.mrb[0].mxu0 %v899
    %v967 = vpop.f32.mrb[0].mxu0
    %v968 = vadd.f32 0.0, %v967
    %v969 = vpop.f32.mrb[0].mxu0
    %970 = vdwg.mxu0
    %v971 = vsel %vm261, %v897, 0.0
    %972 = vadd.xlane.f32.xlu0 %v971
    %v973 = vpop.xlane.xlu0 %972
    %v974 = vsub.f32 %v973, %v968
    %v975 = vmul.f32 %v974, %v259
    %v976 = vmax.f32 %v975, 0.0
    %v977 = vrsqrt.pop %v976
    %v978 = vmul.f32 %v976, %v977
    %vm979 = vcmp.eq.f32.partialorder %v976, inf
    %v980 = vsel %vm979, %v976, %v978
    %vm981 = vcmp.eq.f32.partialorder %v976, 0.0
    %v982 = vand.u32 %v976, 2147483648
    %v983 = vsel %vm981, %v982, %v980
    %s984 = sld [smem:[#allocation2 + $0x2]]
    %v985 = vstv %s984
    %v986 = vmul.f32 %v983, %v985
    %v987 = vmul.f32 %v986, 1.442695
    %v988 = vpow.pop %v987
    %v989 = vmax.f32 %v988, 1e-05
    %v990 = vmin.f32 %v989, 100000.0
    %v991 = vmul.f32 %v884, %v990
    %v992 = vsel %vm261, %v991, -inf
    %993 = vmax.xlane.f32.xlu0 %v992
    %v994 = vpop.xlane.xlu0 %993
    %v995 = vsub.f32 %v991, %v994
    %v996 = vmul.f32 %v995, 1.442695
    %v997 = vpow.pop %v996
    %v998 = vsel %vm261, %v997, 0.0
    %999 = vadd.xlane.f32.xlu0 %v998
    %v1000 = vpop.xlane.xlu0 %999
    %v1001 = vrcp.pop %v1000
    %v1002 = vmul.f32 %v997, %v1001
    %v1003 = vsel %vm260, 0.0, %v1002
    %1004 = vrot.lane.b32.xlu0 %v236, 112
    %v1005 = vpop.permute.xlu0 %1004
    %v1008 = vsel %vm261, %v1003, 0
    %1010 = vmatprep.subr.mxu0 0.0
    %1011 = vmatpush1.msra.mxu0 %v1005
    %1012 = vmatprep.subr.mxu0 0.0
    %1013 = vmatpush1.msra.mxu0 0.0
    %1014 = vmatprep.subr.mxu0 0.0
    %1015 = vmatpush1.msra.mxu0 0.0
    %1016 = vmatprep.subr.mxu0 0.0
    %1017 = vmatpush1.msra.mxu0 0.0
    %1018 = vmatprep.subr.mxu0 0.0
    %1019 = vmatpush1.msra.mxu0 0.0
    %1020 = vmatprep.subr.mxu0 0.0
    %1021 = vmatpush1.msra.mxu0 0.0
    %1022 = vmatprep.subr.mxu0 0.0
    %1023 = vmatpush1.msra.mxu0 0.0
    %1024 = vmatprep.subr.mxu0 0.0
    %1025 = vmatpush1.msra.mxu0 0.0
    %1026 = vmatprep.subr.mxu0 0.0
    %1027 = vmatpush1.msra.mxu0 0.0
    %1028 = vmatprep.subr.mxu0 0.0
    %1029 = vmatpush1.msra.mxu0 0.0
    %1030 = vmatprep.subr.mxu0 0.0
    %1031 = vmatpush1.msra.mxu0 0.0
    %1032 = vmatprep.subr.mxu0 0.0
    %1033 = vmatpush1.msra.mxu0 0.0
    %1034 = vmatprep.subr.mxu0 0.0
    %1035 = vmatpush1.msra.mxu0 0.0
    %1036 = vmatprep.subr.mxu0 0.0
    %1037 = vmatpush1.msra.mxu0 0.0
    %1038 = vmatprep.subr.mxu0 0.0
    %1039 = vmatpush1.msra.mxu0 0.0
    %1040 = vmatprep.subr.mxu0 0.0
    %1041 = vmatpush1.msra.mxu0 0.0
    %1042 = vmatprep.subr.mxu0 0.0
    %1043 = vmatpush1.msra.mxu0 0.0
    %1044 = vmatprep.subr.mxu0 0.0
    %1045 = vmatpush1.msra.mxu0 0.0
    %1046 = vmatprep.subr.mxu0 0.0
    %1047 = vmatpush1.msra.mxu0 0.0
    %1048 = vmatprep.subr.mxu0 0.0
    %1049 = vmatpush1.msra.mxu0 0.0
    %1050 = vmatprep.subr.mxu0 0.0
    %1051 = vmatpush1.msra.mxu0 0.0
    %1052 = vmatprep.subr.mxu0 0.0
    %1053 = vmatpush1.msra.mxu0 0.0
    %1054 = vmatprep.subr.mxu0 0.0
    %1055 = vmatpush1.msra.mxu0 0.0
    %1056 = vmatprep.subr.mxu0 0.0
    %1057 = vmatpush1.msra.mxu0 0.0
    %1058 = vmatprep.subr.mxu0 0.0
    %1059 = vmatpush1.msra.mxu0 0.0
    %1060 = vmatprep.subr.mxu0 0.0
    %1061 = vmatpush1.msra.mxu0 0.0
    %1062 = vmatprep.subr.mxu0 0.0
    %1063 = vmatpush1.msra.mxu0 0.0
    %1064 = vmatprep.subr.mxu0 0.0
    %1065 = vmatpush1.msra.mxu0 0.0
    %1066 = vmatprep.subr.mxu0 0.0
    %1067 = vmatpush1.msra.mxu0 0.0
    %1068 = vmatprep.subr.mxu0 0.0
    %1069 = vmatpush1.msra.mxu0 0.0
    %1070 = vmatprep.subr.mxu0 0.0
    %1071 = vmatpush1.msra.mxu0 0.0
    %1072 = vmatprep.subr.mxu0 0.0
    %1073 = vmatpush1.msra.mxu0 0.0
    %1074 = vmatprep.mubr.f32.mxu0 0.0
    %1075 = vmatmul.mubr.f32.gmra.mrb[0].mxu0 %v1008
    %v1076 = vpop.f32.mrb[0].mxu0
    %v1077 = vadd.f32 0.0, %v1076
    %v1078 = vpop.f32.mrb[0].mxu0
    %1079 = vdwg.mxu0
    %1080 = vrot.lane.b32.xlu0 %v141, 104
    %v1081 = vpop.permute.xlu0 %1080
    %1082 = vrot.lane.b32.xlu0 %v151, 104
    %v1083 = vpop.permute.xlu0 %1082
    %v1084 = vsel %vm261, %v1081, 0
    %v1086 = vsel %vm261, %v1083, 0
    %1088 = vmatprep.subr.mxu0 0.0
    %1089 = vmatpush1.xpose.msra.mxu0 %v1086
    %1090 = vmatprep.subr.mxu0 0.0
    %1091 = vmatpush1.xpose.msra.mxu0 0.0
    %1092 = vmatprep.subr.mxu0 0.0
    %1093 = vmatpush1.xpose.msra.mxu0 0.0
    %1094 = vmatprep.subr.mxu0 0.0
    %1095 = vmatpush1.xpose.msra.mxu0 0.0
    %1096 = vmatprep.subr.mxu0 0.0
    %1097 = vmatpush1.xpose.msra.mxu0 0.0
    %1098 = vmatprep.subr.mxu0 0.0
    %1099 = vmatpush1.xpose.msra.mxu0 0.0
    %1100 = vmatprep.subr.mxu0 0.0
    %1101 = vmatpush1.xpose.msra.mxu0 0.0
    %1102 = vmatprep.subr.mxu0 0.0
    %1103 = vmatpush1.xpose.msra.mxu0 0.0
    %1104 = vmatprep.subr.mxu0 0.0
    %1105 = vmatpush1.xpose.msra.mxu0 0.0
    %1106 = vmatprep.subr.mxu0 0.0
    %1107 = vmatpush1.xpose.msra.mxu0 0.0
    %1108 = vmatprep.subr.mxu0 0.0
    %1109 = vmatpush1.xpose.msra.mxu0 0.0
    %1110 = vmatprep.subr.mxu0 0.0
    %1111 = vmatpush1.xpose.msra.mxu0 0.0
    %1112 = vmatprep.subr.mxu0 0.0
    %1113 = vmatpush1.xpose.msra.mxu0 0.0
    %1114 = vmatprep.subr.mxu0 0.0
    %1115 = vmatpush1.xpose.msra.mxu0 0.0
    %1116 = vmatprep.subr.mxu0 0.0
    %1117 = vmatpush1.xpose.msra.mxu0 0.0
    %1118 = vmatprep.subr.mxu0 0.0
    %1119 = vmatpush1.xpose.msra.mxu0 0.0
    %1120 = vmatprep.subr.mxu0 0.0
    %1121 = vmatpush1.xpose.msra.mxu0 0.0
    %1122 = vmatprep.subr.mxu0 0.0
    %1123 = vmatpush1.xpose.msra.mxu0 0.0
    %1124 = vmatprep.subr.mxu0 0.0
    %1125 = vmatpush1.xpose.msra.mxu0 0.0
    %1126 = vmatprep.subr.mxu0 0.0
    %1127 = vmatpush1.xpose.msra.mxu0 0.0
    %1128 = vmatprep.subr.mxu0 0.0
    %1129 = vmatpush1.xpose.msra.mxu0 0.0
    %1130 = vmatprep.subr.mxu0 0.0
    %1131 = vmatpush1.xpose.msra.mxu0 0.0
    %1132 = vmatprep.subr.mxu0 0.0
    %1133 = vmatpush1.xpose.msra.mxu0 0.0
    %1134 = vmatprep.subr.mxu0 0.0
    %1135 = vmatpush1.xpose.msra.mxu0 0.0
    %1136 = vmatprep.subr.mxu0 0.0
    %1137 = vmatpush1.xpose.msra.mxu0 0.0
    %1138 = vmatprep.subr.mxu0 0.0
    %1139 = vmatpush1.xpose.msra.mxu0 0.0
    %1140 = vmatprep.subr.mxu0 0.0
    %1141 = vmatpush1.xpose.msra.mxu0 0.0
    %1142 = vmatprep.subr.mxu0 0.0
    %1143 = vmatpush1.xpose.msra.mxu0 0.0
    %1144 = vmatprep.subr.mxu0 0.0
    %1145 = vmatpush1.xpose.msra.mxu0 0.0
    %1146 = vmatprep.subr.mxu0 0.0
    %1147 = vmatpush1.xpose.msra.mxu0 0.0
    %1148 = vmatprep.subr.mxu0 0.0
    %1149 = vmatpush1.xpose.msra.mxu0 0.0
    %1150 = vmatprep.subr.mxu0 0.0
    %1151 = vmatpush1.xpose.msra.mxu0 0.0
    %1152 = vmatprep.mubr.f32.mxu0 0.0
    %1153 = vmatmul.mubr.f32.gmra.mrb[0].mxu0 %v1084
    %v1154 = vpop.f32.mrb[0].mxu0
    %v1155 = vadd.f32 0.0, %v1154
    %v1156 = vpop.f32.mrb[0].mxu0
    %1157 = vdwg.mxu0
    %v1158 = vmul.f32 %v1155, 0.35355338
    %v1159 = vsel %vm251, -1e+32, %v1158
    %v1160 = vsel %vm261, %v1159, -inf
    %1161 = vmax.xlane.f32.xlu0 %v1160
    %v1162 = vpop.xlane.xlu0 %1161
    %v1163 = vsub.f32 %v1159, %v1162
    %v1164 = vmul.f32 %v1163, 1.442695
    %v1165 = vpow.pop %v1164
    %v1166 = vsel %vm261, %v1165, 0.0
    %1167 = vadd.xlane.f32.xlu0 %v1166
    %v1168 = vpop.xlane.xlu0 %1167
    %v1169 = vrcp.pop %v1168
    %v1170 = vmul.f32 %v1165, %v1169
    %v1171 = vmul.f32 %v1170, %v250
    %v1173 = vsel %vm261, %v1171, 0
    %1175 = vmatprep.subr.mxu0 0.0
    %1176 = vmatpush1.msra.mxu0 %v254
    %1177 = vmatprep.subr.mxu0 0.0
    %1178 = vmatpush1.msra.mxu0 0.0
    %1179 = vmatprep.subr.mxu0 0.0
    %1180 = vmatpush1.msra.mxu0 0.0
    %1181 = vmatprep.subr.mxu0 0.0
    %1182 = vmatpush1.msra.mxu0 0.0
    %1183 = vmatprep.subr.mxu0 0.0
    %1184 = vmatpush1.msra.mxu0 0.0
    %1185 = vmatprep.subr.mxu0 0.0
    %1186 = vmatpush1.msra.mxu0 0.0
    %1187 = vmatprep.subr.mxu0 0.0
    %1188 = vmatpush1.msra.mxu0 0.0
    %1189 = vmatprep.subr.mxu0 0.0
    %1190 = vmatpush1.msra.mxu0 0.0
    %1191 = vmatprep.subr.mxu0 0.0
    %1192 = vmatpush1.msra.mxu0 0.0
    %1193 = vmatprep.subr.mxu0 0.0
    %1194 = vmatpush1.msra.mxu0 0.0
    %1195 = vmatprep.subr.mxu0 0.0
    %1196 = vmatpush1.msra.mxu0 0.0
    %1197 = vmatprep.subr.mxu0 0.0
    %1198 = vmatpush1.msra.mxu0 0.0
    %1199 = vmatprep.subr.mxu0 0.0
    %1200 = vmatpush1.msra.mxu0 0.0
    %1201 = vmatprep.subr.mxu0 0.0
    %1202 = vmatpush1.msra.mxu0 0.0
    %1203 = vmatprep.subr.mxu0 0.0
    %1204 = vmatpush1.msra.mxu0 0.0
    %1205 = vmatprep.subr.mxu0 0.0
    %1206 = vmatpush1.msra.mxu0 0.0
    %1207 = vmatprep.subr.mxu0 0.0
    %1208 = vmatpush1.msra.mxu0 0.0
    %1209 = vmatprep.subr.mxu0 0.0
    %1210 = vmatpush1.msra.mxu0 0.0
    %1211 = vmatprep.subr.mxu0 0.0
    %1212 = vmatpush1.msra.mxu0 0.0
    %1213 = vmatprep.subr.mxu0 0.0
    %1214 = vmatpush1.msra.mxu0 0.0
    %1215 = vmatprep.subr.mxu0 0.0
    %1216 = vmatpush1.msra.mxu0 0.0
    %1217 = vmatprep.subr.mxu0 0.0
    %1218 = vmatpush1.msra.mxu0 0.0
    %1219 = vmatprep.subr.mxu0 0.0
    %1220 = vmatpush1.msra.mxu0 0.0
    %1221 = vmatprep.subr.mxu0 0.0
    %1222 = vmatpush1.msra.mxu0 0.0
    %1223 = vmatprep.subr.mxu0 0.0
    %1224 = vmatpush1.msra.mxu0 0.0
    %1225 = vmatprep.subr.mxu0 0.0
    %1226 = vmatpush1.msra.mxu0 0.0
    %1227 = vmatprep.subr.mxu0 0.0
    %1228 = vmatpush1.msra.mxu0 0.0
    %1229 = vmatprep.subr.mxu0 0.0
    %1230 = vmatpush1.msra.mxu0 0.0
    %1231 = vmatprep.subr.mxu0 0.0
    %1232 = vmatpush1.msra.mxu0 0.0
    %1233 = vmatprep.subr.mxu0 0.0
    %1234 = vmatpush1.msra.mxu0 0.0
    %1235 = vmatprep.subr.mxu0 0.0
    %1236 = vmatpush1.msra.mxu0 0.0
    %1237 = vmatprep.subr.mxu0 0.0
    %1238 = vmatpush1.msra.mxu0 0.0
    %1239 = vmatprep.mubr.f32.mxu0 0.0
    %1240 = vmatmul.mubr.f32.gmra.mrb[0].mxu0 %v1173
    %v1241 = vpop.f32.mrb[0].mxu0
    %v1242 = vadd.f32 0.0, %v1241
    %v1243 = vpop.f32.mrb[0].mxu0
    %1244 = vdwg.mxu0
    %v1245 = vsel %vm261, %v1171, 0.0
    %1246 = vadd.xlane.f32.xlu0 %v1245
    %v1247 = vpop.xlane.xlu0 %1246
    %v1248 = vsub.f32 %v1247, %v1242
    %v1249 = vmul.f32 %v1248, %v259
    %v1250 = vmax.f32 %v1249, 0.0
    %v1251 = vrsqrt.pop %v1250
    %v1252 = vmul.f32 %v1250, %v1251
    %vm1253 = vcmp.eq.f32.partialorder %v1250, inf
    %v1254 = vsel %vm1253, %v1250, %v1252
    %vm1255 = vcmp.eq.f32.partialorder %v1250, 0.0
    %v1256 = vand.u32 %v1250, 2147483648
    %v1257 = vsel %vm1255, %v1256, %v1254
    %s1258 = sld [smem:[#allocation2 + $0x3]]
    %v1259 = vstv %s1258
    %v1260 = vmul.f32 %v1257, %v1259
    %v1261 = vmul.f32 %v1260, 1.442695
    %v1262 = vpow.pop %v1261
    %v1263 = vmax.f32 %v1262, 1e-05
    %v1264 = vmin.f32 %v1263, 100000.0
    %v1265 = vmul.f32 %v1158, %v1264
    %v1266 = vsel %vm261, %v1265, -inf
    %1267 = vmax.xlane.f32.xlu0 %v1266
    %v1268 = vpop.xlane.xlu0 %1267
    %v1269 = vsub.f32 %v1265, %v1268
    %v1270 = vmul.f32 %v1269, 1.442695
    %v1271 = vpow.pop %v1270
    %v1272 = vsel %vm261, %v1271, 0.0
    %1273 = vadd.xlane.f32.xlu0 %v1272
    %v1274 = vpop.xlane.xlu0 %1273
    %v1275 = vrcp.pop %v1274
    %v1276 = vmul.f32 %v1271, %v1275
    %v1277 = vsel %vm260, 0.0, %v1276
    %1278 = vrot.lane.b32.xlu0 %v236, 104
    %v1279 = vpop.permute.xlu0 %1278
    %v1282 = vsel %vm261, %v1277, 0
    %1284 = vmatprep.subr.mxu0 0.0
    %1285 = vmatpush1.msra.mxu0 %v1279
    %1286 = vmatprep.subr.mxu0 0.0
    %1287 = vmatpush1.msra.mxu0 0.0
    %1288 = vmatprep.subr.mxu0 0.0
    %1289 = vmatpush1.msra.mxu0 0.0
    %1290 = vmatprep.subr.mxu0 0.0
    %1291 = vmatpush1.msra.mxu0 0.0
    %1292 = vmatprep.subr.mxu0 0.0
    %1293 = vmatpush1.msra.mxu0 0.0
    %1294 = vmatprep.subr.mxu0 0.0
    %1295 = vmatpush1.msra.mxu0 0.0
    %1296 = vmatprep.subr.mxu0 0.0
    %1297 = vmatpush1.msra.mxu0 0.0
    %1298 = vmatprep.subr.mxu0 0.0
    %1299 = vmatpush1.msra.mxu0 0.0
    %1300 = vmatprep.subr.mxu0 0.0
    %1301 = vmatpush1.msra.mxu0 0.0
    %1302 = vmatprep.subr.mxu0 0.0
    %1303 = vmatpush1.msra.mxu0 0.0
    %1304 = vmatprep.subr.mxu0 0.0
    %1305 = vmatpush1.msra.mxu0 0.0
    %1306 = vmatprep.subr.mxu0 0.0
    %1307 = vmatpush1.msra.mxu0 0.0
    %1308 = vmatprep.subr.mxu0 0.0
    %1309 = vmatpush1.msra.mxu0 0.0
    %1310 = vmatprep.subr.mxu0 0.0
    %1311 = vmatpush1.msra.mxu0 0.0
    %1312 = vmatprep.subr.mxu0 0.0
    %1313 = vmatpush1.msra.mxu0 0.0
    %1314 = vmatprep.subr.mxu0 0.0
    %1315 = vmatpush1.msra.mxu0 0.0
    %1316 = vmatprep.subr.mxu0 0.0
    %1317 = vmatpush1.msra.mxu0 0.0
    %1318 = vmatprep.subr.mxu0 0.0
    %1319 = vmatpush1.msra.mxu0 0.0
    %1320 = vmatprep.subr.mxu0 0.0
    %1321 = vmatpush1.msra.mxu0 0.0
    %1322 = vmatprep.subr.mxu0 0.0
    %1323 = vmatpush1.msra.mxu0 0.0
    %1324 = vmatprep.subr.mxu0 0.0
    %1325 = vmatpush1.msra.mxu0 0.0
    %1326 = vmatprep.subr.mxu0 0.0
    %1327 = vmatpush1.msra.mxu0 0.0
    %1328 = vmatprep.subr.mxu0 0.0
    %1329 = vmatpush1.msra.mxu0 0.0
    %1330 = vmatprep.subr.mxu0 0.0
    %1331 = vmatpush1.msra.mxu0 0.0
    %1332 = vmatprep.subr.mxu0 0.0
    %1333 = vmatpush1.msra.mxu0 0.0
    %1334 = vmatprep.subr.mxu0 0.0
    %1335 = vmatpush1.msra.mxu0 0.0
    %1336 = vmatprep.subr.mxu0 0.0
    %1337 = vmatpush1.msra.mxu0 0.0
    %1338 = vmatprep.subr.mxu0 0.0
    %1339 = vmatpush1.msra.mxu0 0.0
    %1340 = vmatprep.subr.mxu0 0.0
    %1341 = vmatpush1.msra.mxu0 0.0
    %1342 = vmatprep.subr.mxu0 0.0
    %1343 = vmatpush1.msra.mxu0 0.0
    %1344 = vmatprep.subr.mxu0 0.0
    %1345 = vmatpush1.msra.mxu0 0.0
    %1346 = vmatprep.subr.mxu0 0.0
    %1347 = vmatpush1.msra.mxu0 0.0
    %1348 = vmatprep.mubr.f32.mxu0 0.0
    %1349 = vmatmul.mubr.f32.gmra.mrb[0].mxu0 %v1282
    %v1350 = vpop.f32.mrb[0].mxu0
    %v1351 = vadd.f32 0.0, %v1350
    %v1352 = vpop.f32.mrb[0].mxu0
    %1353 = vdwg.mxu0
    %1355 = vrot.lane.b32.xlu0 %v803, 8
    %v1356 = vpop.permute.xlu0 %1355
    %1359 = vrot.lane.b32.xlu0 %v1077, 16
    %v1360 = vpop.permute.xlu0 %1359
    %1363 = vrot.lane.b32.xlu0 %v1351, 24
    %v1364 = vpop.permute.xlu0 %1363
    %v1366 = vsel %vm261, %v528, %v1356
    %vm1367 = vcmask 130048
    %v1368 = vsel %vm1367, %v1366, %v1360
    %vm1369 = vcmask 195584
    %v1370 = vsel %vm1369, %v1368, %v1364
    %v1372 = vsel %vm261, %v146, 0
    %v1375 = vsel %vm261, %v156, 0
    %1377 = vmatprep.subr.mxu0 0.0
    %1378 = vmatpush1.xpose.msra.mxu0 %v1375
    %1379 = vmatprep.subr.mxu0 0.0
    %1380 = vmatpush1.xpose.msra.mxu0 0.0
    %1381 = vmatprep.subr.mxu0 0.0
    %1382 = vmatpush1.xpose.msra.mxu0 0.0
    %1383 = vmatprep.subr.mxu0 0.0
    %1384 = vmatpush1.xpose.msra.mxu0 0.0
    %1385 = vmatprep.subr.mxu0 0.0
    %1386 = vmatpush1.xpose.msra.mxu0 0.0
    %1387 = vmatprep.subr.mxu0 0.0
    %1388 = vmatpush1.xpose.msra.mxu0 0.0
    %1389 = vmatprep.subr.mxu0 0.0
    %1390 = vmatpush1.xpose.msra.mxu0 0.0
    %1391 = vmatprep.subr.mxu0 0.0
    %1392 = vmatpush1.xpose.msra.mxu0 0.0
    %1393 = vmatprep.subr.mxu0 0.0
    %1394 = vmatpush1.xpose.msra.mxu0 0.0
    %1395 = vmatprep.subr.mxu0 0.0
    %1396 = vmatpush1.xpose.msra.mxu0 0.0
    %1397 = vmatprep.subr.mxu0 0.0
    %1398 = vmatpush1.xpose.msra.mxu0 0.0
    %1399 = vmatprep.subr.mxu0 0.0
    %1400 = vmatpush1.xpose.msra.mxu0 0.0
    %1401 = vmatprep.subr.mxu0 0.0
    %1402 = vmatpush1.xpose.msra.mxu0 0.0
    %1403 = vmatprep.subr.mxu0 0.0
    %1404 = vmatpush1.xpose.msra.mxu0 0.0
    %1405 = vmatprep.subr.mxu0 0.0
    %1406 = vmatpush1.xpose.msra.mxu0 0.0
    %1407 = vmatprep.subr.mxu0 0.0
    %1408 = vmatpush1.xpose.msra.mxu0 0.0
    %1409 = vmatprep.subr.mxu0 0.0
    %1410 = vmatpush1.xpose.msra.mxu0 0.0
    %1411 = vmatprep.subr.mxu0 0.0
    %1412 = vmatpush1.xpose.msra.mxu0 0.0
    %1413 = vmatprep.subr.mxu0 0.0
    %1414 = vmatpush1.xpose.msra.mxu0 0.0
    %1415 = vmatprep.subr.mxu0 0.0
    %1416 = vmatpush1.xpose.msra.mxu0 0.0
    %1417 = vmatprep.subr.mxu0 0.0
    %1418 = vmatpush1.xpose.msra.mxu0 0.0
    %1419 = vmatprep.subr.mxu0 0.0
    %1420 = vmatpush1.xpose.msra.mxu0 0.0
    %1421 = vmatprep.subr.mxu0 0.0
    %1422 = vmatpush1.xpose.msra.mxu0 0.0
    %1423 = vmatprep.subr.mxu0 0.0
    %1424 = vmatpush1.xpose.msra.mxu0 0.0
    %1425 = vmatprep.subr.mxu0 0.0
    %1426 = vmatpush1.xpose.msra.mxu0 0.0
    %1427 = vmatprep.subr.mxu0 0.0
    %1428 = vmatpush1.xpose.msra.mxu0 0.0
    %1429 = vmatprep.subr.mxu0 0.0
    %1430 = vmatpush1.xpose.msra.mxu0 0.0
    %1431 = vmatprep.subr.mxu0 0.0
    %1432 = vmatpush1.xpose.msra.mxu0 0.0
    %1433 = vmatprep.subr.mxu0 0.0
    %1434 = vmatpush1.xpose.msra.mxu0 0.0
    %1435 = vmatprep.subr.mxu0 0.0
    %1436 = vmatpush1.xpose.msra.mxu0 0.0
    %1437 = vmatprep.subr.mxu0 0.0
    %1438 = vmatpush1.xpose.msra.mxu0 0.0
    %1439 = vmatprep.subr.mxu0 0.0
    %1440 = vmatpush1.xpose.msra.mxu0 0.0
    %1441 = vmatprep.mubr.f32.mxu0 0.0
    %1442 = vmatmul.mubr.f32.gmra.mrb[0].mxu0 %v1372
    %v1443 = vpop.f32.mrb[0].mxu0
    %v1444 = vadd.f32 0.0, %v1443
    %v1445 = vpop.f32.mrb[0].mxu0
    %1446 = vdwg.mxu0
    %v1447 = vmul.f32 %v1444, 0.35355338
    %v1448 = vsel %vm251, -1e+32, %v1447
    %v1449 = vsel %vm261, %v1448, -inf
    %1450 = vmax.xlane.f32.xlu0 %v1449
    %v1451 = vpop.xlane.xlu0 %1450
    %v1452 = vsub.f32 %v1448, %v1451
    %v1453 = vmul.f32 %v1452, 1.442695
    %v1454 = vpow.pop %v1453
    %v1455 = vsel %vm261, %v1454, 0.0
    %1456 = vadd.xlane.f32.xlu0 %v1455
    %v1457 = vpop.xlane.xlu0 %1456
    %v1458 = vrcp.pop %v1457
    %v1459 = vmul.f32 %v1454, %v1458
    %v1460 = vmul.f32 %v1459, %v250
    %v1462 = vsel %vm261, %v1460, 0
    %1464 = vmatprep.subr.mxu0 0.0
    %1465 = vmatpush1.msra.mxu0 %v254
    %1466 = vmatprep.subr.mxu0 0.0
    %1467 = vmatpush1.msra.mxu0 0.0
    %1468 = vmatprep.subr.mxu0 0.0
    %1469 = vmatpush1.msra.mxu0 0.0
    %1470 = vmatprep.subr.mxu0 0.0
    %1471 = vmatpush1.msra.mxu0 0.0
    %1472 = vmatprep.subr.mxu0 0.0
    %1473 = vmatpush1.msra.mxu0 0.0
    %1474 = vmatprep.subr.mxu0 0.0
    %1475 = vmatpush1.msra.mxu0 0.0
    %1476 = vmatprep.subr.mxu0 0.0
    %1477 = vmatpush1.msra.mxu0 0.0
    %1478 = vmatprep.subr.mxu0 0.0
    %1479 = vmatpush1.msra.mxu0 0.0
    %1480 = vmatprep.subr.mxu0 0.0
    %1481 = vmatpush1.msra.mxu0 0.0
    %1482 = vmatprep.subr.mxu0 0.0
    %1483 = vmatpush1.msra.mxu0 0.0
    %1484 = vmatprep.subr.mxu0 0.0
    %1485 = vmatpush1.msra.mxu0 0.0
    %1486 = vmatprep.subr.mxu0 0.0
    %1487 = vmatpush1.msra.mxu0 0.0
    %1488 = vmatprep.subr.mxu0 0.0
    %1489 = vmatpush1.msra.mxu0 0.0
    %1490 = vmatprep.subr.mxu0 0.0
    %1491 = vmatpush1.msra.mxu0 0.0
    %1492 = vmatprep.subr.mxu0 0.0
    %1493 = vmatpush1.msra.mxu0 0.0
    %1494 = vmatprep.subr.mxu0 0.0
    %1495 = vmatpush1.msra.mxu0 0.0
    %1496 = vmatprep.subr.mxu0 0.0
    %1497 = vmatpush1.msra.mxu0 0.0
    %1498 = vmatprep.subr.mxu0 0.0
    %1499 = vmatpush1.msra.mxu0 0.0
    %1500 = vmatprep.subr.mxu0 0.0
    %1501 = vmatpush1.msra.mxu0 0.0
    %1502 = vmatprep.subr.mxu0 0.0
    %1503 = vmatpush1.msra.mxu0 0.0
    %1504 = vmatprep.subr.mxu0 0.0
    %1505 = vmatpush1.msra.mxu0 0.0
    %1506 = vmatprep.subr.mxu0 0.0
    %1507 = vmatpush1.msra.mxu0 0.0
    %1508 = vmatprep.subr.mxu0 0.0
    %1509 = vmatpush1.msra.mxu0 0.0
    %1510 = vmatprep.subr.mxu0 0.0
    %1511 = vmatpush1.msra.mxu0 0.0
    %1512 = vmatprep.subr.mxu0 0.0
    %1513 = vmatpush1.msra.mxu0 0.0
    %1514 = vmatprep.subr.mxu0 0.0
    %1515 = vmatpush1.msra.mxu0 0.0
    %1516 = vmatprep.subr.mxu0 0.0
    %1517 = vmatpush1.msra.mxu0 0.0
    %1518 = vmatprep.subr.mxu0 0.0
    %1519 = vmatpush1.msra.mxu0 0.0
    %1520 = vmatprep.subr.mxu0 0.0
    %1521 = vmatpush1.msra.mxu0 0.0
    %1522 = vmatprep.subr.mxu0 0.0
    %1523 = vmatpush1.msra.mxu0 0.0
    %1524 = vmatprep.subr.mxu0 0.0
    %1525 = vmatpush1.msra.mxu0 0.0
    %1526 = vmatprep.subr.mxu0 0.0
    %1527 = vmatpush1.msra.mxu0 0.0
    %1528 = vmatprep.mubr.f32.mxu0 0.0
    %1529 = vmatmul.mubr.f32.gmra.mrb[0].mxu0 %v1462
    %v1530 = vpop.f32.mrb[0].mxu0
    %v1531 = vadd.f32 0.0, %v1530
    %v1532 = vpop.f32.mrb[0].mxu0
    %1533 = vdwg.mxu0
    %v1534 = vsel %vm261, %v1460, 0.0
    %1535 = vadd.xlane.f32.xlu0 %v1534
    %v1536 = vpop.xlane.xlu0 %1535
    %v1537 = vsub.f32 %v1536, %v1531
    %v1538 = vmul.f32 %v1537, %v259
    %v1539 = vmax.f32 %v1538, 0.0
    %v1540 = vrsqrt.pop %v1539
    %v1541 = vmul.f32 %v1539, %v1540
    %vm1542 = vcmp.eq.f32.partialorder %v1539, inf
    %v1543 = vsel %vm1542, %v1539, %v1541
    %vm1544 = vcmp.eq.f32.partialorder %v1539, 0.0
    %v1545 = vand.u32 %v1539, 2147483648
    %v1546 = vsel %vm1544, %v1545, %v1543
    %v1547 = vmul.f32 %v1546, %v439
    %v1548 = vmul.f32 %v1547, 1.442695
    %v1549 = vpow.pop %v1548
    %v1550 = vmax.f32 %v1549, 1e-05
    %v1551 = vmin.f32 %v1550, 100000.0
    %v1552 = vmul.f32 %v1447, %v1551
    %v1553 = vsel %vm261, %v1552, -inf
    %1554 = vmax.xlane.f32.xlu0 %v1553
    %v1555 = vpop.xlane.xlu0 %1554
    %v1556 = vsub.f32 %v1552, %v1555
    %v1557 = vmul.f32 %v1556, 1.442695
    %v1558 = vpow.pop %v1557
    %v1559 = vsel %vm261, %v1558, 0.0
    %1560 = vadd.xlane.f32.xlu0 %v1559
    %v1561 = vpop.xlane.xlu0 %1560
    %v1562 = vrcp.pop %v1561
    %v1563 = vmul.f32 %v1558, %v1562
    %v1564 = vsel %vm260, 0.0, %v1563
    %v1566 = vsel %vm261, %v1564, 0
    %1568 = vmatprep.subr.mxu0 0.0
    %1569 = vmatpush1.msra.mxu0 %v241
    %1570 = vmatprep.subr.mxu0 0.0
    %1571 = vmatpush1.msra.mxu0 0.0
    %1572 = vmatprep.subr.mxu0 0.0
    %1573 = vmatpush1.msra.mxu0 0.0
    %1574 = vmatprep.subr.mxu0 0.0
    %1575 = vmatpush1.msra.mxu0 0.0
    %1576 = vmatprep.subr.mxu0 0.0
    %1577 = vmatpush1.msra.mxu0 0.0
    %1578 = vmatprep.subr.mxu0 0.0
    %1579 = vmatpush1.msra.mxu0 0.0
    %1580 = vmatprep.subr.mxu0 0.0
    %1581 = vmatpush1.msra.mxu0 0.0
    %1582 = vmatprep.subr.mxu0 0.0
    %1583 = vmatpush1.msra.mxu0 0.0
    %1584 = vmatprep.subr.mxu0 0.0
    %1585 = vmatpush1.msra.mxu0 0.0
    %1586 = vmatprep.subr.mxu0 0.0
    %1587 = vmatpush1.msra.mxu0 0.0
    %1588 = vmatprep.subr.mxu0 0.0
    %1589 = vmatpush1.msra.mxu0 0.0
    %1590 = vmatprep.subr.mxu0 0.0
    %1591 = vmatpush1.msra.mxu0 0.0
    %1592 = vmatprep.subr.mxu0 0.0
    %1593 = vmatpush1.msra.mxu0 0.0
    %1594 = vmatprep.subr.mxu0 0.0
    %1595 = vmatpush1.msra.mxu0 0.0
    %1596 = vmatprep.subr.mxu0 0.0
    %1597 = vmatpush1.msra.mxu0 0.0
    %1598 = vmatprep.subr.mxu0 0.0
    %1599 = vmatpush1.msra.mxu0 0.0
    %1600 = vmatprep.subr.mxu0 0.0
    %1601 = vmatpush1.msra.mxu0 0.0
    %1602 = vmatprep.subr.mxu0 0.0
    %1603 = vmatpush1.msra.mxu0 0.0
    %1604 = vmatprep.subr.mxu0 0.0
    %1605 = vmatpush1.msra.mxu0 0.0
    %1606 = vmatprep.subr.mxu0 0.0
    %1607 = vmatpush1.msra.mxu0 0.0
    %1608 = vmatprep.subr.mxu0 0.0
    %1609 = vmatpush1.msra.mxu0 0.0
    %1610 = vmatprep.subr.mxu0 0.0
    %1611 = vmatpush1.msra.mxu0 0.0
    %1612 = vmatprep.subr.mxu0 0.0
    %1613 = vmatpush1.msra.mxu0 0.0
    %1614 = vmatprep.subr.mxu0 0.0
    %1615 = vmatpush1.msra.mxu0 0.0
    %1616 = vmatprep.subr.mxu0 0.0
    %1617 = vmatpush1.msra.mxu0 0.0
    %1618 = vmatprep.subr.mxu0 0.0
    %1619 = vmatpush1.msra.mxu0 0.0
    %1620 = vmatprep.subr.mxu0 0.0
    %1621 = vmatpush1.msra.mxu0 0.0
    %1622 = vmatprep.subr.mxu0 0.0
    %1623 = vmatpush1.msra.mxu0 0.0
    %1624 = vmatprep.subr.mxu0 0.0
    %1625 = vmatpush1.msra.mxu0 0.0
    %1626 = vmatprep.subr.mxu0 0.0
    %1627 = vmatpush1.msra.mxu0 0.0
    %1628 = vmatprep.subr.mxu0 0.0
    %1629 = vmatpush1.msra.mxu0 0.0
    %1630 = vmatprep.subr.mxu0 0.0
    %1631 = vmatpush1.msra.mxu0 0.0
    %1632 = vmatprep.mubr.f32.mxu0 0.0
    %1633 = vmatmul.mubr.f32.gmra.mrb[0].mxu0 %v1566
    %v1634 = vpop.f32.mrb[0].mxu0
    %v1635 = vadd.f32 0.0, %v1634
    %v1636 = vpop.f32.mrb[0].mxu0
    %1637 = vdwg.mxu0
    %1638 = vrot.lane.b32.xlu0 %v146, 120
    %v1639 = vpop.permute.xlu0 %1638
    %1640 = vrot.lane.b32.xlu0 %v156, 120
    %v1641 = vpop.permute.xlu0 %1640
    %v1642 = vsel %vm261, %v1639, 0
    %v1644 = vsel %vm261, %v1641, 0
    %1646 = vmatprep.subr.mxu0 0.0
    %1647 = vmatpush1.xpose.msra.mxu0 %v1644
    %1648 = vmatprep.subr.mxu0 0.0
    %1649 = vmatpush1.xpose.msra.mxu0 0.0
    %1650 = vmatprep.subr.mxu0 0.0
    %1651 = vmatpush1.xpose.msra.mxu0 0.0
    %1652 = vmatprep.subr.mxu0 0.0
    %1653 = vmatpush1.xpose.msra.mxu0 0.0
    %1654 = vmatprep.subr.mxu0 0.0
    %1655 = vmatpush1.xpose.msra.mxu0 0.0
    %1656 = vmatprep.subr.mxu0 0.0
    %1657 = vmatpush1.xpose.msra.mxu0 0.0
    %1658 = vmatprep.subr.mxu0 0.0
    %1659 = vmatpush1.xpose.msra.mxu0 0.0
    %1660 = vmatprep.subr.mxu0 0.0
    %1661 = vmatpush1.xpose.msra.mxu0 0.0
    %1662 = vmatprep.subr.mxu0 0.0
    %1663 = vmatpush1.xpose.msra.mxu0 0.0
    %1664 = vmatprep.subr.mxu0 0.0
    %1665 = vmatpush1.xpose.msra.mxu0 0.0
    %1666 = vmatprep.subr.mxu0 0.0
    %1667 = vmatpush1.xpose.msra.mxu0 0.0
    %1668 = vmatprep.subr.mxu0 0.0
    %1669 = vmatpush1.xpose.msra.mxu0 0.0
    %1670 = vmatprep.subr.mxu0 0.0
    %1671 = vmatpush1.xpose.msra.mxu0 0.0
    %1672 = vmatprep.subr.mxu0 0.0
    %1673 = vmatpush1.xpose.msra.mxu0 0.0
    %1674 = vmatprep.subr.mxu0 0.0
    %1675 = vmatpush1.xpose.msra.mxu0 0.0
    %1676 = vmatprep.subr.mxu0 0.0
    %1677 = vmatpush1.xpose.msra.mxu0 0.0
    %1678 = vmatprep.subr.mxu0 0.0
    %1679 = vmatpush1.xpose.msra.mxu0 0.0
    %1680 = vmatprep.subr.mxu0 0.0
    %1681 = vmatpush1.xpose.msra.mxu0 0.0
    %1682 = vmatprep.subr.mxu0 0.0
    %1683 = vmatpush1.xpose.msra.mxu0 0.0
    %1684 = vmatprep.subr.mxu0 0.0
    %1685 = vmatpush1.xpose.msra.mxu0 0.0
    %1686 = vmatprep.subr.mxu0 0.0
    %1687 = vmatpush1.xpose.msra.mxu0 0.0
    %1688 = vmatprep.subr.mxu0 0.0
    %1689 = vmatpush1.xpose.msra.mxu0 0.0
    %1690 = vmatprep.subr.mxu0 0.0
    %1691 = vmatpush1.xpose.msra.mxu0 0.0
    %1692 = vmatprep.subr.mxu0 0.0
    %1693 = vmatpush1.xpose.msra.mxu0 0.0
    %1694 = vmatprep.subr.mxu0 0.0
    %1695 = vmatpush1.xpose.msra.mxu0 0.0
    %1696 = vmatprep.subr.mxu0 0.0
    %1697 = vmatpush1.xpose.msra.mxu0 0.0
    %1698 = vmatprep.subr.mxu0 0.0
    %1699 = vmatpush1.xpose.msra.mxu0 0.0
    %1700 = vmatprep.subr.mxu0 0.0
    %1701 = vmatpush1.xpose.msra.mxu0 0.0
    %1702 = vmatprep.subr.mxu0 0.0
    %1703 = vmatpush1.xpose.msra.mxu0 0.0
    %1704 = vmatprep.subr.mxu0 0.0
    %1705 = vmatpush1.xpose.msra.mxu0 0.0
    %1706 = vmatprep.subr.mxu0 0.0
    %1707 = vmatpush1.xpose.msra.mxu0 0.0
    %1708 = vmatprep.subr.mxu0 0.0
    %1709 = vmatpush1.xpose.msra.mxu0 0.0
    %1710 = vmatprep.mubr.f32.mxu0 0.0
    %1711 = vmatmul.mubr.f32.gmra.mrb[0].mxu0 %v1642
    %v1712 = vpop.f32.mrb[0].mxu0
    %v1713 = vadd.f32 0.0, %v1712
    %v1714 = vpop.f32.mrb[0].mxu0
    %1715 = vdwg.mxu0
    %v1716 = vmul.f32 %v1713, 0.35355338
    %v1717 = vsel %vm251, -1e+32, %v1716
    %v1718 = vsel %vm261, %v1717, -inf
    %1719 = vmax.xlane.f32.xlu0 %v1718
    %v1720 = vpop.xlane.xlu0 %1719
    %v1721 = vsub.f32 %v1717, %v1720
    %v1722 = vmul.f32 %v1721, 1.442695
    %v1723 = vpow.pop %v1722
    %v1724 = vsel %vm261, %v1723, 0.0
    %1725 = vadd.xlane.f32.xlu0 %v1724
    %v1726 = vpop.xlane.xlu0 %1725
    %v1727 = vrcp.pop %v1726
    %v1728 = vmul.f32 %v1723, %v1727
    %v1729 = vmul.f32 %v1728, %v250
    %v1731 = vsel %vm261, %v1729, 0
    %1733 = vmatprep.subr.mxu0 0.0
    %1734 = vmatpush1.msra.mxu0 %v254
    %1735 = vmatprep.subr.mxu0 0.0
    %1736 = vmatpush1.msra.mxu0 0.0
    %1737 = vmatprep.subr.mxu0 0.0
    %1738 = vmatpush1.msra.mxu0 0.0
    %1739 = vmatprep.subr.mxu0 0.0
    %1740 = vmatpush1.msra.mxu0 0.0
    %1741 = vmatprep.subr.mxu0 0.0
    %1742 = vmatpush1.msra.mxu0 0.0
    %1743 = vmatprep.subr.mxu0 0.0
    %1744 = vmatpush1.msra.mxu0 0.0
    %1745 = vmatprep.subr.mxu0 0.0
    %1746 = vmatpush1.msra.mxu0 0.0
    %1747 = vmatprep.subr.mxu0 0.0
    %1748 = vmatpush1.msra.mxu0 0.0
    %1749 = vmatprep.subr.mxu0 0.0
    %1750 = vmatpush1.msra.mxu0 0.0
    %1751 = vmatprep.subr.mxu0 0.0
    %1752 = vmatpush1.msra.mxu0 0.0
    %1753 = vmatprep.subr.mxu0 0.0
    %1754 = vmatpush1.msra.mxu0 0.0
    %1755 = vmatprep.subr.mxu0 0.0
    %1756 = vmatpush1.msra.mxu0 0.0
    %1757 = vmatprep.subr.mxu0 0.0
    %1758 = vmatpush1.msra.mxu0 0.0
    %1759 = vmatprep.subr.mxu0 0.0
    %1760 = vmatpush1.msra.mxu0 0.0
    %1761 = vmatprep.subr.mxu0 0.0
    %1762 = vmatpush1.msra.mxu0 0.0
    %1763 = vmatprep.subr.mxu0 0.0
    %1764 = vmatpush1.msra.mxu0 0.0
    %1765 = vmatprep.subr.mxu0 0.0
    %1766 = vmatpush1.msra.mxu0 0.0
    %1767 = vmatprep.subr.mxu0 0.0
    %1768 = vmatpush1.msra.mxu0 0.0
    %1769 = vmatprep.subr.mxu0 0.0
    %1770 = vmatpush1.msra.mxu0 0.0
    %1771 = vmatprep.subr.mxu0 0.0
    %1772 = vmatpush1.msra.mxu0 0.0
    %1773 = vmatprep.subr.mxu0 0.0
    %1774 = vmatpush1.msra.mxu0 0.0
    %1775 = vmatprep.subr.mxu0 0.0
    %1776 = vmatpush1.msra.mxu0 0.0
    %1777 = vmatprep.subr.mxu0 0.0
    %1778 = vmatpush1.msra.mxu0 0.0
    %1779 = vmatprep.subr.mxu0 0.0
    %1780 = vmatpush1.msra.mxu0 0.0
    %1781 = vmatprep.subr.mxu0 0.0
    %1782 = vmatpush1.msra.mxu0 0.0
    %1783 = vmatprep.subr.mxu0 0.0
    %1784 = vmatpush1.msra.mxu0 0.0
    %1785 = vmatprep.subr.mxu0 0.0
    %1786 = vmatpush1.msra.mxu0 0.0
    %1787 = vmatprep.subr.mxu0 0.0
    %1788 = vmatpush1.msra.mxu0 0.0
    %1789 = vmatprep.subr.mxu0 0.0
    %1790 = vmatpush1.msra.mxu0 0.0
    %1791 = vmatprep.subr.mxu0 0.0
    %1792 = vmatpush1.msra.mxu0 0.0
    %1793 = vmatprep.subr.mxu0 0.0
    %1794 = vmatpush1.msra.mxu0 0.0
    %1795 = vmatprep.subr.mxu0 0.0
    %1796 = vmatpush1.msra.mxu0 0.0
    %1797 = vmatprep.mubr.f32.mxu0 0.0
    %1798 = vmatmul.mubr.f32.gmra.mrb[0].mxu0 %v1731
    %v1799 = vpop.f32.mrb[0].mxu0
    %v1800 = vadd.f32 0.0, %v1799
    %v1801 = vpop.f32.mrb[0].mxu0
    %1802 = vdwg.mxu0
    %v1803 = vsel %vm261, %v1729, 0.0
    %1804 = vadd.xlane.f32.xlu0 %v1803
    %v1805 = vpop.xlane.xlu0 %1804
    %v1806 = vsub.f32 %v1805, %v1800
    %v1807 = vmul.f32 %v1806, %v259
    %v1808 = vmax.f32 %v1807, 0.0
    %v1809 = vrsqrt.pop %v1808
    %v1810 = vmul.f32 %v1808, %v1809
    %vm1811 = vcmp.eq.f32.partialorder %v1808, inf
    %v1812 = vsel %vm1811, %v1808, %v1810
    %vm1813 = vcmp.eq.f32.partialorder %v1808, 0.0
    %v1814 = vand.u32 %v1808, 2147483648
    %v1815 = vsel %vm1813, %v1814, %v1812
    %v1816 = vmul.f32 %v1815, %v710
    %v1817 = vmul.f32 %v1816, 1.442695
    %v1818 = vpow.pop %v1817
    %v1819 = vmax.f32 %v1818, 1e-05
    %v1820 = vmin.f32 %v1819, 100000.0
    %v1821 = vmul.f32 %v1716, %v1820
    %v1822 = vsel %vm261, %v1821, -inf
    %1823 = vmax.xlane.f32.xlu0 %v1822
    %v1824 = vpop.xlane.xlu0 %1823
    %v1825 = vsub.f32 %v1821, %v1824
    %v1826 = vmul.f32 %v1825, 1.442695
    %v1827 = vpow.pop %v1826
    %v1828 = vsel %vm261, %v1827, 0.0
    %1829 = vadd.xlane.f32.xlu0 %v1828
    %v1830 = vpop.xlane.xlu0 %1829
    %v1831 = vrcp.pop %v1830
    %v1832 = vmul.f32 %v1827, %v1831
    %v1833 = vsel %vm260, 0.0, %v1832
    %1835 = vrot.lane.b32.xlu0 %v241, 120
    %v1836 = vpop.permute.xlu0 %1835
    %v1839 = vsel %vm261, %v1833, 0
    %1841 = vmatprep.subr.mxu0 0.0
    %1842 = vmatpush1.msra.mxu0 %v1836
    %1843 = vmatprep.subr.mxu0 0.0
    %1844 = vmatpush1.msra.mxu0 0.0
    %1845 = vmatprep.subr.mxu0 0.0
    %1846 = vmatpush1.msra.mxu0 0.0
    %1847 = vmatprep.subr.mxu0 0.0
    %1848 = vmatpush1.msra.mxu0 0.0
    %1849 = vmatprep.subr.mxu0 0.0
    %1850 = vmatpush1.msra.mxu0 0.0
    %1851 = vmatprep.subr.mxu0 0.0
    %1852 = vmatpush1.msra.mxu0 0.0
    %1853 = vmatprep.subr.mxu0 0.0
    %1854 = vmatpush1.msra.mxu0 0.0
    %1855 = vmatprep.subr.mxu0 0.0
    %1856 = vmatpush1.msra.mxu0 0.0
    %1857 = vmatprep.subr.mxu0 0.0
    %1858 = vmatpush1.msra.mxu0 0.0
    %1859 = vmatprep.subr.mxu0 0.0
    %1860 = vmatpush1.msra.mxu0 0.0
    %1861 = vmatprep.subr.mxu0 0.0
    %1862 = vmatpush1.msra.mxu0 0.0
    %1863 = vmatprep.subr.mxu0 0.0
    %1864 = vmatpush1.msra.mxu0 0.0
    %1865 = vmatprep.subr.mxu0 0.0
    %1866 = vmatpush1.msra.mxu0 0.0
    %1867 = vmatprep.subr.mxu0 0.0
    %1868 = vmatpush1.msra.mxu0 0.0
    %1869 = vmatprep.subr.mxu0 0.0
    %1870 = vmatpush1.msra.mxu0 0.0
    %1871 = vmatprep.subr.mxu0 0.0
    %1872 = vmatpush1.msra.mxu0 0.0
    %1873 = vmatprep.subr.mxu0 0.0
    %1874 = vmatpush1.msra.mxu0 0.0
    %1875 = vmatprep.subr.mxu0 0.0
    %1876 = vmatpush1.msra.mxu0 0.0
    %1877 = vmatprep.subr.mxu0 0.0
    %1878 = vmatpush1.msra.mxu0 0.0
    %1879 = vmatprep.subr.mxu0 0.0
    %1880 = vmatpush1.msra.mxu0 0.0
    %1881 = vmatprep.subr.mxu0 0.0
    %1882 = vmatpush1.msra.mxu0 0.0
    %1883 = vmatprep.subr.mxu0 0.0
    %1884 = vmatpush1.msra.mxu0 0.0
    %1885 = vmatprep.subr.mxu0 0.0
    %1886 = vmatpush1.msra.mxu0 0.0
    %1887 = vmatprep.subr.mxu0 0.0
    %1888 = vmatpush1.msra.mxu0 0.0
    %1889 = vmatprep.subr.mxu0 0.0
    %1890 = vmatpush1.msra.mxu0 0.0
    %1891 = vmatprep.subr.mxu0 0.0
    %1892 = vmatpush1.msra.mxu0 0.0
    %1893 = vmatprep.subr.mxu0 0.0
    %1894 = vmatpush1.msra.mxu0 0.0
    %1895 = vmatprep.subr.mxu0 0.0
    %1896 = vmatpush1.msra.mxu0 0.0
    %1897 = vmatprep.subr.mxu0 0.0
    %1898 = vmatpush1.msra.mxu0 0.0
    %1899 = vmatprep.subr.mxu0 0.0
    %1900 = vmatpush1.msra.mxu0 0.0
    %1901 = vmatprep.subr.mxu0 0.0
    %1902 = vmatpush1.msra.mxu0 0.0
    %1903 = vmatprep.subr.mxu0 0.0
    %1904 = vmatpush1.msra.mxu0 0.0
    %1905 = vmatprep.mubr.f32.mxu0 0.0
    %1906 = vmatmul.mubr.f32.gmra.mrb[0].mxu0 %v1839
    %v1907 = vpop.f32.mrb[0].mxu0
    %v1908 = vadd.f32 0.0, %v1907
    %v1909 = vpop.f32.mrb[0].mxu0
    %1910 = vdwg.mxu0
    %1911 = vrot.lane.b32.xlu0 %v146, 112
    %v1912 = vpop.permute.xlu0 %1911
    %1913 = vrot.lane.b32.xlu0 %v156, 112
    %v1914 = vpop.permute.xlu0 %1913
    %v1915 = vsel %vm261, %v1912, 0
    %v1917 = vsel %vm261, %v1914, 0
    %1919 = vmatprep.subr.mxu0 0.0
    %1920 = vmatpush1.xpose.msra.mxu0 %v1917
    %1921 = vmatprep.subr.mxu0 0.0
    %1922 = vmatpush1.xpose.msra.mxu0 0.0
    %1923 = vmatprep.subr.mxu0 0.0
    %1924 = vmatpush1.xpose.msra.mxu0 0.0
    %1925 = vmatprep.subr.mxu0 0.0
    %1926 = vmatpush1.xpose.msra.mxu0 0.0
    %1927 = vmatprep.subr.mxu0 0.0
    %1928 = vmatpush1.xpose.msra.mxu0 0.0
    %1929 = vmatprep.subr.mxu0 0.0
    %1930 = vmatpush1.xpose.msra.mxu0 0.0
    %1931 = vmatprep.subr.mxu0 0.0
    %1932 = vmatpush1.xpose.msra.mxu0 0.0
    %1933 = vmatprep.subr.mxu0 0.0
    %1934 = vmatpush1.xpose.msra.mxu0 0.0
    %1935 = vmatprep.subr.mxu0 0.0
    %1936 = vmatpush1.xpose.msra.mxu0 0.0
    %1937 = vmatprep.subr.mxu0 0.0
    %1938 = vmatpush1.xpose.msra.mxu0 0.0
    %1939 = vmatprep.subr.mxu0 0.0
    %1940 = vmatpush1.xpose.msra.mxu0 0.0
    %1941 = vmatprep.subr.mxu0 0.0
    %1942 = vmatpush1.xpose.msra.mxu0 0.0
    %1943 = vmatprep.subr.mxu0 0.0
    %1944 = vmatpush1.xpose.msra.mxu0 0.0
    %1945 = vmatprep.subr.mxu0 0.0
    %1946 = vmatpush1.xpose.msra.mxu0 0.0
    %1947 = vmatprep.subr.mxu0 0.0
    %1948 = vmatpush1.xpose.msra.mxu0 0.0
    %1949 = vmatprep.subr.mxu0 0.0
    %1950 = vmatpush1.xpose.msra.mxu0 0.0
    %1951 = vmatprep.subr.mxu0 0.0
    %1952 = vmatpush1.xpose.msra.mxu0 0.0
    %1953 = vmatprep.subr.mxu0 0.0
    %1954 = vmatpush1.xpose.msra.mxu0 0.0
    %1955 = vmatprep.subr.mxu0 0.0
    %1956 = vmatpush1.xpose.msra.mxu0 0.0
    %1957 = vmatprep.subr.mxu0 0.0
    %1958 = vmatpush1.xpose.msra.mxu0 0.0
    %1959 = vmatprep.subr.mxu0 0.0
    %1960 = vmatpush1.xpose.msra.mxu0 0.0
    %1961 = vmatprep.subr.mxu0 0.0
    %1962 = vmatpush1.xpose.msra.mxu0 0.0
    %1963 = vmatprep.subr.mxu0 0.0
    %1964 = vmatpush1.xpose.msra.mxu0 0.0
    %1965 = vmatprep.subr.mxu0 0.0
    %1966 = vmatpush1.xpose.msra.mxu0 0.0
    %1967 = vmatprep.subr.mxu0 0.0
    %1968 = vmatpush1.xpose.msra.mxu0 0.0
    %1969 = vmatprep.subr.mxu0 0.0
    %1970 = vmatpush1.xpose.msra.mxu0 0.0
    %1971 = vmatprep.subr.mxu0 0.0
    %1972 = vmatpush1.xpose.msra.mxu0 0.0
    %1973 = vmatprep.subr.mxu0 0.0
    %1974 = vmatpush1.xpose.msra.mxu0 0.0
    %1975 = vmatprep.subr.mxu0 0.0
    %1976 = vmatpush1.xpose.msra.mxu0 0.0
    %1977 = vmatprep.subr.mxu0 0.0
    %1978 = vmatpush1.xpose.msra.mxu0 0.0
    %1979 = vmatprep.subr.mxu0 0.0
    %1980 = vmatpush1.xpose.msra.mxu0 0.0
    %1981 = vmatprep.subr.mxu0 0.0
    %1982 = vmatpush1.xpose.msra.mxu0 0.0
    %1983 = vmatprep.mubr.f32.mxu0 0.0
    %1984 = vmatmul.mubr.f32.gmra.mrb[0].mxu0 %v1915
    %v1985 = vpop.f32.mrb[0].mxu0
    %v1986 = vadd.f32 0.0, %v1985
    %v1987 = vpop.f32.mrb[0].mxu0
    %1988 = vdwg.mxu0
    %v1989 = vmul.f32 %v1986, 0.35355338
    %v1990 = vsel %vm251, -1e+32, %v1989
    %v1991 = vsel %vm261, %v1990, -inf
    %1992 = vmax.xlane.f32.xlu0 %v1991
    %v1993 = vpop.xlane.xlu0 %1992
    %v1994 = vsub.f32 %v1990, %v1993
    %v1995 = vmul.f32 %v1994, 1.442695
    %v1996 = vpow.pop %v1995
    %v1997 = vsel %vm261, %v1996, 0.0
    %1998 = vadd.xlane.f32.xlu0 %v1997
    %v1999 = vpop.xlane.xlu0 %1998
    %v2000 = vrcp.pop %v1999
    %v2001 = vmul.f32 %v1996, %v2000
    %v2002 = vmul.f32 %v2001, %v250
    %v2004 = vsel %vm261, %v2002, 0
    %2006 = vmatprep.subr.mxu0 0.0
    %2007 = vmatpush1.msra.mxu0 %v254
    %2008 = vmatprep.subr.mxu0 0.0
    %2009 = vmatpush1.msra.mxu0 0.0
    %2010 = vmatprep.subr.mxu0 0.0
    %2011 = vmatpush1.msra.mxu0 0.0
    %2012 = vmatprep.subr.mxu0 0.0
    %2013 = vmatpush1.msra.mxu0 0.0
    %2014 = vmatprep.subr.mxu0 0.0
    %2015 = vmatpush1.msra.mxu0 0.0
    %2016 = vmatprep.subr.mxu0 0.0
    %2017 = vmatpush1.msra.mxu0 0.0
    %2018 = vmatprep.subr.mxu0 0.0
    %2019 = vmatpush1.msra.mxu0 0.0
    %2020 = vmatprep.subr.mxu0 0.0
    %2021 = vmatpush1.msra.mxu0 0.0
    %2022 = vmatprep.subr.mxu0 0.0
    %2023 = vmatpush1.msra.mxu0 0.0
    %2024 = vmatprep.subr.mxu0 0.0
    %2025 = vmatpush1.msra.mxu0 0.0
    %2026 = vmatprep.subr.mxu0 0.0
    %2027 = vmatpush1.msra.mxu0 0.0
    %2028 = vmatprep.subr.mxu0 0.0
    %2029 = vmatpush1.msra.mxu0 0.0
    %2030 = vmatprep.subr.mxu0 0.0
    %2031 = vmatpush1.msra.mxu0 0.0
    %2032 = vmatprep.subr.mxu0 0.0
    %2033 = vmatpush1.msra.mxu0 0.0
    %2034 = vmatprep.subr.mxu0 0.0
    %2035 = vmatpush1.msra.mxu0 0.0
    %2036 = vmatprep.subr.mxu0 0.0
    %2037 = vmatpush1.msra.mxu0 0.0
    %2038 = vmatprep.subr.mxu0 0.0
    %2039 = vmatpush1.msra.mxu0 0.0
    %2040 = vmatprep.subr.mxu0 0.0
    %2041 = vmatpush1.msra.mxu0 0.0
    %2042 = vmatprep.subr.mxu0 0.0
    %2043 = vmatpush1.msra.mxu0 0.0
    %2044 = vmatprep.subr.mxu0 0.0
    %2045 = vmatpush1.msra.mxu0 0.0
    %2046 = vmatprep.subr.mxu0 0.0
    %2047 = vmatpush1.msra.mxu0 0.0
    %2048 = vmatprep.subr.mxu0 0.0
    %2049 = vmatpush1.msra.mxu0 0.0
    %2050 = vmatprep.subr.mxu0 0.0
    %2051 = vmatpush1.msra.mxu0 0.0
    %2052 = vmatprep.subr.mxu0 0.0
    %2053 = vmatpush1.msra.mxu0 0.0
    %2054 = vmatprep.subr.mxu0 0.0
    %2055 = vmatpush1.msra.mxu0 0.0
    %2056 = vmatprep.subr.mxu0 0.0
    %2057 = vmatpush1.msra.mxu0 0.0
    %2058 = vmatprep.subr.mxu0 0.0
    %2059 = vmatpush1.msra.mxu0 0.0
    %2060 = vmatprep.subr.mxu0 0.0
    %2061 = vmatpush1.msra.mxu0 0.0
    %2062 = vmatprep.subr.mxu0 0.0
    %2063 = vmatpush1.msra.mxu0 0.0
    %2064 = vmatprep.subr.mxu0 0.0
    %2065 = vmatpush1.msra.mxu0 0.0
    %2066 = vmatprep.subr.mxu0 0.0
    %2067 = vmatpush1.msra.mxu0 0.0
    %2068 = vmatprep.subr.mxu0 0.0
    %2069 = vmatpush1.msra.mxu0 0.0
    %2070 = vmatprep.mubr.f32.mxu0 0.0
    %2071 = vmatmul.mubr.f32.gmra.mrb[0].mxu0 %v2004
    %v2072 = vpop.f32.mrb[0].mxu0
    %v2073 = vadd.f32 0.0, %v2072
    %v2074 = vpop.f32.mrb[0].mxu0
    %2075 = vdwg.mxu0
    %v2076 = vsel %vm261, %v2002, 0.0
    %2077 = vadd.xlane.f32.xlu0 %v2076
    %v2078 = vpop.xlane.xlu0 %2077
    %v2079 = vsub.f32 %v2078, %v2073
    %v2080 = vmul.f32 %v2079, %v259
    %v2081 = vmax.f32 %v2080, 0.0
    %v2082 = vrsqrt.pop %v2081
    %v2083 = vmul.f32 %v2081, %v2082
    %vm2084 = vcmp.eq.f32.partialorder %v2081, inf
    %v2085 = vsel %vm2084, %v2081, %v2083
    %vm2086 = vcmp.eq.f32.partialorder %v2081, 0.0
    %v2087 = vand.u32 %v2081, 2147483648
    %v2088 = vsel %vm2086, %v2087, %v2085
    %v2089 = vmul.f32 %v2088, %v985
    %v2090 = vmul.f32 %v2089, 1.442695
    %v2091 = vpow.pop %v2090
    %v2092 = vmax.f32 %v2091, 1e-05
    %v2093 = vmin.f32 %v2092, 100000.0
    %v2094 = vmul.f32 %v1989, %v2093
    %v2095 = vsel %vm261, %v2094, -inf
    %2096 = vmax.xlane.f32.xlu0 %v2095
    %v2097 = vpop.xlane.xlu0 %2096
    %v2098 = vsub.f32 %v2094, %v2097
    %v2099 = vmul.f32 %v2098, 1.442695
    %v2100 = vpow.pop %v2099
    %v2101 = vsel %vm261, %v2100, 0.0
    %2102 = vadd.xlane.f32.xlu0 %v2101
    %v2103 = vpop.xlane.xlu0 %2102
    %v2104 = vrcp.pop %v2103
    %v2105 = vmul.f32 %v2100, %v2104
    %v2106 = vsel %vm260, 0.0, %v2105
    %2107 = vrot.lane.b32.xlu0 %v241, 112
    %v2108 = vpop.permute.xlu0 %2107
    %v2111 = vsel %vm261, %v2106, 0
    %2113 = vmatprep.subr.mxu0 0.0
    %2114 = vmatpush1.msra.mxu0 %v2108
    %2115 = vmatprep.subr.mxu0 0.0
    %2116 = vmatpush1.msra.mxu0 0.0
    %2117 = vmatprep.subr.mxu0 0.0
    %2118 = vmatpush1.msra.mxu0 0.0
    %2119 = vmatprep.subr.mxu0 0.0
    %2120 = vmatpush1.msra.mxu0 0.0
    %2121 = vmatprep.subr.mxu0 0.0
    %2122 = vmatpush1.msra.mxu0 0.0
    %2123 = vmatprep.subr.mxu0 0.0
    %2124 = vmatpush1.msra.mxu0 0.0
    %2125 = vmatprep.subr.mxu0 0.0
    %2126 = vmatpush1.msra.mxu0 0.0
    %2127 = vmatprep.subr.mxu0 0.0
    %2128 = vmatpush1.msra.mxu0 0.0
    %2129 = vmatprep.subr.mxu0 0.0
    %2130 = vmatpush1.msra.mxu0 0.0
    %2131 = vmatprep.subr.mxu0 0.0
    %2132 = vmatpush1.msra.mxu0 0.0
    %2133 = vmatprep.subr.mxu0 0.0
    %2134 = vmatpush1.msra.mxu0 0.0
    %2135 = vmatprep.subr.mxu0 0.0
    %2136 = vmatpush1.msra.mxu0 0.0
    %2137 = vmatprep.subr.mxu0 0.0
    %2138 = vmatpush1.msra.mxu0 0.0
    %2139 = vmatprep.subr.mxu0 0.0
    %2140 = vmatpush1.msra.mxu0 0.0
    %2141 = vmatprep.subr.mxu0 0.0
    %2142 = vmatpush1.msra.mxu0 0.0
    %2143 = vmatprep.subr.mxu0 0.0
    %2144 = vmatpush1.msra.mxu0 0.0
    %2145 = vmatprep.subr.mxu0 0.0
    %2146 = vmatpush1.msra.mxu0 0.0
    %2147 = vmatprep.subr.mxu0 0.0
    %2148 = vmatpush1.msra.mxu0 0.0
    %2149 = vmatprep.subr.mxu0 0.0
    %2150 = vmatpush1.msra.mxu0 0.0
    %2151 = vmatprep.subr.mxu0 0.0
    %2152 = vmatpush1.msra.mxu0 0.0
    %2153 = vmatprep.subr.mxu0 0.0
    %2154 = vmatpush1.msra.mxu0 0.0
    %2155 = vmatprep.subr.mxu0 0.0
    %2156 = vmatpush1.msra.mxu0 0.0
    %2157 = vmatprep.subr.mxu0 0.0
    %2158 = vmatpush1.msra.mxu0 0.0
    %2159 = vmatprep.subr.mxu0 0.0
    %2160 = vmatpush1.msra.mxu0 0.0
    %2161 = vmatprep.subr.mxu0 0.0
    %2162 = vmatpush1.msra.mxu0 0.0
    %2163 = vmatprep.subr.mxu0 0.0
    %2164 = vmatpush1.msra.mxu0 0.0
    %2165 = vmatprep.subr.mxu0 0.0
    %2166 = vmatpush1.msra.mxu0 0.0
    %2167 = vmatprep.subr.mxu0 0.0
    %2168 = vmatpush1.msra.mxu0 0.0
    %2169 = vmatprep.subr.mxu0 0.0
    %2170 = vmatpush1.msra.mxu0 0.0
    %2171 = vmatprep.subr.mxu0 0.0
    %2172 = vmatpush1.msra.mxu0 0.0
    %2173 = vmatprep.subr.mxu0 0.0
    %2174 = vmatpush1.msra.mxu0 0.0
    %2175 = vmatprep.subr.mxu0 0.0
    %2176 = vmatpush1.msra.mxu0 0.0
    %2177 = vmatprep.mubr.f32.mxu0 0.0
    %2178 = vmatmul.mubr.f32.gmra.mrb[0].mxu0 %v2111
    %v2179 = vpop.f32.mrb[0].mxu0
    %v2180 = vadd.f32 0.0, %v2179
    %v2181 = vpop.f32.mrb[0].mxu0
    %2182 = vdwg.mxu0
    %2183 = vrot.lane.b32.xlu0 %v146, 104
    %v2184 = vpop.permute.xlu0 %2183
    %2185 = vrot.lane.b32.xlu0 %v156, 104
    %v2186 = vpop.permute.xlu0 %2185
    %v2187 = vsel %vm261, %v2184, 0
    %v2189 = vsel %vm261, %v2186, 0
    %2191 = vmatprep.subr.mxu0 0.0
    %2192 = vmatpush1.xpose.msra.mxu0 %v2189
    %2193 = vmatprep.subr.mxu0 0.0
    %2194 = vmatpush1.xpose.msra.mxu0 0.0
    %2195 = vmatprep.subr.mxu0 0.0
    %2196 = vmatpush1.xpose.msra.mxu0 0.0
    %2197 = vmatprep.subr.mxu0 0.0
    %2198 = vmatpush1.xpose.msra.mxu0 0.0
    %2199 = vmatprep.subr.mxu0 0.0
    %2200 = vmatpush1.xpose.msra.mxu0 0.0
    %2201 = vmatprep.subr.mxu0 0.0
    %2202 = vmatpush1.xpose.msra.mxu0 0.0
    %2203 = vmatprep.subr.mxu0 0.0
    %2204 = vmatpush1.xpose.msra.mxu0 0.0
    %2205 = vmatprep.subr.mxu0 0.0
    %2206 = vmatpush1.xpose.msra.mxu0 0.0
    %2207 = vmatprep.subr.mxu0 0.0
    %2208 = vmatpush1.xpose.msra.mxu0 0.0
    %2209 = vmatprep.subr.mxu0 0.0
    %2210 = vmatpush1.xpose.msra.mxu0 0.0
    %2211 = vmatprep.subr.mxu0 0.0
    %2212 = vmatpush1.xpose.msra.mxu0 0.0
    %2213 = vmatprep.subr.mxu0 0.0
    %2214 = vmatpush1.xpose.msra.mxu0 0.0
    %2215 = vmatprep.subr.mxu0 0.0
    %2216 = vmatpush1.xpose.msra.mxu0 0.0
    %2217 = vmatprep.subr.mxu0 0.0
    %2218 = vmatpush1.xpose.msra.mxu0 0.0
    %2219 = vmatprep.subr.mxu0 0.0
    %2220 = vmatpush1.xpose.msra.mxu0 0.0
    %2221 = vmatprep.subr.mxu0 0.0
    %2222 = vmatpush1.xpose.msra.mxu0 0.0
    %2223 = vmatprep.subr.mxu0 0.0
    %2224 = vmatpush1.xpose.msra.mxu0 0.0
    %2225 = vmatprep.subr.mxu0 0.0
    %2226 = vmatpush1.xpose.msra.mxu0 0.0
    %2227 = vmatprep.subr.mxu0 0.0
    %2228 = vmatpush1.xpose.msra.mxu0 0.0
    %2229 = vmatprep.subr.mxu0 0.0
    %2230 = vmatpush1.xpose.msra.mxu0 0.0
    %2231 = vmatprep.subr.mxu0 0.0
    %2232 = vmatpush1.xpose.msra.mxu0 0.0
    %2233 = vmatprep.subr.mxu0 0.0
    %2234 = vmatpush1.xpose.msra.mxu0 0.0
    %2235 = vmatprep.subr.mxu0 0.0
    %2236 = vmatpush1.xpose.msra.mxu0 0.0
    %2237 = vmatprep.subr.mxu0 0.0
    %2238 = vmatpush1.xpose.msra.mxu0 0.0
    %2239 = vmatprep.subr.mxu0 0.0
    %2240 = vmatpush1.xpose.msra.mxu0 0.0
    %2241 = vmatprep.subr.mxu0 0.0
    %2242 = vmatpush1.xpose.msra.mxu0 0.0
    %2243 = vmatprep.subr.mxu0 0.0
    %2244 = vmatpush1.xpose.msra.mxu0 0.0
    %2245 = vmatprep.subr.mxu0 0.0
    %2246 = vmatpush1.xpose.msra.mxu0 0.0
    %2247 = vmatprep.subr.mxu0 0.0
    %2248 = vmatpush1.xpose.msra.mxu0 0.0
    %2249 = vmatprep.subr.mxu0 0.0
    %2250 = vmatpush1.xpose.msra.mxu0 0.0
    %2251 = vmatprep.subr.mxu0 0.0
    %2252 = vmatpush1.xpose.msra.mxu0 0.0
    %2253 = vmatprep.subr.mxu0 0.0
    %2254 = vmatpush1.xpose.msra.mxu0 0.0
    %2255 = vmatprep.mubr.f32.mxu0 0.0
    %2256 = vmatmul.mubr.f32.gmra.mrb[0].mxu0 %v2187
    %v2257 = vpop.f32.mrb[0].mxu0
    %v2258 = vadd.f32 0.0, %v2257
    %v2259 = vpop.f32.mrb[0].mxu0
    %2260 = vdwg.mxu0
    %v2261 = vmul.f32 %v2258, 0.35355338
    %v2262 = vsel %vm251, -1e+32, %v2261
    %v2263 = vsel %vm261, %v2262, -inf
    %2264 = vmax.xlane.f32.xlu0 %v2263
    %v2265 = vpop.xlane.xlu0 %2264
    %v2266 = vsub.f32 %v2262, %v2265
    %v2267 = vmul.f32 %v2266, 1.442695
    %v2268 = vpow.pop %v2267
    %v2269 = vsel %vm261, %v2268, 0.0
    %2270 = vadd.xlane.f32.xlu0 %v2269
    %v2271 = vpop.xlane.xlu0 %2270
    %v2272 = vrcp.pop %v2271
    %v2273 = vmul.f32 %v2268, %v2272
    %v2274 = vmul.f32 %v2273, %v250
    %v2276 = vsel %vm261, %v2274, 0
    %2278 = vmatprep.subr.mxu0 0.0
    %2279 = vmatpush1.msra.mxu0 %v254
    %2280 = vmatprep.subr.mxu0 0.0
    %2281 = vmatpush1.msra.mxu0 0.0
    %2282 = vmatprep.subr.mxu0 0.0
    %2283 = vmatpush1.msra.mxu0 0.0
    %2284 = vmatprep.subr.mxu0 0.0
    %2285 = vmatpush1.msra.mxu0 0.0
    %2286 = vmatprep.subr.mxu0 0.0
    %2287 = vmatpush1.msra.mxu0 0.0
    %2288 = vmatprep.subr.mxu0 0.0
    %2289 = vmatpush1.msra.mxu0 0.0
    %2290 = vmatprep.subr.mxu0 0.0
    %2291 = vmatpush1.msra.mxu0 0.0
    %2292 = vmatprep.subr.mxu0 0.0
    %2293 = vmatpush1.msra.mxu0 0.0
    %2294 = vmatprep.subr.mxu0 0.0
    %2295 = vmatpush1.msra.mxu0 0.0
    %2296 = vmatprep.subr.mxu0 0.0
    %2297 = vmatpush1.msra.mxu0 0.0
    %2298 = vmatprep.subr.mxu0 0.0
    %2299 = vmatpush1.msra.mxu0 0.0
    %2300 = vmatprep.subr.mxu0 0.0
    %2301 = vmatpush1.msra.mxu0 0.0
    %2302 = vmatprep.subr.mxu0 0.0
    %2303 = vmatpush1.msra.mxu0 0.0
    %2304 = vmatprep.subr.mxu0 0.0
    %2305 = vmatpush1.msra.mxu0 0.0
    %2306 = vmatprep.subr.mxu0 0.0
    %2307 = vmatpush1.msra.mxu0 0.0
    %2308 = vmatprep.subr.mxu0 0.0
    %2309 = vmatpush1.msra.mxu0 0.0
    %2310 = vmatprep.subr.mxu0 0.0
    %2311 = vmatpush1.msra.mxu0 0.0
    %2312 = vmatprep.subr.mxu0 0.0
    %2313 = vmatpush1.msra.mxu0 0.0
    %2314 = vmatprep.subr.mxu0 0.0
    %2315 = vmatpush1.msra.mxu0 0.0
    %2316 = vmatprep.subr.mxu0 0.0
    %2317 = vmatpush1.msra.mxu0 0.0
    %2318 = vmatprep.subr.mxu0 0.0
    %2319 = vmatpush1.msra.mxu0 0.0
    %2320 = vmatprep.subr.mxu0 0.0
    %2321 = vmatpush1.msra.mxu0 0.0
    %2322 = vmatprep.subr.mxu0 0.0
    %2323 = vmatpush1.msra.mxu0 0.0
    %2324 = vmatprep.subr.mxu0 0.0
    %2325 = vmatpush1.msra.mxu0 0.0
    %2326 = vmatprep.subr.mxu0 0.0
    %2327 = vmatpush1.msra.mxu0 0.0
    %2328 = vmatprep.subr.mxu0 0.0
    %2329 = vmatpush1.msra.mxu0 0.0
    %2330 = vmatprep.subr.mxu0 0.0
    %2331 = vmatpush1.msra.mxu0 0.0
    %2332 = vmatprep.subr.mxu0 0.0
    %2333 = vmatpush1.msra.mxu0 0.0
    %2334 = vmatprep.subr.mxu0 0.0
    %2335 = vmatpush1.msra.mxu0 0.0
    %2336 = vmatprep.subr.mxu0 0.0
    %2337 = vmatpush1.msra.mxu0 0.0
    %2338 = vmatprep.subr.mxu0 0.0
    %2339 = vmatpush1.msra.mxu0 0.0
    %2340 = vmatprep.subr.mxu0 0.0
    %2341 = vmatpush1.msra.mxu0 0.0
    %2342 = vmatprep.mubr.f32.mxu0 0.0
    %2343 = vmatmul.mubr.f32.gmra.mrb[0].mxu0 %v2276
    %v2344 = vpop.f32.mrb[0].mxu0
    %v2345 = vadd.f32 0.0, %v2344
    %v2346 = vpop.f32.mrb[0].mxu0
    %2347 = vdwg.mxu0
    %v2348 = vsel %vm261, %v2274, 0.0
    %2349 = vadd.xlane.f32.xlu0 %v2348
    %v2350 = vpop.xlane.xlu0 %2349
    %v2351 = vsub.f32 %v2350, %v2345
    %v2352 = vmul.f32 %v2351, %v259
    %v2353 = vmax.f32 %v2352, 0.0
    %v2354 = vrsqrt.pop %v2353
    %v2355 = vmul.f32 %v2353, %v2354
    %vm2356 = vcmp.eq.f32.partialorder %v2353, inf
    %v2357 = vsel %vm2356, %v2353, %v2355
    %vm2358 = vcmp.eq.f32.partialorder %v2353, 0.0
    %v2359 = vand.u32 %v2353, 2147483648
    %v2360 = vsel %vm2358, %v2359, %v2357
    %v2361 = vmul.f32 %v2360, %v1259
    %v2362 = vmul.f32 %v2361, 1.442695
    %v2363 = vpow.pop %v2362
    %v2364 = vmax.f32 %v2363, 1e-05
    %v2365 = vmin.f32 %v2364, 100000.0
    %v2366 = vmul.f32 %v2261, %v2365
    %v2367 = vsel %vm261, %v2366, -inf
    %2368 = vmax.xlane.f32.xlu0 %v2367
    %v2369 = vpop.xlane.xlu0 %2368
    %v2370 = vsub.f32 %v2366, %v2369
    %v2371 = vmul.f32 %v2370, 1.442695
    %v2372 = vpow.pop %v2371
    %v2373 = vsel %vm261, %v2372, 0.0
    %2374 = vadd.xlane.f32.xlu0 %v2373
    %v2375 = vpop.xlane.xlu0 %2374
    %v2376 = vrcp.pop %v2375
    %v2377 = vmul.f32 %v2372, %v2376
    %v2378 = vsel %vm260, 0.0, %v2377
    %2379 = vrot.lane.b32.xlu0 %v241, 104
    %v2380 = vpop.permute.xlu0 %2379
    %v2383 = vsel %vm261, %v2378, 0
    %2385 = vmatprep.subr.mxu0 0.0
    %2386 = vmatpush1.msra.mxu0 %v2380
    %2387 = vmatprep.subr.mxu0 0.0
    %2388 = vmatpush1.msra.mxu0 0.0
    %2389 = vmatprep.subr.mxu0 0.0
    %2390 = vmatpush1.msra.mxu0 0.0
    %2391 = vmatprep.subr.mxu0 0.0
    %2392 = vmatpush1.msra.mxu0 0.0
    %2393 = vmatprep.subr.mxu0 0.0
    %2394 = vmatpush1.msra.mxu0 0.0
    %2395 = vmatprep.subr.mxu0 0.0
    %2396 = vmatpush1.msra.mxu0 0.0
    %2397 = vmatprep.subr.mxu0 0.0
    %2398 = vmatpush1.msra.mxu0 0.0
    %2399 = vmatprep.subr.mxu0 0.0
    %2400 = vmatpush1.msra.mxu0 0.0
    %2401 = vmatprep.subr.mxu0 0.0
    %2402 = vmatpush1.msra.mxu0 0.0
    %2403 = vmatprep.subr.mxu0 0.0
    %2404 = vmatpush1.msra.mxu0 0.0
    %2405 = vmatprep.subr.mxu0 0.0
    %2406 = vmatpush1.msra.mxu0 0.0
    %2407 = vmatprep.subr.mxu0 0.0
    %2408 = vmatpush1.msra.mxu0 0.0
    %2409 = vmatprep.subr.mxu0 0.0
    %2410 = vmatpush1.msra.mxu0 0.0
    %2411 = vmatprep.subr.mxu0 0.0
    %2412 = vmatpush1.msra.mxu0 0.0
    %2413 = vmatprep.subr.mxu0 0.0
    %2414 = vmatpush1.msra.mxu0 0.0
    %2415 = vmatprep.subr.mxu0 0.0
    %2416 = vmatpush1.msra.mxu0 0.0
    %2417 = vmatprep.subr.mxu0 0.0
    %2418 = vmatpush1.msra.mxu0 0.0
    %2419 = vmatprep.subr.mxu0 0.0
    %2420 = vmatpush1.msra.mxu0 0.0
    %2421 = vmatprep.subr.mxu0 0.0
    %2422 = vmatpush1.msra.mxu0 0.0
    %2423 = vmatprep.subr.mxu0 0.0
    %2424 = vmatpush1.msra.mxu0 0.0
    %2425 = vmatprep.subr.mxu0 0.0
    %2426 = vmatpush1.msra.mxu0 0.0
    %2427 = vmatprep.subr.mxu0 0.0
    %2428 = vmatpush1.msra.mxu0 0.0
    %2429 = vmatprep.subr.mxu0 0.0
    %2430 = vmatpush1.msra.mxu0 0.0
    %2431 = vmatprep.subr.mxu0 0.0
    %2432 = vmatpush1.msra.mxu0 0.0
    %2433 = vmatprep.subr.mxu0 0.0
    %2434 = vmatpush1.msra.mxu0 0.0
    %2435 = vmatprep.subr.mxu0 0.0
    %2436 = vmatpush1.msra.mxu0 0.0
    %2437 = vmatprep.subr.mxu0 0.0
    %2438 = vmatpush1.msra.mxu0 0.0
    %2439 = vmatprep.subr.mxu0 0.0
    %2440 = vmatpush1.msra.mxu0 0.0
    %2441 = vmatprep.subr.mxu0 0.0
    %2442 = vmatpush1.msra.mxu0 0.0
    %2443 = vmatprep.subr.mxu0 0.0
    %2444 = vmatpush1.msra.mxu0 0.0
    %2445 = vmatprep.subr.mxu0 0.0
    %2446 = vmatpush1.msra.mxu0 0.0
    %2447 = vmatprep.subr.mxu0 0.0
    %2448 = vmatpush1.msra.mxu0 0.0
    %2449 = vmatprep.mubr.f32.mxu0 0.0
    %2450 = vmatmul.mubr.f32.gmra.mrb[0].mxu0 %v2383
    %v2451 = vpop.f32.mrb[0].mxu0
    %v2452 = vadd.f32 0.0, %v2451
    %v2453 = vpop.f32.mrb[0].mxu0
    %2454 = vdwg.mxu0
    %2456 = vrot.lane.b32.xlu0 %v1908, 8
    %v2457 = vpop.permute.xlu0 %2456
    %2460 = vrot.lane.b32.xlu0 %v2180, 16
    %v2461 = vpop.permute.xlu0 %2460
    %2464 = vrot.lane.b32.xlu0 %v2452, 24
    %v2465 = vpop.permute.xlu0 %2464
    %v2467 = vsel %vm261, %v1635, %v2457
    %v2468 = vsel %vm1367, %v2467, %v2461
    %v2469 = vsel %vm1369, %v2468, %v2465
    %v2470 = vlaneseq
    %v2471 = vshrl.u32 %v2470, 7
    %v2472 = vsub.s32 2, %v2471
    %v2473 = vrot.slane %v55, %v2472
    %v2475 = vsel %vm61, %v1370, 0
    %v2478 = vsel %vm61, %v2469, 0
    %2480 = vmatprep.subr.mxu0 0.0
    %2481 = vmatpush1.msra.mxu0 %v51
    %2482 = vmatprep.subr.mxu0 0.0
    %2483 = vmatpush1.msra.mxu0 %v52
    %2484 = vmatprep.subr.mxu0 0.0
    %2485 = vmatpush1.msra.mxu0 %v53
    %2486 = vmatprep.subr.mxu0 0.0
    %2487 = vmatpush1.msra.mxu0 %v54
    %2488 = vmatprep.subr.mxu0 0.0
    %2489 = vmatpush1.msra.mxu0 0.0
    %2490 = vmatprep.subr.mxu0 0.0
    %2491 = vmatpush1.msra.mxu0 0.0
    %2492 = vmatprep.subr.mxu0 0.0
    %2493 = vmatpush1.msra.mxu0 0.0
    %2494 = vmatprep.subr.mxu0 0.0
    %2495 = vmatpush1.msra.mxu0 0.0
    %2496 = vmatprep.subr.mxu0 0.0
    %2497 = vmatpush1.msra.mxu0 0.0
    %2498 = vmatprep.subr.mxu0 0.0
    %2499 = vmatpush1.msra.mxu0 0.0
    %2500 = vmatprep.subr.mxu0 0.0
    %2501 = vmatpush1.msra.mxu0 0.0
    %2502 = vmatprep.subr.mxu0 0.0
    %2503 = vmatpush1.msra.mxu0 0.0
    %2504 = vmatprep.subr.mxu0 0.0
    %2505 = vmatpush1.msra.mxu0 0.0
    %2506 = vmatprep.subr.mxu0 0.0
    %2507 = vmatpush1.msra.mxu0 0.0
    %2508 = vmatprep.subr.mxu0 0.0
    %2509 = vmatpush1.msra.mxu0 0.0
    %2510 = vmatprep.subr.mxu0 0.0
    %2511 = vmatpush1.msra.mxu0 0.0
    %2512 = vmatprep.subr.mxu0 0.0
    %2513 = vmatpush1.msra.mxu0 0.0
    %2514 = vmatprep.subr.mxu0 0.0
    %2515 = vmatpush1.msra.mxu0 0.0
    %2516 = vmatprep.subr.mxu0 0.0
    %2517 = vmatpush1.msra.mxu0 0.0
    %2518 = vmatprep.subr.mxu0 0.0
    %2519 = vmatpush1.msra.mxu0 0.0
    %2520 = vmatprep.subr.mxu0 0.0
    %2521 = vmatpush1.msra.mxu0 0.0
    %2522 = vmatprep.subr.mxu0 0.0
    %2523 = vmatpush1.msra.mxu0 0.0
    %2524 = vmatprep.subr.mxu0 0.0
    %2525 = vmatpush1.msra.mxu0 0.0
    %2526 = vmatprep.subr.mxu0 0.0
    %2527 = vmatpush1.msra.mxu0 0.0
    %2528 = vmatprep.subr.mxu0 0.0
    %2529 = vmatpush1.msra.mxu0 0.0
    %2530 = vmatprep.subr.mxu0 0.0
    %2531 = vmatpush1.msra.mxu0 0.0
    %2532 = vmatprep.subr.mxu0 0.0
    %2533 = vmatpush1.msra.mxu0 0.0
    %2534 = vmatprep.subr.mxu0 0.0
    %2535 = vmatpush1.msra.mxu0 0.0
    %2536 = vmatprep.subr.mxu0 0.0
    %2537 = vmatpush1.msra.mxu0 0.0
    %2538 = vmatprep.subr.mxu0 0.0
    %2539 = vmatpush1.msra.mxu0 0.0
    %2540 = vmatprep.subr.mxu0 0.0
    %2541 = vmatpush1.msra.mxu0 0.0
    %2542 = vmatprep.subr.mxu0 0.0
    %2543 = vmatpush1.msra.mxu0 0.0
    %2544 = vmatprep.mubr.f32.mxu0 0.0
    %2545 = vmatmul.mubr.f32.gmra.mrb[0].mxu0 %v2475
    %v2546 = vpop.f32.mrb[0].mxu0
    %v2547 = vadd.f32 %v2473, %v2546
    %v2548 = vpop.f32.mrb[0].mxu0
    %2549 = vmatprep.mubr.f32.mxu0 0.0
    %2550 = vmatmul.mubr.f32.gmra.mrb[0].mxu0 %v2478
    %v2551 = vpop.f32.mrb[0].mxu0
    %v2552 = vadd.f32 %v2473, %v2551
    %v2553 = vpop.f32.mrb[0].mxu0
    %2554 = vdwg.mxu0
    %v2555 = vadd.f32 %v37, %v2547
    %v2556 = vadd.f32 %v38, %v2552
    %v2557 = vsel %vm61, %v2555, 0.0
    %2558 = vadd.xlane.f32.xlu0 %v2557
    %v2559 = vpop.xlane.xlu0 %2558
    %v2560 = vsel %vm61, %v2556, 0.0
    %2561 = vadd.xlane.f32.xlu0 %v2560
    %v2562 = vpop.xlane.xlu0 %2561
    %v2563 = vrcp.pop 32.0
    %v2564 = vmul.f32 %v2559, %v2563
    %v2565 = vmul.f32 %v2562, %v2563
    %v2566 = vsub.f32 %v2555, %v2564
    %v2567 = vsub.f32 %v2556, %v2565
    %v2568 = vmul.f32 %v2566, %v2566
    %v2569 = vmul.f32 %v2567, %v2567
    %v2570 = vsel %vm61, %v2568, 0.0
    %2571 = vadd.xlane.f32.xlu0 %v2570
    %v2572 = vpop.xlane.xlu0 %2571
    %v2573 = vsel %vm61, %v2569, 0.0
    %2574 = vadd.xlane.f32.xlu0 %v2573
    %v2575 = vpop.xlane.xlu0 %2574
    %v2576 = vmul.f32 %v2572, %v2563
    %v2577 = vmul.f32 %v2575, %v2563
    %v2578 = vadd.f32 %v2576, 1e-05
    %v2579 = vadd.f32 %v2577, 1e-05
    %v2580 = vrsqrt.pop %v2578
    %v2581 = vrsqrt.pop %v2579
    %v2582 = vmul.f32 %v2566, %v2580
    %v2583 = vmul.f32 %v2567, %v2581
    %v2584 = vlaneseq
    %v2585 = vshrl.u32 %v2584, 7
    %v2586 = vsub.s32 3, %v2585
    %v2587 = vrot.slane %v55, %v2586
    %v2588 = vmul.f32 %v2582, %v2587
    %v2589 = vmul.f32 %v2583, %v2587
    %v2590 = vlaneseq
    %v2591 = vshrl.u32 %v2590, 7
    %v2592 = vsub.s32 4, %v2591
    %v2593 = vrot.slane %v55, %v2592
    %v2594 = vadd.f32 %v2588, %v2593
    %v2595 = vadd.f32 %v2589, %v2593
    %v2596 = vld [vmem:[%s2] sm:$0xff]
    %v2597 = vld [vmem:[%s2 + $0x8] sm:$0xff]
    %v2598 = vld [vmem:[%s2 + $0x10] sm:$0xff]
    %v2599 = vld [vmem:[%s2 + $0x18] sm:$0xff]
    %v2600 = vlaneseq
    %v2601 = vshrl.u32 %v2600, 7
    %v2602 = vsub.s32 5, %v2601
    %v2603 = vrot.slane %v55, %v2602
    %v2605 = vsel %vm61, %v2594, 0
    %v2608 = vsel %vm61, %v2595, 0
    %2610 = vmatprep.subr.mxu0 0.0
    %2611 = vmatpush1.msra.mxu0 %v2596
    %2612 = vmatprep.subr.mxu0 0.0
    %2613 = vmatpush1.msra.mxu0 %v2597
    %2614 = vmatprep.subr.mxu0 0.0
    %2615 = vmatpush1.msra.mxu0 %v2598
    %2616 = vmatprep.subr.mxu0 0.0
    %2617 = vmatpush1.msra.mxu0 %v2599
    %2618 = vmatprep.subr.mxu0 0.0
    %2619 = vmatpush1.msra.mxu0 0.0
    %2620 = vmatprep.subr.mxu0 0.0
    %2621 = vmatpush1.msra.mxu0 0.0
    %2622 = vmatprep.subr.mxu0 0.0
    %2623 = vmatpush1.msra.mxu0 0.0
    %2624 = vmatprep.subr.mxu0 0.0
    %2625 = vmatpush1.msra.mxu0 0.0
    %2626 = vmatprep.subr.mxu0 0.0
    %2627 = vmatpush1.msra.mxu0 0.0
    %2628 = vmatprep.subr.mxu0 0.0
    %2629 = vmatpush1.msra.mxu0 0.0
    %2630 = vmatprep.subr.mxu0 0.0
    %2631 = vmatpush1.msra.mxu0 0.0
    %2632 = vmatprep.subr.mxu0 0.0
    %2633 = vmatpush1.msra.mxu0 0.0
    %2634 = vmatprep.subr.mxu0 0.0
    %2635 = vmatpush1.msra.mxu0 0.0
    %2636 = vmatprep.subr.mxu0 0.0
    %2637 = vmatpush1.msra.mxu0 0.0
    %2638 = vmatprep.subr.mxu0 0.0
    %2639 = vmatpush1.msra.mxu0 0.0
    %2640 = vmatprep.subr.mxu0 0.0
    %2641 = vmatpush1.msra.mxu0 0.0
    %2642 = vmatprep.subr.mxu0 0.0
    %2643 = vmatpush1.msra.mxu0 0.0
    %2644 = vmatprep.subr.mxu0 0.0
    %2645 = vmatpush1.msra.mxu0 0.0
    %2646 = vmatprep.subr.mxu0 0.0
    %2647 = vmatpush1.msra.mxu0 0.0
    %2648 = vmatprep.subr.mxu0 0.0
    %2649 = vmatpush1.msra.mxu0 0.0
    %2650 = vmatprep.subr.mxu0 0.0
    %2651 = vmatpush1.msra.mxu0 0.0
    %2652 = vmatprep.subr.mxu0 0.0
    %2653 = vmatpush1.msra.mxu0 0.0
    %2654 = vmatprep.subr.mxu0 0.0
    %2655 = vmatpush1.msra.mxu0 0.0
    %2656 = vmatprep.subr.mxu0 0.0
    %2657 = vmatpush1.msra.mxu0 0.0
    %2658 = vmatprep.subr.mxu0 0.0
    %2659 = vmatpush1.msra.mxu0 0.0
    %2660 = vmatprep.subr.mxu0 0.0
    %2661 = vmatpush1.msra.mxu0 0.0
    %2662 = vmatprep.subr.mxu0 0.0
    %2663 = vmatpush1.msra.mxu0 0.0
    %2664 = vmatprep.subr.mxu0 0.0
    %2665 = vmatpush1.msra.mxu0 0.0
    %2666 = vmatprep.subr.mxu0 0.0
    %2667 = vmatpush1.msra.mxu0 0.0
    %2668 = vmatprep.subr.mxu0 0.0
    %2669 = vmatpush1.msra.mxu0 0.0
    %2670 = vmatprep.subr.mxu0 0.0
    %2671 = vmatpush1.msra.mxu0 0.0
    %2672 = vmatprep.subr.mxu0 0.0
    %2673 = vmatpush1.msra.mxu0 0.0
    %2674 = vmatprep.mubr.f32.mxu0 0.0
    %2675 = vmatmul.mubr.f32.gmra.mrb[0].mxu0 %v2605
    %v2676 = vpop.f32.mrb[0].mxu0
    %v2677 = vadd.f32 %v2603, %v2676
    %v2678 = vpop.f32.mrb[0].mxu0
    %2679 = vmatprep.mubr.f32.mxu0 0.0
    %2680 = vmatmul.mubr.f32.gmra.mrb[0].mxu0 %v2608
    %v2681 = vpop.f32.mrb[0].mxu0
    %v2682 = vadd.f32 %v2603, %v2681
    %v2683 = vpop.f32.mrb[0].mxu0
    %2684 = vdwg.mxu0
    %v2685 = vmax.f32 %v2677, 0.0
    %v2686 = vmax.f32 %v2682, 0.0
    %v2687 = vld [vmem:[%s3] sm:$0xff]
    %v2688 = vld [vmem:[%s3 + $0x8] sm:$0xff]
    %v2689 = vld [vmem:[%s3 + $0x10] sm:$0xff]
    %v2690 = vld [vmem:[%s3 + $0x18] sm:$0xff]
    %v2691 = vld [vmem:[%s3 + $0x20] sm:$0xff]
    %v2692 = vld [vmem:[%s3 + $0x28] sm:$0xff]
    %v2693 = vld [vmem:[%s3 + $0x30] sm:$0xff]
    %v2694 = vld [vmem:[%s3 + $0x38] sm:$0xff]
    %v2695 = vlaneseq
    %v2696 = vshrl.u32 %v2695, 7
    %v2697 = vsub.s32 6, %v2696
    %v2698 = vrot.slane %v55, %v2697
    %vm2699 = vcmask 523264
    %v2701 = vsel %vm2699, %v2685, 0
    %v2704 = vsel %vm2699, %v2686, 0
    %2706 = vmatprep.subr.mxu0 0.0
    %2707 = vmatpush1.msra.mxu0 %v2687
    %2708 = vmatprep.subr.mxu0 0.0
    %2709 = vmatpush1.msra.mxu0 %v2688
    %2710 = vmatprep.subr.mxu0 0.0
    %2711 = vmatpush1.msra.mxu0 %v2689
    %2712 = vmatprep.subr.mxu0 0.0
    %2713 = vmatpush1.msra.mxu0 %v2690
    %2714 = vmatprep.subr.mxu0 0.0
    %2715 = vmatpush1.msra.mxu0 %v2691
    %2716 = vmatprep.subr.mxu0 0.0
    %2717 = vmatpush1.msra.mxu0 %v2692
    %2718 = vmatprep.subr.mxu0 0.0
    %2719 = vmatpush1.msra.mxu0 %v2693
    %2720 = vmatprep.subr.mxu0 0.0
    %2721 = vmatpush1.msra.mxu0 %v2694
    %2722 = vmatprep.subr.mxu0 0.0
    %2723 = vmatpush1.msra.mxu0 0.0
    %2724 = vmatprep.subr.mxu0 0.0
    %2725 = vmatpush1.msra.mxu0 0.0
    %2726 = vmatprep.subr.mxu0 0.0
    %2727 = vmatpush1.msra.mxu0 0.0
    %2728 = vmatprep.subr.mxu0 0.0
    %2729 = vmatpush1.msra.mxu0 0.0
    %2730 = vmatprep.subr.mxu0 0.0
    %2731 = vmatpush1.msra.mxu0 0.0
    %2732 = vmatprep.subr.mxu0 0.0
    %2733 = vmatpush1.msra.mxu0 0.0
    %2734 = vmatprep.subr.mxu0 0.0
    %2735 = vmatpush1.msra.mxu0 0.0
    %2736 = vmatprep.subr.mxu0 0.0
    %2737 = vmatpush1.msra.mxu0 0.0
    %2738 = vmatprep.subr.mxu0 0.0
    %2739 = vmatpush1.msra.mxu0 0.0
    %2740 = vmatprep.subr.mxu0 0.0
    %2741 = vmatpush1.msra.mxu0 0.0
    %2742 = vmatprep.subr.mxu0 0.0
    %2743 = vmatpush1.msra.mxu0 0.0
    %2744 = vmatprep.subr.mxu0 0.0
    %2745 = vmatpush1.msra.mxu0 0.0
    %2746 = vmatprep.subr.mxu0 0.0
    %2747 = vmatpush1.msra.mxu0 0.0
    %2748 = vmatprep.subr.mxu0 0.0
    %2749 = vmatpush1.msra.mxu0 0.0
    %2750 = vmatprep.subr.mxu0 0.0
    %2751 = vmatpush1.msra.mxu0 0.0
    %2752 = vmatprep.subr.mxu0 0.0
    %2753 = vmatpush1.msra.mxu0 0.0
    %2754 = vmatprep.subr.mxu0 0.0
    %2755 = vmatpush1.msra.mxu0 0.0
    %2756 = vmatprep.subr.mxu0 0.0
    %2757 = vmatpush1.msra.mxu0 0.0
    %2758 = vmatprep.subr.mxu0 0.0
    %2759 = vmatpush1.msra.mxu0 0.0
    %2760 = vmatprep.subr.mxu0 0.0
    %2761 = vmatpush1.msra.mxu0 0.0
    %2762 = vmatprep.subr.mxu0 0.0
    %2763 = vmatpush1.msra.mxu0 0.0
    %2764 = vmatprep.subr.mxu0 0.0
    %2765 = vmatpush1.msra.mxu0 0.0
    %2766 = vmatprep.subr.mxu0 0.0
    %2767 = vmatpush1.msra.mxu0 0.0
    %2768 = vmatprep.subr.mxu0 0.0
    %2769 = vmatpush1.msra.mxu0 0.0
    %2770 = vmatprep.mubr.f32.mxu0 0.0
    %2771 = vmatmul.mubr.f32.gmra.mrb[0].mxu0 %v2701
    %v2772 = vpop.f32.mrb[0].mxu0
    %v2773 = vadd.f32 %v2698, %v2772
    %v2774 = vpop.f32.mrb[0].mxu0
    %2775 = vmatprep.mubr.f32.mxu0 0.0
    %2776 = vmatmul.mubr.f32.gmra.mrb[0].mxu0 %v2704
    %v2777 = vpop.f32.mrb[0].mxu0
    %v2778 = vadd.f32 %v2698, %v2777
    %v2779 = vpop.f32.mrb[0].mxu0
    %2780 = vdwg.mxu0
    %v2781 = vadd.f32 %v2594, %v2773
    %v2782 = vadd.f32 %v2595, %v2778
    %v2783 = vsel %vm61, %v2781, 0.0
    %2784 = vadd.xlane.f32.xlu0 %v2783
    %v2785 = vpop.xlane.xlu0 %2784
    %v2786 = vsel %vm61, %v2782, 0.0
    %2787 = vadd.xlane.f32.xlu0 %v2786
    %v2788 = vpop.xlane.xlu0 %2787
    %v2789 = vmul.f32 %v2785, %v2563
    %v2790 = vmul.f32 %v2788, %v2563
    %v2791 = vsub.f32 %v2781, %v2789
    %v2792 = vsub.f32 %v2782, %v2790
    %v2793 = vmul.f32 %v2791, %v2791
    %v2794 = vmul.f32 %v2792, %v2792
    %v2795 = vsel %vm61, %v2793, 0.0
    %2796 = vadd.xlane.f32.xlu0 %v2795
    %v2797 = vpop.xlane.xlu0 %2796
    %v2798 = vsel %vm61, %v2794, 0.0
    %2799 = vadd.xlane.f32.xlu0 %v2798
    %v2800 = vpop.xlane.xlu0 %2799
    %v2801 = vmul.f32 %v2797, %v2563
    %v2802 = vmul.f32 %v2800, %v2563
    %v2803 = vadd.f32 %v2801, 1e-05
    %v2804 = vadd.f32 %v2802, 1e-05
    %v2805 = vrsqrt.pop %v2803
    %v2806 = vrsqrt.pop %v2804
    %v2807 = vmul.f32 %v2791, %v2805
    %v2808 = vmul.f32 %v2792, %v2806
    %v2809 = vlaneseq
    %v2810 = vshrl.u32 %v2809, 7
    %v2811 = vsub.s32 7, %v2810
    %v2812 = vrot.slane %v55, %v2811
    %v2813 = vmul.f32 %v2807, %v2812
    %v2814 = vmul.f32 %v2808, %v2812
    %v2815 = vlaneseq
    %v2816 = vshrl.u32 %v2815, 7
    %v2817 = vsub.s32 0, %v2816
    %v2818 = vrot.slane %v56, %v2817
    %v2819 = vadd.f32 %v2813, %v2818
    %v2820 = vadd.f32 %v2814, %v2818
    %2821 = vst.msk [vmem:[#allocation5] sm:$0xff] %vm61, %v2819
    %2822 = vst.msk [vmem:[#allocation5 + $0x8] sm:$0xff] %vm61, %v2820
    // Predicated region
    $region30: #{transformer_layer.1} parent=1 // pred_check
      _
    $region31: #{transformer_layer.1} parent=1 // pred_check_branch
      %2824 = sbr.rel (0) target = $region33
    $region32: #{transformer_layer.1} parent=1 // pred_region
      %s2826 = ssub.s32 256, 256
      %2827 = vsyncadd [#allocation3], %s2826
      %s2828 = sshll.u32 [#allocation5], 4
      %s2829 = int_to_ptr.vmem [resolvable:$true] %s2828
      %2834 = dma.vmem_to_hbm [thread:$0]  %s2829, 256, %s6, [#allocation3], 128, 128, 8
    $region33: #{transformer_layer.1} parent=1 // pred_fallthru
      _
    // Predicated region
    $region34: #{transformer_layer.1} parent=1 // pred_check
      _
    $region35: #{transformer_layer.1} parent=1 // pred_check_branch
      %2836 = sbr.rel (0) target = $region37
    $region36: #{transformer_layer.1} parent=1 // pred_region
      %2837 = dma.done [#allocation3], 256
    $region37: #{transformer_layer.1} parent=1 // pred_fallthru
      _
    %2838 = vsyncpa [#allocation3], 1
    %2839 = vsyncpa [#allocation4], 1

</llo_original>
